<compile_context>
chip_gen: v5e
topology: v5e:2x2
jax: 0.10.0
libtpu: 0.0.40
codegen_flags: <defaults>
</compile_context>

<pallas_src>
import functools

import jax
import jax.numpy as jnp
from jax import lax
from jax.experimental import pallas as pl
from jax.experimental.pallas import tpu as pltpu

EPS = 1e-5
LANE = 128
COMPUTE_DTYPE = jnp.bfloat16      # MXU operand / intermediate storage dtype


def _round_up(x, m):
    return (x + m - 1) // m * m


def _compiler_params():
    return pltpu.CompilerParams(
        dimension_semantics=("parallel",),        # one batch image per grid step
        vmem_limit_bytes=48 * 1024 * 1024)        # safe on v5e/v6e/v7x


# ---------------------------------------------------------------------------
# In-kernel helper
# ---------------------------------------------------------------------------
def _stats(y_f32):
    """Per-channel [sum; sum-of-squares] of an (rows, C) f32 accumulator."""
    return jnp.concatenate(
        [jnp.sum(y_f32, axis=0, keepdims=True),
         jnp.sum(y_f32 * y_f32, axis=0, keepdims=True)], axis=0)      # (2, C)


# ---------------------------------------------------------------------------
# Pallas kernels (grid = one batch image per step)
# ---------------------------------------------------------------------------
def conv1_kernel(p_ref, w_ref, y_ref, s_ref, *, ho, wo, cpad):
    """conv1-as-matmul for one image + BN1 partial statistics (from f32 acc)."""
    pm = p_ref[...].reshape(ho * wo, p_ref.shape[-1])
    y = jnp.dot(pm, w_ref[...], preferred_element_type=jnp.float32)
    s_ref[...] = _stats(y)
    y_ref[...] = y.reshape(ho, wo, cpad).astype(y_ref.dtype)


def conv1_proj_kernel(p_ref, w_ref, ws_ref, y_ref, ys_ref, s_ref, ss_ref, *,
                      ho, wo, cinp, cpad):
    """conv1 + 1x1 projection shortcut (small centre-tap dot) for one image."""
    pm = p_ref[...].reshape(ho * wo, 9 * cinp)
    y = jnp.dot(pm, w_ref[...], preferred_element_type=jnp.float32)
    centre = pm[:, 4 * cinp:5 * cinp]                  # lane-aligned centre tap
    ys = jnp.dot(centre, ws_ref[...], preferred_element_type=jnp.float32)
    s_ref[...] = _stats(y)
    ss_ref[...] = _stats(ys)
    y_ref[...] = y.reshape(ho, wo, cpad).astype(y_ref.dtype)
    ys_ref[...] = ys.reshape(ho, wo, cpad).astype(ys_ref.dtype)


def conv2_kernel(y1_ref, a1_ref, c1_ref, w2_ref, y2_ref, s_ref, *, ho, wo, cpad):
    """Fused BN1 affine + ReLU + in-VMEM 3x3 im2col + conv2 + BN2 partial stats."""
    y1 = y1_ref[...].astype(jnp.float32)                        # (ho, wo, cpad)
    z = jnp.maximum(y1 * a1_ref[...] + c1_ref[...], 0.0)
    # zero halo (== the conv's padding=1) built entirely in VMEM, never in HBM
    zr = jnp.zeros((1, wo, cpad), jnp.float32)
    z = jnp.concatenate([zr, z, zr], axis=0)                    # (ho+2, wo, cpad)
    zc = jnp.zeros((ho + 2, 1, cpad), jnp.float32)
    zp = jnp.concatenate([zc, z, zc], axis=1)                   # (ho+2, wo+2, cpad)
    acc = jnp.zeros((ho * wo, cpad), jnp.float32)
    for kh in range(3):
        for kw in range(3):
            patch = zp[kh:kh + ho, kw:kw + wo, :].reshape(ho * wo, cpad)
            acc = acc + jnp.dot(patch.astype(COMPUTE_DTYPE), w2_ref[kh * 3 + kw],
                                preferred_element_type=jnp.float32)
    s_ref[...] = _stats(acc)
    y2_ref[...] = acc.reshape(ho, wo, cpad).astype(y2_ref.dtype)


def final_proj_kernel(y2_ref, ys_ref, a2_ref, c2_ref, as_ref, cs_ref, o_ref):
    """BN2 affine + BN_shortcut affine + residual add + final ReLU."""
    y2 = y2_ref[...].astype(jnp.float32) * a2_ref[...] + c2_ref[...]
    ys = ys_ref[...].astype(jnp.float32) * as_ref[...] + cs_ref[...]
    o_ref[...] = jnp.maximum(y2 + ys, 0.0).astype(o_ref.dtype)


def final_id_kernel(y2_ref, sc_ref, a2_ref, c2_ref, o_ref):
    """BN2 affine + identity shortcut add + final ReLU."""
    y2 = y2_ref[...].astype(jnp.float32) * a2_ref[...] + c2_ref[...]
    o_ref[...] = jnp.maximum(y2 + sc_ref[...].astype(jnp.float32),
                             0.0).astype(o_ref.dtype)


# ---------------------------------------------------------------------------
# pallas_call wrappers (grid = (N,), one image per step)
# ---------------------------------------------------------------------------
def _img_spec(d0, d1, d2):
    return pl.BlockSpec((None, d0, d1, d2), lambda b: (b, 0, 0, 0))


def _stat_spec(cpad):
    return pl.BlockSpec((None, 2, cpad), lambda b: (b, 0, 0))


def _vec_spec(cpad):
    return pl.BlockSpec((1, cpad), lambda b: (0, 0))


def _full_spec(shape):
    return pl.BlockSpec(shape, lambda b: (0,) * len(shape))


def _conv1(p1, w1m, n, ho, wo, cpad):
    return pl.pallas_call(
        functools.partial(conv1_kernel, ho=ho, wo=wo, cpad=cpad),
        grid=(n,),
        in_specs=[_img_spec(ho, wo, p1.shape[-1]), _full_spec(w1m.shape)],
        out_specs=[_img_spec(ho, wo, cpad), _stat_spec(cpad)],
        out_shape=(jax.ShapeDtypeStruct((n, ho, wo, cpad), COMPUTE_DTYPE),
                   jax.ShapeDtypeStruct((n, 2, cpad), jnp.float32)),
        compiler_params=_compiler_params(),
    )(p1, w1m)


def _conv1_proj(p1, w1m, wsm, n, ho, wo, cinp, cpad):
    return pl.pallas_call(
        functools.partial(conv1_proj_kernel, ho=ho, wo=wo, cinp=cinp, cpad=cpad),
        grid=(n,),
        in_specs=[_img_spec(ho, wo, p1.shape[-1]), _full_spec(w1m.shape),
                  _full_spec(wsm.shape)],
        out_specs=[_img_spec(ho, wo, cpad), _img_spec(ho, wo, cpad),
                   _stat_spec(cpad), _stat_spec(cpad)],
        out_shape=(jax.ShapeDtypeStruct((n, ho, wo, cpad), COMPUTE_DTYPE),
                   jax.ShapeDtypeStruct((n, ho, wo, cpad), COMPUTE_DTYPE),
                   jax.ShapeDtypeStruct((n, 2, cpad), jnp.float32),
                   jax.ShapeDtypeStruct((n, 2, cpad), jnp.float32)),
        compiler_params=_compiler_params(),
    )(p1, w1m, wsm)


def _conv2(y1, a1, c1, w2m, n, ho, wo, cpad):
    return pl.pallas_call(
        functools.partial(conv2_kernel, ho=ho, wo=wo, cpad=cpad),
        grid=(n,),
        in_specs=[_img_spec(ho, wo, cpad), _vec_spec(cpad), _vec_spec(cpad),
                  _full_spec(w2m.shape)],
        out_specs=[_img_spec(ho, wo, cpad), _stat_spec(cpad)],
        out_shape=(jax.ShapeDtypeStruct((n, ho, wo, cpad), COMPUTE_DTYPE),
                   jax.ShapeDtypeStruct((n, 2, cpad), jnp.float32)),
        compiler_params=_compiler_params(),
    )(y1, a1, c1, w2m)


def _final_proj(y2, ys, a2, c2, a_s, c_s, n, ho, wo, cpad):
    return pl.pallas_call(
        final_proj_kernel,
        grid=(n,),
        in_specs=[_img_spec(ho, wo, cpad), _img_spec(ho, wo, cpad),
                  _vec_spec(cpad), _vec_spec(cpad), _vec_spec(cpad), _vec_spec(cpad)],
        out_specs=_img_spec(ho, wo, cpad),
        out_shape=jax.ShapeDtypeStruct((n, ho, wo, cpad), COMPUTE_DTYPE),
        compiler_params=_compiler_params(),
    )(y2, ys, a2, c2, a_s, c_s)


def _final_id(y2, sc, a2, c2, n, ho, wo, cpad):
    return pl.pallas_call(
        final_id_kernel,
        grid=(n,),
        in_specs=[_img_spec(ho, wo, cpad), _img_spec(ho, wo, cpad),
                  _vec_spec(cpad), _vec_spec(cpad)],
        out_specs=_img_spec(ho, wo, cpad),
        out_shape=jax.ShapeDtypeStruct((n, ho, wo, cpad), COMPUTE_DTYPE),
        compiler_params=_compiler_params(),
    )(y2, sc, a2, c2)


# ---------------------------------------------------------------------------
# Plain-JAX glue: conv1 im2col, weight packing, cross-image BN stats reduction
# ---------------------------------------------------------------------------
def _im2col_3x3(x_nhwc, stride):
    """3x3, padding=1 patches in image layout; per-pixel feature order (kh, kw, c)."""
    # TODO(synk): conv1's im2col is still plain JAX (conv2's is fused in-kernel).
    n, h, w, c = x_nhwc.shape
    ho = (h + 2 - 3) // stride + 1
    wo = (w + 2 - 3) // stride + 1
    xp = jnp.pad(x_nhwc, ((0, 0), (1, 1), (1, 1), (0, 0)))
    cols = []
    for kh in range(3):
        for kw in range(3):
            cols.append(xp[:, kh:kh + (ho - 1) * stride + 1:stride,
                              kw:kw + (wo - 1) * stride + 1:stride, :])
    return jnp.concatenate(cols, axis=-1), ho, wo              # (n, ho, wo, 9c)


def _w3x3_to_mat(w, cinp, cpad):
    """(Cout, Cin, 3, 3) -> (9*cinp, cpad) matching the (kh, kw, cin) patch order."""
    cout, cin = w.shape[0], w.shape[1]
    wm = jnp.transpose(w, (2, 3, 1, 0))                        # (3, 3, cin, cout)
    wm = jnp.pad(wm, ((0, 0), (0, 0), (0, cinp - cin), (0, cpad - cout)))
    return wm.reshape(9 * cinp, cpad)


def _w3x3_to_taps(w, cpad):
    """(Cout, Cin, 3, 3) -> (9, cpad, cpad) per-tap weight matrices."""
    cout, cin = w.shape[0], w.shape[1]
    wm = jnp.transpose(w, (2, 3, 1, 0)).reshape(9, cin, cout)
    return jnp.pad(wm, ((0, 0), (0, cpad - cin), (0, cpad - cout)))


def _bn_affine(stats, count, gamma, beta, cpad):
    """Reduce per-image [sum, sumsq] to a global BN affine y -> a*y + c."""
    s = jnp.sum(stats[:, 0, :], axis=0)
    sq = jnp.sum(stats[:, 1, :], axis=0)
    mean = s / count
    var = jnp.maximum(sq / count - mean * mean, 0.0)           # biased var (PyTorch BN)
    inv = lax.rsqrt(var + EPS)
    g = jnp.pad(gamma.astype(jnp.float32), (0, cpad - gamma.shape[0]))
    b = jnp.pad(beta.astype(jnp.float32), (0, cpad - beta.shape[0]))
    a = g * inv
    c = b - mean * a
    return a.reshape(1, cpad), c.reshape(1, cpad)


# ---------------------------------------------------------------------------
# ResidualBlock forward
# ---------------------------------------------------------------------------
def residual_block_forward(x_nchw, params, stride):
    w1, g1, b1 = params["w1"], params["g1"], params["b1"]
    w2, g2, b2 = params["w2"], params["g2"], params["b2"]
    cout, cin = int(w1.shape[0]), int(w1.shape[1])
    n = int(x_nchw.shape[0])
    cinp = _round_up(cin, LANE)
    cpad = _round_up(cout, LANE)
    proj = (stride != 1) or (cin != cout)

    # TODO(synk): keep the surrounding model NHWC end-to-end to drop these transposes.
    x_nhwc = jnp.transpose(x_nchw, (0, 2, 3, 1)).astype(jnp.float32)
    # Pad input channels per-tap to a lane multiple (cheap: done on x, before the
    # 9x patch expansion) so every tap slice, in particular the centre tap used by
    # the projection shortcut, is 128-aligned.
    x_cp = jnp.pad(x_nhwc, ((0, 0), (0, 0), (0, 0), (0, cinp - cin)))

    p1, ho, wo = _im2col_3x3(x_cp, stride)                     # (n, ho, wo, 9*cinp)
    p1 = p1.astype(COMPUTE_DTYPE)
    r = n * ho * wo                                            # BN count

    w1m = _w3x3_to_mat(w1, cinp, cpad).astype(COMPUTE_DTYPE)

    # ---- stage 1: conv1 (+ centre-tap projection shortcut) + BN partial stats ----
    if proj:
        ws, gs, bs = params["ws"], params["gs"], params["bs"]
        wsm = jnp.pad(ws.reshape(cout, cin).T,
                      ((0, cinp - cin), (0, cpad - cout))).astype(COMPUTE_DTYPE)
        y1, ys, st1, sts = _conv1_proj(p1, w1m, wsm, n, ho, wo, cinp, cpad)
    else:
        y1, st1 = _conv1(p1, w1m, n, ho, wo, cpad)
        ys, sts = None, None

    a1, c1 = _bn_affine(st1, r, g1, b1, cpad)

    # ---- stage 2: fused BN1+ReLU + in-kernel 3x3 im2col + conv2 + BN2 stats ----
    w2m = _w3x3_to_taps(w2, cpad).astype(COMPUTE_DTYPE)
    y2, st2 = _conv2(y1, a1, c1, w2m, n, ho, wo, cpad)
    a2, c2 = _bn_affine(st2, r, g2, b2, cpad)

    # ---- stage 3: BN2 + shortcut + residual add + final ReLU ----
    if proj:
        a_s, c_s = _bn_affine(sts, r, gs, bs, cpad)
        out = _final_proj(y2, ys, a2, c2, a_s, c_s, n, ho, wo, cpad)
    else:
        sc = jnp.pad(x_nhwc, ((0, 0), (0, 0), (0, 0), (0, cpad - cin)))
        out = _final_id(y2, sc.astype(COMPUTE_DTYPE), a2, c2, n, ho, wo, cpad)

    out = out[:, :, :, :cout].astype(jnp.float32)
    return jnp.transpose(out, (0, 3, 1, 2))


# ---------------------------------------------------------------------------
# Pure-JAX f32 reference (correctness check)
# ---------------------------------------------------------------------------
def reference_forward(x, params, stride):
    def conv(x, w, s, pad):
        return lax.conv_general_dilated(
            x, w, (s, s), ((pad, pad), (pad, pad)),
            dimension_numbers=("NCHW", "OIHW", "NCHW"))

    def bn(y, g, b):
        mean = jnp.mean(y, axis=(0, 2, 3), keepdims=True)
        var = jnp.mean((y - mean) ** 2, axis=(0, 2, 3), keepdims=True)
        return (g.reshape(1, -1, 1, 1) * (y - mean) / jnp.sqrt(var + EPS)
                + b.reshape(1, -1, 1, 1))

    cout, cin = params["w1"].shape[0], params["w1"].shape[1]
    out = conv(x, params["w1"], stride, 1)
    out = jnp.maximum(bn(out, params["g1"], params["b1"]), 0.0)
    out = conv(out, params["w2"], 1, 1)
    out = bn(out, params["g2"], params["b2"])
    if stride != 1 or cin != cout:
        sc = bn(conv(x, params["ws"], stride, 0), params["gs"], params["bs"])
    else:
        sc = x
    return jnp.maximum(out + sc, 0.0)


# ---------------------------------------------------------------------------
if __name__ == "__main__":
    def make_params(key, cin, cout):
        ks = jax.random.split(key, 9)
        return {
            "w1": 0.1 * jax.random.normal(ks[0], (cout, cin, 3, 3), jnp.float32),
            "g1": 1.0 + 0.1 * jax.random.normal(ks[1], (cout,), jnp.float32),
            "b1": 0.1 * jax.random.normal(ks[2], (cout,), jnp.float32),
            "w2": 0.1 * jax.random.normal(ks[3], (cout, cout, 3, 3), jnp.float32),
            "g2": 1.0 + 0.1 * jax.random.normal(ks[4], (cout,), jnp.float32),
            "b2": 0.1 * jax.random.normal(ks[5], (cout,), jnp.float32),
            "ws": 0.1 * jax.random.normal(ks[6], (cout, cin, 1, 1), jnp.float32),
            "gs": 1.0 + 0.1 * jax.random.normal(ks[7], (cout,), jnp.float32),
            "bs": 0.1 * jax.random.normal(ks[8], (cout,), jnp.float32),
        }

    key = jax.random.PRNGKey(0)
    configs = [
        (2, 4, 8, 16, 16, 2),   # projection shortcut (stride=2, cin!=cout)
        (2, 8, 8, 16, 16, 1),   # identity shortcut
    ]
    for idx, (n, cin, cout, h, w, stride) in enumerate(configs):
        kp, kx, key = jax.random.split(key, 3)
        params = make_params(kp, cin, cout)
        x = jax.random.normal(kx, (n, cin, h, w), jnp.float32)

        fwd = jax.jit(functools.partial(residual_block_forward, stride=stride))
        out = jax.block_until_ready(fwd(x, params))
        ref = jax.block_until_ready(reference_forward(x, params, stride))

        assert out.shape == ref.shape, (out.shape, ref.shape)
        err = float(jnp.max(jnp.abs(out - ref)))
        # bf16 MXU operands + bf16 intermediate *and* final storage vs a pure-f32
        # reference: mixed-precision tolerance (observed error is a few 1e-2;
        # real bugs — wrong taps / wrong BN stats — are O(1)).
        assert jnp.allclose(out, ref, atol=1e-1, rtol=1e-1), (idx, err)

    print("KERNEL_OK")
</pallas_src>

<mosaic_0001>
module attributes {stable_mosaic.version = 11 : i64} {
  func.func @conv1_proj_kernel(%arg0: i32, %arg1: memref<1x8x8x1152xbf16, #tpu.memory_space<vmem>>, %arg2: memref<1152x128xbf16, #tpu.memory_space<vmem>>, %arg3: memref<128x128xbf16, #tpu.memory_space<vmem>>, %arg4: memref<1x8x8x128xbf16, #tpu.memory_space<vmem>>, %arg5: memref<1x8x8x128xbf16, #tpu.memory_space<vmem>>, %arg6: memref<1x2x128xf32, #tpu.memory_space<vmem>>, %arg7: memref<1x2x128xf32, #tpu.memory_space<vmem>>) attributes {dimension_semantics = [#tpu.dimension_semantics<parallel>], iteration_bounds = array<i64: 2>, scalar_prefetch = 0 : i64, scratch_operands = 0 : i64, tpu.core_type = #tpu.core_type<tc>, window_params = [{transform_indices = @transform_0, window_bounds = array<i64: 1, 8, 8, 1152>}, {pipeline_mode = #tpu.pipeline_mode<synchronous>, transform_indices = @transform_1, window_bounds = array<i64: 1152, 128>}, {pipeline_mode = #tpu.pipeline_mode<synchronous>, transform_indices = @transform_2, window_bounds = array<i64: 128, 128>}, {transform_indices = @transform_3, window_bounds = array<i64: 1, 8, 8, 128>}, {transform_indices = @transform_4, window_bounds = array<i64: 1, 8, 8, 128>}, {transform_indices = @transform_5, window_bounds = array<i64: 1, 2, 128>}, {transform_indices = @transform_6, window_bounds = array<i64: 1, 2, 128>}]} {
    %c0 = arith.constant 0 : index
    %c0_0 = arith.constant 0 : index
    %c0_1 = arith.constant 0 : index
    %c0_2 = arith.constant 0 : index
    %0 = vector.load %arg1[%c0, %c0_0, %c0_1, %c0_2] : memref<1x8x8x1152xbf16, #tpu.memory_space<vmem>>, vector<1x8x8x1152xbf16>
    %1 = vector.shape_cast %0 : vector<1x8x8x1152xbf16> to vector<8x8x1152xbf16>
    %2 = vector.shape_cast %1 : vector<8x8x1152xbf16> to vector<64x1152xbf16>
    %c0_3 = arith.constant 0 : index
    %c0_4 = arith.constant 0 : index
    %3 = vector.load %arg2[%c0_3, %c0_4] : memref<1152x128xbf16, #tpu.memory_space<vmem>>, vector<1152x128xbf16>
    %cst = arith.constant dense<0.000000e+00> : vector<64x128xf32>
    %4 = tpu.matmul %2, %3, %cst {dimension_numbers = #tpu.dot_dimension_numbers<[1], [0], [0], [1], [0, 0, 1, 1], [], []>} : vector<64x1152xbf16>, vector<1152x128xbf16>, vector<64x128xf32> -> vector<64x128xf32>
    %5 = vector.extract_strided_slice %2 {offsets = [0, 512], sizes = [64, 128], strides = [1, 1]} : vector<64x1152xbf16> to vector<64x128xbf16>
    %c0_5 = arith.constant 0 : index
    %c0_6 = arith.constant 0 : index
    %6 = vector.load %arg3[%c0_5, %c0_6] : memref<128x128xbf16, #tpu.memory_space<vmem>>, vector<128x128xbf16>
    %cst_7 = arith.constant dense<0.000000e+00> : vector<64x128xf32>
    %7 = tpu.matmul %5, %6, %cst_7 {dimension_numbers = #tpu.dot_dimension_numbers<[1], [0], [0], [1], [0, 0, 1, 1], [], []>} : vector<64x128xbf16>, vector<128x128xbf16>, vector<64x128xf32> -> vector<64x128xf32>
    %cst_8 = arith.constant dense<0.000000e+00> : vector<128xf32>
    %8 = vector.multi_reduction <add>, %4, %cst_8 [0] : vector<64x128xf32> to vector<128xf32>
    %9 = vector.shape_cast %8 : vector<128xf32> to vector<1x128xf32>
    %10 = arith.mulf %4, %4 : vector<64x128xf32>
    %cst_9 = arith.constant dense<0.000000e+00> : vector<128xf32>
    %11 = vector.multi_reduction <add>, %10, %cst_9 [0] : vector<64x128xf32> to vector<128xf32>
    %12 = vector.shape_cast %11 : vector<128xf32> to vector<1x128xf32>
    %13 = tpu.concatenate %9, %12 in 0 : vector<1x128xf32>, vector<1x128xf32> -> vector<2x128xf32>
    %c0_10 = arith.constant 0 : index
    %c0_11 = arith.constant 0 : index
    %c0_12 = arith.constant 0 : index
    %14 = vector.load %arg6[%c0_10, %c0_11, %c0_12] : memref<1x2x128xf32, #tpu.memory_space<vmem>>, vector<1x2x128xf32>
    %15 = vector.shape_cast %14 : vector<1x2x128xf32> to vector<2x128xf32>
    %16 = vector.shape_cast %13 : vector<2x128xf32> to vector<1x2x128xf32>
    tpu.vector_store %arg6[%c0_10, %c0_11, %c0_12], %16 {strides = array<i32>} : memref<1x2x128xf32, #tpu.memory_space<vmem>>, vector<1x2x128xf32>,
    %cst_13 = arith.constant dense<0.000000e+00> : vector<128xf32>
    %17 = vector.multi_reduction <add>, %7, %cst_13 [0] : vector<64x128xf32> to vector<128xf32>
    %18 = vector.shape_cast %17 : vector<128xf32> to vector<1x128xf32>
    %19 = arith.mulf %7, %7 : vector<64x128xf32>
    %cst_14 = arith.constant dense<0.000000e+00> : vector<128xf32>
    %20 = vector.multi_reduction <add>, %19, %cst_14 [0] : vector<64x128xf32> to vector<128xf32>
    %21 = vector.shape_cast %20 : vector<128xf32> to vector<1x128xf32>
    %22 = tpu.concatenate %18, %21 in 0 : vector<1x128xf32>, vector<1x128xf32> -> vector<2x128xf32>
    %c0_15 = arith.constant 0 : index
    %c0_16 = arith.constant 0 : index
    %c0_17 = arith.constant 0 : index
    %23 = vector.load %arg7[%c0_15, %c0_16, %c0_17] : memref<1x2x128xf32, #tpu.memory_space<vmem>>, vector<1x2x128xf32>
    %24 = vector.shape_cast %23 : vector<1x2x128xf32> to vector<2x128xf32>
    %25 = vector.shape_cast %22 : vector<2x128xf32> to vector<1x2x128xf32>
    tpu.vector_store %arg7[%c0_15, %c0_16, %c0_17], %25 {strides = array<i32>} : memref<1x2x128xf32, #tpu.memory_space<vmem>>, vector<1x2x128xf32>,
    %26 = vector.shape_cast %4 : vector<64x128xf32> to vector<8x8x128xf32>
    %27 = arith.truncf %26 : vector<8x8x128xf32> to vector<8x8x128xbf16>
    %c0_18 = arith.constant 0 : index
    %c0_19 = arith.constant 0 : index
    %c0_20 = arith.constant 0 : index
    %c0_21 = arith.constant 0 : index
    %28 = vector.load %arg4[%c0_18, %c0_19, %c0_20, %c0_21] : memref<1x8x8x128xbf16, #tpu.memory_space<vmem>>, vector<1x8x8x128xbf16>
    %29 = vector.shape_cast %28 : vector<1x8x8x128xbf16> to vector<8x8x128xbf16>
    %30 = vector.shape_cast %27 : vector<8x8x128xbf16> to vector<1x8x8x128xbf16>
    tpu.vector_store %arg4[%c0_18, %c0_19, %c0_20, %c0_21], %30 {strides = array<i32>} : memref<1x8x8x128xbf16, #tpu.memory_space<vmem>>, vector<1x8x8x128xbf16>,
    %31 = vector.shape_cast %7 : vector<64x128xf32> to vector<8x8x128xf32>
    %32 = arith.truncf %31 : vector<8x8x128xf32> to vector<8x8x128xbf16>
    %c0_22 = arith.constant 0 : index
    %c0_23 = arith.constant 0 : index
    %c0_24 = arith.constant 0 : index
    %c0_25 = arith.constant 0 : index
    %33 = vector.load %arg5[%c0_22, %c0_23, %c0_24, %c0_25] : memref<1x8x8x128xbf16, #tpu.memory_space<vmem>>, vector<1x8x8x128xbf16>
    %34 = vector.shape_cast %33 : vector<1x8x8x128xbf16> to vector<8x8x128xbf16>
    %35 = vector.shape_cast %32 : vector<8x8x128xbf16> to vector<1x8x8x128xbf16>
    tpu.vector_store %arg5[%c0_22, %c0_23, %c0_24, %c0_25], %35 {strides = array<i32>} : memref<1x8x8x128xbf16, #tpu.memory_space<vmem>>, vector<1x8x8x128xbf16>,
    return
  }
  func.func @transform_0(%arg0: i32) -> (i32, i32, i32, i32) {
    %c0_i32 = arith.constant 0 : i32
    %c0_i32_0 = arith.constant 0 : i32
    %c0_i32_1 = arith.constant 0 : i32
    %c0_i32_2 = arith.constant 0 : i32
    return %arg0, %c0_i32, %c0_i32_0, %c0_i32_1 : i32, i32, i32, i32
  }
  func.func @transform_1(%arg0: i32) -> (i32, i32) {
    %c0_i32 = arith.constant 0 : i32
    %c0_i32_0 = arith.constant 0 : i32
    %c0_i32_1 = arith.constant 0 : i32
    return %c0_i32, %c0_i32_0 : i32, i32
  }
  func.func @transform_2(%arg0: i32) -> (i32, i32) {
    %c0_i32 = arith.constant 0 : i32
    %c0_i32_0 = arith.constant 0 : i32
    %c0_i32_1 = arith.constant 0 : i32
    return %c0_i32, %c0_i32_0 : i32, i32
  }
  func.func @transform_3(%arg0: i32) -> (i32, i32, i32, i32) {
    %c0_i32 = arith.constant 0 : i32
    %c0_i32_0 = arith.constant 0 : i32
    %c0_i32_1 = arith.constant 0 : i32
    %c0_i32_2 = arith.constant 0 : i32
    return %arg0, %c0_i32, %c0_i32_0, %c0_i32_1 : i32, i32, i32, i32
  }
  func.func @transform_4(%arg0: i32) -> (i32, i32, i32, i32) {
    %c0_i32 = arith.constant 0 : i32
    %c0_i32_0 = arith.constant 0 : i32
    %c0_i32_1 = arith.constant 0 : i32
    %c0_i32_2 = arith.constant 0 : i32
    return %arg0, %c0_i32, %c0_i32_0, %c0_i32_1 : i32, i32, i32, i32
  }
  func.func @transform_5(%arg0: i32) -> (i32, i32, i32) {
    %c0_i32 = arith.constant 0 : i32
    %c0_i32_0 = arith.constant 0 : i32
    %c0_i32_1 = arith.constant 0 : i32
    return %arg0, %c0_i32, %c0_i32_0 : i32, i32, i32
  }
  func.func @transform_6(%arg0: i32) -> (i32, i32, i32) {
    %c0_i32 = arith.constant 0 : i32
    %c0_i32_0 = arith.constant 0 : i32
    %c0_i32_1 = arith.constant 0 : i32
    return %arg0, %c0_i32, %c0_i32_0 : i32, i32, i32
  }
}

module attributes {stable_mosaic.version = 11 : i64} {
  func.func @conv2_kernel(%arg0: i32, %arg1: memref<1x8x8x128xbf16, #tpu.memory_space<vmem>>, %arg2: memref<1x128xf32, #tpu.memory_space<vmem>>, %arg3: memref<1x128xf32, #tpu.memory_space<vmem>>, %arg4: memref<9x128x128xbf16, #tpu.memory_space<vmem>>, %arg5: memref<1x8x8x128xbf16, #tpu.memory_space<vmem>>, %arg6: memref<1x2x128xf32, #tpu.memory_space<vmem>>) attributes {dimension_semantics = [#tpu.dimension_semantics<parallel>], iteration_bounds = array<i64: 2>, scalar_prefetch = 0 : i64, scratch_operands = 0 : i64, tpu.core_type = #tpu.core_type<tc>, window_params = [{transform_indices = @transform_0, window_bounds = array<i64: 1, 8, 8, 128>}, {pipeline_mode = #tpu.pipeline_mode<synchronous>, transform_indices = @transform_1, window_bounds = array<i64: 1, 128>}, {pipeline_mode = #tpu.pipeline_mode<synchronous>, transform_indices = @transform_2, window_bounds = array<i64: 1, 128>}, {pipeline_mode = #tpu.pipeline_mode<synchronous>, transform_indices = @transform_3, window_bounds = array<i64: 9, 128, 128>}, {transform_indices = @transform_4, window_bounds = array<i64: 1, 8, 8, 128>}, {transform_indices = @transform_5, window_bounds = array<i64: 1, 2, 128>}]} {
    %c0 = arith.constant 0 : index
    %c0_0 = arith.constant 0 : index
    %c0_1 = arith.constant 0 : index
    %c0_2 = arith.constant 0 : index
    %0 = vector.load %arg1[%c0, %c0_0, %c0_1, %c0_2] : memref<1x8x8x128xbf16, #tpu.memory_space<vmem>>, vector<1x8x8x128xbf16>
    %1 = vector.shape_cast %0 : vector<1x8x8x128xbf16> to vector<8x8x128xbf16>
    %2 = arith.extf %1 : vector<8x8x128xbf16> to vector<8x8x128xf32>
    %c0_3 = arith.constant 0 : index
    %c0_4 = arith.constant 0 : index
    %3 = vector.load %arg2[%c0_3, %c0_4] : memref<1x128xf32, #tpu.memory_space<vmem>>, vector<1x128xf32>
    %4 = vector.shape_cast %3 : vector<1x128xf32> to vector<1x1x128xf32>
    %5 = vector.broadcast %4 : vector<1x1x128xf32> to vector<8x8x128xf32>
    %6 = arith.mulf %2, %5 : vector<8x8x128xf32>
    %c0_5 = arith.constant 0 : index
    %c0_6 = arith.constant 0 : index
    %7 = vector.load %arg3[%c0_5, %c0_6] : memref<1x128xf32, #tpu.memory_space<vmem>>, vector<1x128xf32>
    %8 = vector.shape_cast %7 : vector<1x128xf32> to vector<1x1x128xf32>
    %9 = vector.broadcast %8 : vector<1x1x128xf32> to vector<8x8x128xf32>
    %10 = arith.addf %6, %9 : vector<8x8x128xf32>
    %cst = arith.constant 0.000000e+00 : f32
    %11 = vector.broadcast %cst : f32 to vector<8x8x128xf32>
    %12 = arith.maximumf %10, %11 : vector<8x8x128xf32>
    %cst_7 = arith.constant 0.000000e+00 : f32
    %13 = vector.broadcast %cst_7 : f32 to vector<1x8x128xf32>
    %14 = tpu.concatenate %13, %12, %13 in 0 : vector<1x8x128xf32>, vector<8x8x128xf32>, vector<1x8x128xf32> -> vector<10x8x128xf32>
    %cst_8 = arith.constant 0.000000e+00 : f32
    %15 = vector.broadcast %cst_8 : f32 to vector<10x1x128xf32>
    %16 = tpu.concatenate %15, %14, %15 in 1 : vector<10x1x128xf32>, vector<10x8x128xf32>, vector<10x1x128xf32> -> vector<10x10x128xf32>
    %cst_9 = arith.constant 0.000000e+00 : f32
    %17 = vector.broadcast %cst_9 : f32 to vector<64x128xf32>
    %18 = vector.extract_strided_slice %16 {offsets = [0, 0, 0], sizes = [8, 8, 128], strides = [1, 1, 1]} : vector<10x10x128xf32> to vector<8x8x128xf32>
    %19 = vector.shape_cast %18 : vector<8x8x128xf32> to vector<64x128xf32>
    %20 = arith.truncf %19 : vector<64x128xf32> to vector<64x128xbf16>
    %c0_10 = arith.constant 0 : index
    %c0_11 = arith.constant 0 : index
    %c0_12 = arith.constant 0 : index
    %21 = vector.load %arg4[%c0_10, %c0_11, %c0_12] : memref<9x128x128xbf16, #tpu.memory_space<vmem>>, vector<1x128x128xbf16>
    %22 = vector.shape_cast %21 : vector<1x128x128xbf16> to vector<128x128xbf16>
    %cst_13 = arith.constant dense<0.000000e+00> : vector<64x128xf32>
    %23 = tpu.matmul %20, %22, %cst_13 {dimension_numbers = #tpu.dot_dimension_numbers<[1], [0], [0], [1], [0, 0, 1, 1], [], []>} : vector<64x128xbf16>, vector<128x128xbf16>, vector<64x128xf32> -> vector<64x128xf32>
    %24 = arith.addf %17, %23 : vector<64x128xf32>
    %25 = vector.extract_strided_slice %16 {offsets = [0, 1, 0], sizes = [8, 8, 128], strides = [1, 1, 1]} : vector<10x10x128xf32> to vector<8x8x128xf32>
    %26 = vector.shape_cast %25 : vector<8x8x128xf32> to vector<64x128xf32>
    %27 = arith.truncf %26 : vector<64x128xf32> to vector<64x128xbf16>
    %c1 = arith.constant 1 : index
    %c0_14 = arith.constant 0 : index
    %c0_15 = arith.constant 0 : index
    %28 = vector.load %arg4[%c1, %c0_14, %c0_15] : memref<9x128x128xbf16, #tpu.memory_space<vmem>>, vector<1x128x128xbf16>
    %29 = vector.shape_cast %28 : vector<1x128x128xbf16> to vector<128x128xbf16>
    %cst_16 = arith.constant dense<0.000000e+00> : vector<64x128xf32>
    %30 = tpu.matmul %27, %29, %cst_16 {dimension_numbers = #tpu.dot_dimension_numbers<[1], [0], [0], [1], [0, 0, 1, 1], [], []>} : vector<64x128xbf16>, vector<128x128xbf16>, vector<64x128xf32> -> vector<64x128xf32>
    %31 = arith.addf %24, %30 : vector<64x128xf32>
    %32 = vector.extract_strided_slice %16 {offsets = [0, 2, 0], sizes = [8, 8, 128], strides = [1, 1, 1]} : vector<10x10x128xf32> to vector<8x8x128xf32>
    %33 = vector.shape_cast %32 : vector<8x8x128xf32> to vector<64x128xf32>
    %34 = arith.truncf %33 : vector<64x128xf32> to vector<64x128xbf16>
    %c2 = arith.constant 2 : index
    %c0_17 = arith.constant 0 : index
    %c0_18 = arith.constant 0 : index
    %35 = vector.load %arg4[%c2, %c0_17, %c0_18] : memref<9x128x128xbf16, #tpu.memory_space<vmem>>, vector<1x128x128xbf16>
    %36 = vector.shape_cast %35 : vector<1x128x128xbf16> to vector<128x128xbf16>
    %cst_19 = arith.constant dense<0.000000e+00> : vector<64x128xf32>
    %37 = tpu.matmul %34, %36, %cst_19 {dimension_numbers = #tpu.dot_dimension_numbers<[1], [0], [0], [1], [0, 0, 1, 1], [], []>} : vector<64x128xbf16>, vector<128x128xbf16>, vector<64x128xf32> -> vector<64x128xf32>
    %38 = arith.addf %31, %37 : vector<64x128xf32>
    %39 = vector.extract_strided_slice %16 {offsets = [1, 0, 0], sizes = [8, 8, 128], strides = [1, 1, 1]} : vector<10x10x128xf32> to vector<8x8x128xf32>
    %40 = vector.shape_cast %39 : vector<8x8x128xf32> to vector<64x128xf32>
    %41 = arith.truncf %40 : vector<64x128xf32> to vector<64x128xbf16>
    %c3 = arith.constant 3 : index
    %c0_20 = arith.constant 0 : index
    %c0_21 = arith.constant 0 : index
    %42 = vector.load %arg4[%c3, %c0_20, %c0_21] : memref<9x128x128xbf16, #tpu.memory_space<vmem>>, vector<1x128x128xbf16>
    %43 = vector.shape_cast %42 : vector<1x128x128xbf16> to vector<128x128xbf16>
    %cst_22 = arith.constant dense<0.000000e+00> : vector<64x128xf32>
    %44 = tpu.matmul %41, %43, %cst_22 {dimension_numbers = #tpu.dot_dimension_numbers<[1], [0], [0], [1], [0, 0, 1, 1], [], []>} : vector<64x128xbf16>, vector<128x128xbf16>, vector<64x128xf32> -> vector<64x128xf32>
    %45 = arith.addf %38, %44 : vector<64x128xf32>
    %46 = vector.extract_strided_slice %16 {offsets = [1, 1, 0], sizes = [8, 8, 128], strides = [1, 1, 1]} : vector<10x10x128xf32> to vector<8x8x128xf32>
    %47 = vector.shape_cast %46 : vector<8x8x128xf32> to vector<64x128xf32>
    %48 = arith.truncf %47 : vector<64x128xf32> to vector<64x128xbf16>
    %c4 = arith.constant 4 : index
    %c0_23 = arith.constant 0 : index
    %c0_24 = arith.constant 0 : index
    %49 = vector.load %arg4[%c4, %c0_23, %c0_24] : memref<9x128x128xbf16, #tpu.memory_space<vmem>>, vector<1x128x128xbf16>
    %50 = vector.shape_cast %49 : vector<1x128x128xbf16> to vector<128x128xbf16>
    %cst_25 = arith.constant dense<0.000000e+00> : vector<64x128xf32>
    %51 = tpu.matmul %48, %50, %cst_25 {dimension_numbers = #tpu.dot_dimension_numbers<[1], [0], [0], [1], [0, 0, 1, 1], [], []>} : vector<64x128xbf16>, vector<128x128xbf16>, vector<64x128xf32> -> vector<64x128xf32>
    %52 = arith.addf %45, %51 : vector<64x128xf32>
    %53 = vector.extract_strided_slice %16 {offsets = [1, 2, 0], sizes = [8, 8, 128], strides = [1, 1, 1]} : vector<10x10x128xf32> to vector<8x8x128xf32>
    %54 = vector.shape_cast %53 : vector<8x8x128xf32> to vector<64x128xf32>
    %55 = arith.truncf %54 : vector<64x128xf32> to vector<64x128xbf16>
    %c5 = arith.constant 5 : index
    %c0_26 = arith.constant 0 : index
    %c0_27 = arith.constant 0 : index
    %56 = vector.load %arg4[%c5, %c0_26, %c0_27] : memref<9x128x128xbf16, #tpu.memory_space<vmem>>, vector<1x128x128xbf16>
    %57 = vector.shape_cast %56 : vector<1x128x128xbf16> to vector<128x128xbf16>
    %cst_28 = arith.constant dense<0.000000e+00> : vector<64x128xf32>
    %58 = tpu.matmul %55, %57, %cst_28 {dimension_numbers = #tpu.dot_dimension_numbers<[1], [0], [0], [1], [0, 0, 1, 1], [], []>} : vector<64x128xbf16>, vector<128x128xbf16>, vector<64x128xf32> -> vector<64x128xf32>
    %59 = arith.addf %52, %58 : vector<64x128xf32>
    %60 = vector.extract_strided_slice %16 {offsets = [2, 0, 0], sizes = [8, 8, 128], strides = [1, 1, 1]} : vector<10x10x128xf32> to vector<8x8x128xf32>
    %61 = vector.shape_cast %60 : vector<8x8x128xf32> to vector<64x128xf32>
    %62 = arith.truncf %61 : vector<64x128xf32> to vector<64x128xbf16>
    %c6 = arith.constant 6 : index
    %c0_29 = arith.constant 0 : index
    %c0_30 = arith.constant 0 : index
    %63 = vector.load %arg4[%c6, %c0_29, %c0_30] : memref<9x128x128xbf16, #tpu.memory_space<vmem>>, vector<1x128x128xbf16>
    %64 = vector.shape_cast %63 : vector<1x128x128xbf16> to vector<128x128xbf16>
    %cst_31 = arith.constant dense<0.000000e+00> : vector<64x128xf32>
    %65 = tpu.matmul %62, %64, %cst_31 {dimension_numbers = #tpu.dot_dimension_numbers<[1], [0], [0], [1], [0, 0, 1, 1], [], []>} : vector<64x128xbf16>, vector<128x128xbf16>, vector<64x128xf32> -> vector<64x128xf32>
    %66 = arith.addf %59, %65 : vector<64x128xf32>
    %67 = vector.extract_strided_slice %16 {offsets = [2, 1, 0], sizes = [8, 8, 128], strides = [1, 1, 1]} : vector<10x10x128xf32> to vector<8x8x128xf32>
    %68 = vector.shape_cast %67 : vector<8x8x128xf32> to vector<64x128xf32>
    %69 = arith.truncf %68 : vector<64x128xf32> to vector<64x128xbf16>
    %c7 = arith.constant 7 : index
    %c0_32 = arith.constant 0 : index
    %c0_33 = arith.constant 0 : index
    %70 = vector.load %arg4[%c7, %c0_32, %c0_33] : memref<9x128x128xbf16, #tpu.memory_space<vmem>>, vector<1x128x128xbf16>
    %71 = vector.shape_cast %70 : vector<1x128x128xbf16> to vector<128x128xbf16>
    %cst_34 = arith.constant dense<0.000000e+00> : vector<64x128xf32>
    %72 = tpu.matmul %69, %71, %cst_34 {dimension_numbers = #tpu.dot_dimension_numbers<[1], [0], [0], [1], [0, 0, 1, 1], [], []>} : vector<64x128xbf16>, vector<128x128xbf16>, vector<64x128xf32> -> vector<64x128xf32>
    %73 = arith.addf %66, %72 : vector<64x128xf32>
    %74 = vector.extract_strided_slice %16 {offsets = [2, 2, 0], sizes = [8, 8, 128], strides = [1, 1, 1]} : vector<10x10x128xf32> to vector<8x8x128xf32>
    %75 = vector.shape_cast %74 : vector<8x8x128xf32> to vector<64x128xf32>
    %76 = arith.truncf %75 : vector<64x128xf32> to vector<64x128xbf16>
    %c8 = arith.constant 8 : index
    %c0_35 = arith.constant 0 : index
    %c0_36 = arith.constant 0 : index
    %77 = vector.load %arg4[%c8, %c0_35, %c0_36] : memref<9x128x128xbf16, #tpu.memory_space<vmem>>, vector<1x128x128xbf16>
    %78 = vector.shape_cast %77 : vector<1x128x128xbf16> to vector<128x128xbf16>
    %cst_37 = arith.constant dense<0.000000e+00> : vector<64x128xf32>
    %79 = tpu.matmul %76, %78, %cst_37 {dimension_numbers = #tpu.dot_dimension_numbers<[1], [0], [0], [1], [0, 0, 1, 1], [], []>} : vector<64x128xbf16>, vector<128x128xbf16>, vector<64x128xf32> -> vector<64x128xf32>
    %80 = arith.addf %73, %79 : vector<64x128xf32>
    %cst_38 = arith.constant dense<0.000000e+00> : vector<128xf32>
    %81 = vector.multi_reduction <add>, %80, %cst_38 [0] : vector<64x128xf32> to vector<128xf32>
    %82 = vector.shape_cast %81 : vector<128xf32> to vector<1x128xf32>
    %83 = arith.mulf %80, %80 : vector<64x128xf32>
    %cst_39 = arith.constant dense<0.000000e+00> : vector<128xf32>
    %84 = vector.multi_reduction <add>, %83, %cst_39 [0] : vector<64x128xf32> to vector<128xf32>
    %85 = vector.shape_cast %84 : vector<128xf32> to vector<1x128xf32>
    %86 = tpu.concatenate %82, %85 in 0 : vector<1x128xf32>, vector<1x128xf32> -> vector<2x128xf32>
    %c0_40 = arith.constant 0 : index
    %c0_41 = arith.constant 0 : index
    %c0_42 = arith.constant 0 : index
    %87 = vector.load %arg6[%c0_40, %c0_41, %c0_42] : memref<1x2x128xf32, #tpu.memory_space<vmem>>, vector<1x2x128xf32>
    %88 = vector.shape_cast %87 : vector<1x2x128xf32> to vector<2x128xf32>
    %89 = vector.shape_cast %86 : vector<2x128xf32> to vector<1x2x128xf32>
    tpu.vector_store %arg6[%c0_40, %c0_41, %c0_42], %89 {strides = array<i32>} : memref<1x2x128xf32, #tpu.memory_space<vmem>>, vector<1x2x128xf32>,
    %90 = vector.shape_cast %80 : vector<64x128xf32> to vector<8x8x128xf32>
    %91 = arith.truncf %90 : vector<8x8x128xf32> to vector<8x8x128xbf16>
    %c0_43 = arith.constant 0 : index
    %c0_44 = arith.constant 0 : index
    %c0_45 = arith.constant 0 : index
    %c0_46 = arith.constant 0 : index
    %92 = vector.load %arg5[%c0_43, %c0_44, %c0_45, %c0_46] : memref<1x8x8x128xbf16, #tpu.memory_space<vmem>>, vector<1x8x8x128xbf16>
    %93 = vector.shape_cast %92 : vector<1x8x8x128xbf16> to vector<8x8x128xbf16>
    %94 = vector.shape_cast %91 : vector<8x8x128xbf16> to vector<1x8x8x128xbf16>
    tpu.vector_store %arg5[%c0_43, %c0_44, %c0_45, %c0_46], %94 {strides = array<i32>} : memref<1x8x8x128xbf16, #tpu.memory_space<vmem>>, vector<1x8x8x128xbf16>,
    return
  }
  func.func @transform_0(%arg0: i32) -> (i32, i32, i32, i32) {
    %c0_i32 = arith.constant 0 : i32
    %c0_i32_0 = arith.constant 0 : i32
    %c0_i32_1 = arith.constant 0 : i32
    %c0_i32_2 = arith.constant 0 : i32
    return %arg0, %c0_i32, %c0_i32_0, %c0_i32_1 : i32, i32, i32, i32
  }
  func.func @transform_1(%arg0: i32) -> (i32, i32) {
    %c0_i32 = arith.constant 0 : i32
    %c0_i32_0 = arith.constant 0 : i32
    %c0_i32_1 = arith.constant 0 : i32
    return %c0_i32, %c0_i32_0 : i32, i32
  }
  func.func @transform_2(%arg0: i32) -> (i32, i32) {
    %c0_i32 = arith.constant 0 : i32
    %c0_i32_0 = arith.constant 0 : i32
    %c0_i32_1 = arith.constant 0 : i32
    return %c0_i32, %c0_i32_0 : i32, i32
  }
  func.func @transform_3(%arg0: i32) -> (i32, i32, i32) {
    %c0_i32 = arith.constant 0 : i32
    %c0_i32_0 = arith.constant 0 : i32
    %c0_i32_1 = arith.constant 0 : i32
    %c0_i32_2 = arith.constant 0 : i32
    return %c0_i32, %c0_i32_0, %c0_i32_1 : i32, i32, i32
  }
  func.func @transform_4(%arg0: i32) -> (i32, i32, i32, i32) {
    %c0_i32 = arith.constant 0 : i32
    %c0_i32_0 = arith.constant 0 : i32
    %c0_i32_1 = arith.constant 0 : i32
    %c0_i32_2 = arith.constant 0 : i32
    return %arg0, %c0_i32, %c0_i32_0, %c0_i32_1 : i32, i32, i32, i32
  }
  func.func @transform_5(%arg0: i32) -> (i32, i32, i32) {
    %c0_i32 = arith.constant 0 : i32
    %c0_i32_0 = arith.constant 0 : i32
    %c0_i32_1 = arith.constant 0 : i32
    return %arg0, %c0_i32, %c0_i32_0 : i32, i32, i32
  }
}

module attributes {stable_mosaic.version = 11 : i64} {
  func.func @final_proj_kernel(%arg0: i32, %arg1: memref<1x8x8x128xbf16, #tpu.memory_space<vmem>>, %arg2: memref<1x8x8x128xbf16, #tpu.memory_space<vmem>>, %arg3: memref<1x128xf32, #tpu.memory_space<vmem>>, %arg4: memref<1x128xf32, #tpu.memory_space<vmem>>, %arg5: memref<1x128xf32, #tpu.memory_space<vmem>>, %arg6: memref<1x128xf32, #tpu.memory_space<vmem>>, %arg7: memref<1x8x8x128xbf16, #tpu.memory_space<vmem>>) attributes {dimension_semantics = [#tpu.dimension_semantics<parallel>], iteration_bounds = array<i64: 2>, scalar_prefetch = 0 : i64, scratch_operands = 0 : i64, tpu.core_type = #tpu.core_type<tc>, window_params = [{transform_indices = @transform_0, window_bounds = array<i64: 1, 8, 8, 128>}, {transform_indices = @transform_1, window_bounds = array<i64: 1, 8, 8, 128>}, {pipeline_mode = #tpu.pipeline_mode<synchronous>, transform_indices = @transform_2, window_bounds = array<i64: 1, 128>}, {pipeline_mode = #tpu.pipeline_mode<synchronous>, transform_indices = @transform_3, window_bounds = array<i64: 1, 128>}, {pipeline_mode = #tpu.pipeline_mode<synchronous>, transform_indices = @transform_4, window_bounds = array<i64: 1, 128>}, {pipeline_mode = #tpu.pipeline_mode<synchronous>, transform_indices = @transform_5, window_bounds = array<i64: 1, 128>}, {transform_indices = @transform_6, window_bounds = array<i64: 1, 8, 8, 128>}]} {
    %c0 = arith.constant 0 : index
    %c0_0 = arith.constant 0 : index
    %c0_1 = arith.constant 0 : index
    %c0_2 = arith.constant 0 : index
    %0 = vector.load %arg1[%c0, %c0_0, %c0_1, %c0_2] : memref<1x8x8x128xbf16, #tpu.memory_space<vmem>>, vector<1x8x8x128xbf16>
    %1 = vector.shape_cast %0 : vector<1x8x8x128xbf16> to vector<8x8x128xbf16>
    %2 = arith.extf %1 : vector<8x8x128xbf16> to vector<8x8x128xf32>
    %c0_3 = arith.constant 0 : index
    %c0_4 = arith.constant 0 : index
    %3 = vector.load %arg3[%c0_3, %c0_4] : memref<1x128xf32, #tpu.memory_space<vmem>>, vector<1x128xf32>
    %4 = vector.shape_cast %3 : vector<1x128xf32> to vector<1x1x128xf32>
    %5 = vector.broadcast %4 : vector<1x1x128xf32> to vector<8x8x128xf32>
    %6 = arith.mulf %2, %5 : vector<8x8x128xf32>
    %c0_5 = arith.constant 0 : index
    %c0_6 = arith.constant 0 : index
    %7 = vector.load %arg4[%c0_5, %c0_6] : memref<1x128xf32, #tpu.memory_space<vmem>>, vector<1x128xf32>
    %8 = vector.shape_cast %7 : vector<1x128xf32> to vector<1x1x128xf32>
    %9 = vector.broadcast %8 : vector<1x1x128xf32> to vector<8x8x128xf32>
    %10 = arith.addf %6, %9 : vector<8x8x128xf32>
    %c0_7 = arith.constant 0 : index
    %c0_8 = arith.constant 0 : index
    %c0_9 = arith.constant 0 : index
    %c0_10 = arith.constant 0 : index
    %11 = vector.load %arg2[%c0_7, %c0_8, %c0_9, %c0_10] : memref<1x8x8x128xbf16, #tpu.memory_space<vmem>>, vector<1x8x8x128xbf16>
    %12 = vector.shape_cast %11 : vector<1x8x8x128xbf16> to vector<8x8x128xbf16>
    %13 = arith.extf %12 : vector<8x8x128xbf16> to vector<8x8x128xf32>
    %c0_11 = arith.constant 0 : index
    %c0_12 = arith.constant 0 : index
    %14 = vector.load %arg5[%c0_11, %c0_12] : memref<1x128xf32, #tpu.memory_space<vmem>>, vector<1x128xf32>
    %15 = vector.shape_cast %14 : vector<1x128xf32> to vector<1x1x128xf32>
    %16 = vector.broadcast %15 : vector<1x1x128xf32> to vector<8x8x128xf32>
    %17 = arith.mulf %13, %16 : vector<8x8x128xf32>
    %c0_13 = arith.constant 0 : index
    %c0_14 = arith.constant 0 : index
    %18 = vector.load %arg6[%c0_13, %c0_14] : memref<1x128xf32, #tpu.memory_space<vmem>>, vector<1x128xf32>
    %19 = vector.shape_cast %18 : vector<1x128xf32> to vector<1x1x128xf32>
    %20 = vector.broadcast %19 : vector<1x1x128xf32> to vector<8x8x128xf32>
    %21 = arith.addf %17, %20 : vector<8x8x128xf32>
    %22 = arith.addf %10, %21 : vector<8x8x128xf32>
    %cst = arith.constant 0.000000e+00 : f32
    %23 = vector.broadcast %cst : f32 to vector<8x8x128xf32>
    %24 = arith.maximumf %22, %23 : vector<8x8x128xf32>
    %25 = arith.truncf %24 : vector<8x8x128xf32> to vector<8x8x128xbf16>
    %c0_15 = arith.constant 0 : index
    %c0_16 = arith.constant 0 : index
    %c0_17 = arith.constant 0 : index
    %c0_18 = arith.constant 0 : index
    %26 = vector.load %arg7[%c0_15, %c0_16, %c0_17, %c0_18] : memref<1x8x8x128xbf16, #tpu.memory_space<vmem>>, vector<1x8x8x128xbf16>
    %27 = vector.shape_cast %26 : vector<1x8x8x128xbf16> to vector<8x8x128xbf16>
    %28 = vector.shape_cast %25 : vector<8x8x128xbf16> to vector<1x8x8x128xbf16>
    tpu.vector_store %arg7[%c0_15, %c0_16, %c0_17, %c0_18], %28 {strides = array<i32>} : memref<1x8x8x128xbf16, #tpu.memory_space<vmem>>, vector<1x8x8x128xbf16>,
    return
  }
  func.func @transform_0(%arg0: i32) -> (i32, i32, i32, i32) {
    %c0_i32 = arith.constant 0 : i32
    %c0_i32_0 = arith.constant 0 : i32
    %c0_i32_1 = arith.constant 0 : i32
    %c0_i32_2 = arith.constant 0 : i32
    return %arg0, %c0_i32, %c0_i32_0, %c0_i32_1 : i32, i32, i32, i32
  }
  func.func @transform_1(%arg0: i32) -> (i32, i32, i32, i32) {
    %c0_i32 = arith.constant 0 : i32
    %c0_i32_0 = arith.constant 0 : i32
    %c0_i32_1 = arith.constant 0 : i32
    %c0_i32_2 = arith.constant 0 : i32
    return %arg0, %c0_i32, %c0_i32_0, %c0_i32_1 : i32, i32, i32, i32
  }
  func.func @transform_2(%arg0: i32) -> (i32, i32) {
    %c0_i32 = arith.constant 0 : i32
    %c0_i32_0 = arith.constant 0 : i32
    %c0_i32_1 = arith.constant 0 : i32
    return %c0_i32, %c0_i32_0 : i32, i32
  }
  func.func @transform_3(%arg0: i32) -> (i32, i32) {
    %c0_i32 = arith.constant 0 : i32
    %c0_i32_0 = arith.constant 0 : i32
    %c0_i32_1 = arith.constant 0 : i32
    return %c0_i32, %c0_i32_0 : i32, i32
  }
  func.func @transform_4(%arg0: i32) -> (i32, i32) {
    %c0_i32 = arith.constant 0 : i32
    %c0_i32_0 = arith.constant 0 : i32
    %c0_i32_1 = arith.constant 0 : i32
    return %c0_i32, %c0_i32_0 : i32, i32
  }
  func.func @transform_5(%arg0: i32) -> (i32, i32) {
    %c0_i32 = arith.constant 0 : i32
    %c0_i32_0 = arith.constant 0 : i32
    %c0_i32_1 = arith.constant 0 : i32
    return %c0_i32, %c0_i32_0 : i32, i32
  }
  func.func @transform_6(%arg0: i32) -> (i32, i32, i32, i32) {
    %c0_i32 = arith.constant 0 : i32
    %c0_i32_0 = arith.constant 0 : i32
    %c0_i32_1 = arith.constant 0 : i32
    %c0_i32_2 = arith.constant 0 : i32
    return %arg0, %c0_i32, %c0_i32_0, %c0_i32_1 : i32, i32, i32, i32
  }
}

</mosaic_0001>

<llo_original>
// kernel: residual_block_forward.5
$region0: #{residual_block_forward.5}
  #allocation0 [shape = 'u32[]', space=smem, size = 0x4, offset = 0x4, fixed_abs, tag = 'smem constant byte address 0x4 - core index']
  #allocation1 [shape = 'u32[72,128]{1,0:T(1,128)}', space=vmem, size = 0x9000, scoped, tag = 'internal scratch']
  %s0 = inlined_call_operand.vmem [shape: bf16[2,8,8,128], index: 0, kind: input, shape index: {}]
  %s1 = inlined_call_operand.vmem [shape: bf16[2,8,8,128], index: 1, kind: input, shape index: {}]
  %s2 = inlined_call_operand.vmem [shape: f32[1,128], index: 2, kind: input, shape index: {}]
  %s3 = inlined_call_operand.vmem [shape: f32[1,128], index: 3, kind: input, shape index: {}]
  %s4 = inlined_call_operand.vmem [shape: f32[1,128], index: 4, kind: input, shape index: {}]
  %s5 = inlined_call_operand.vmem [shape: f32[1,128], index: 5, kind: input, shape index: {}]
  %s6 = inlined_call_operand.vmem [shape: bf16[2,8,8,128], index: 6, kind: output, shape index: {}]
  %s7 = sld [smem:[#allocation0]]
  $region57: #{residual_block_forward.5} parent=0
    _
  %s9 = ssub.s32 1, %s7
  %s10 = scalar_select 0, %s9, %s7
  loop: start=0, step=1, limit=4
  $region2: #{residual_block_forward.5} parent=0 // loop_pre_header
    _
  $region3: #{residual_block_forward.5} parent=0 // loop_header
    %s12 = sphi 0, %s16
    %p13 = scmp.ge.s32.totalorder %s12, 4
    %s22 = sphi 0, %s24
    %s25 = sphi 0, %s22
    %s26 = sphi 0, %s25
    %s42 = sphi 0, %s26
    %s48 = sphi 0, %s50
    %s51 = sphi 0, %s48
    %s52 = sphi 0, %s51
    %s68 = sphi 0, %s52
    %s72 = sphi 0, %s72
    %s74 = sphi 0, %s72
    %s75 = sphi 0, %s74
    %s89 = sphi 0, %s75
    %s93 = sphi 0, %s93
    %s95 = sphi 0, %s93
    %s96 = sphi 0, %s95
    %s110 = sphi 0, %s96
    %s114 = sphi 0, %s114
    %s116 = sphi 0, %s114
    %s117 = sphi 0, %s116
    %s131 = sphi 0, %s117
    %s135 = sphi 0, %s135
    %s137 = sphi 0, %s135
    %s138 = sphi 0, %s137
    %s152 = sphi 0, %s138
    %s158 = sphi 0, %s160
    %s161 = sphi 0, %s158
    %s162 = sphi 0, %s161
    %s178 = sphi 0, %s162
  $region4: #{residual_block_forward.5} parent=0 // loop_header_branch
    %15 = sbr.rel (%p13) target = $region8
  $region5: #{residual_block_forward.5} parent=0 // loop_body
    %s17 = ssub.s32 %s12, 1
    %s18 = ssub.s32 %s12, 2
    %s19 = sadd.s32 %s12, 1
    %s20 = ssub.s32 %s12, %s19
    %p21 = scmp.eq.s32.totalorder %s20, 0
    %s23 = sadd.s32 %s22, 1
    %s24 = scalar_select %p21, %s22, %s23
    %p27 = pneg %p21
    %p28 = scmp.eq.s32.totalorder %s12, 1
    %p29 = por %p27, %p28
    %p30 = scmp.ne.s32.totalorder %s22, %s25
    %p31 = scmp.eq.s32.totalorder %s12, 0
    %p32 = por %p30, %p31
    %p33 = scmp.ne.s32.totalorder %s22, %s25
    %p34 = scmp.eq.s32.totalorder %s17, 1
    %p35 = por %p33, %p34
    %p36 = scmp.ne.s32.totalorder %s25, %s26
    %p37 = scmp.eq.s32.totalorder %s17, 0
    %p38 = por %p36, %p37
    %p39 = scmp.ne.s32.totalorder %s25, %s26
    %p40 = scmp.eq.s32.totalorder %s18, 1
    %p41 = por %p39, %p40
    %p43 = scmp.ne.s32.totalorder %s26, %s42
    %p44 = scmp.eq.s32.totalorder %s18, 0
    %p45 = por %p43, %p44
    %s46 = ssub.s32 %s12, %s19
    %p47 = scmp.eq.s32.totalorder %s46, 0
    %s49 = sadd.s32 %s48, 1
    %s50 = scalar_select %p47, %s48, %s49
    %p53 = pneg %p47
    %p54 = scmp.eq.s32.totalorder %s12, 1
    %p55 = por %p53, %p54
    %p56 = scmp.ne.s32.totalorder %s48, %s51
    %p57 = scmp.eq.s32.totalorder %s12, 0
    %p58 = por %p56, %p57
    %p59 = scmp.ne.s32.totalorder %s48, %s51
    %p60 = scmp.eq.s32.totalorder %s17, 1
    %p61 = por %p59, %p60
    %p62 = scmp.ne.s32.totalorder %s51, %s52
    %p63 = scmp.eq.s32.totalorder %s17, 0
    %p64 = por %p62, %p63
    %p65 = scmp.ne.s32.totalorder %s51, %s52
    %p66 = scmp.eq.s32.totalorder %s18, 1
    %p67 = por %p65, %p66
    %p69 = scmp.ne.s32.totalorder %s52, %s68
    %p70 = scmp.eq.s32.totalorder %s18, 0
    %p71 = por %p69, %p70
    %s73 = sadd.s32 %s72, 1
    %p76 = scmp.eq.s32.totalorder %s12, 1
    %p77 = scmp.ne.s32.totalorder %s72, %s74
    %p78 = scmp.eq.s32.totalorder %s12, 0
    %p79 = por %p77, %p78
    %p80 = scmp.ne.s32.totalorder %s72, %s74
    %p81 = scmp.eq.s32.totalorder %s17, 1
    %p82 = por %p80, %p81
    %p83 = scmp.ne.s32.totalorder %s74, %s75
    %p84 = scmp.eq.s32.totalorder %s17, 0
    %p85 = por %p83, %p84
    %p86 = scmp.ne.s32.totalorder %s74, %s75
    %p87 = scmp.eq.s32.totalorder %s18, 1
    %p88 = por %p86, %p87
    %p90 = scmp.ne.s32.totalorder %s75, %s89
    %p91 = scmp.eq.s32.totalorder %s18, 0
    %p92 = por %p90, %p91
    %s94 = sadd.s32 %s93, 1
    %p97 = scmp.eq.s32.totalorder %s12, 1
    %p98 = scmp.ne.s32.totalorder %s93, %s95
    %p99 = scmp.eq.s32.totalorder %s12, 0
    %p100 = por %p98, %p99
    %p101 = scmp.ne.s32.totalorder %s93, %s95
    %p102 = scmp.eq.s32.totalorder %s17, 1
    %p103 = por %p101, %p102
    %p104 = scmp.ne.s32.totalorder %s95, %s96
    %p105 = scmp.eq.s32.totalorder %s17, 0
    %p106 = por %p104, %p105
    %p107 = scmp.ne.s32.totalorder %s95, %s96
    %p108 = scmp.eq.s32.totalorder %s18, 1
    %p109 = por %p107, %p108
    %p111 = scmp.ne.s32.totalorder %s96, %s110
    %p112 = scmp.eq.s32.totalorder %s18, 0
    %p113 = por %p111, %p112
    %s115 = sadd.s32 %s114, 1
    %p118 = scmp.eq.s32.totalorder %s12, 1
    %p119 = scmp.ne.s32.totalorder %s114, %s116
    %p120 = scmp.eq.s32.totalorder %s12, 0
    %p121 = por %p119, %p120
    %p122 = scmp.ne.s32.totalorder %s114, %s116
    %p123 = scmp.eq.s32.totalorder %s17, 1
    %p124 = por %p122, %p123
    %p125 = scmp.ne.s32.totalorder %s116, %s117
    %p126 = scmp.eq.s32.totalorder %s17, 0
    %p127 = por %p125, %p126
    %p128 = scmp.ne.s32.totalorder %s116, %s117
    %p129 = scmp.eq.s32.totalorder %s18, 1
    %p130 = por %p128, %p129
    %p132 = scmp.ne.s32.totalorder %s117, %s131
    %p133 = scmp.eq.s32.totalorder %s18, 0
    %p134 = por %p132, %p133
    %s136 = sadd.s32 %s135, 1
    %p139 = scmp.eq.s32.totalorder %s12, 1
    %p140 = scmp.ne.s32.totalorder %s135, %s137
    %p141 = scmp.eq.s32.totalorder %s12, 0
    %p142 = por %p140, %p141
    %p143 = scmp.ne.s32.totalorder %s135, %s137
    %p144 = scmp.eq.s32.totalorder %s17, 1
    %p145 = por %p143, %p144
    %p146 = scmp.ne.s32.totalorder %s137, %s138
    %p147 = scmp.eq.s32.totalorder %s17, 0
    %p148 = por %p146, %p147
    %p149 = scmp.ne.s32.totalorder %s137, %s138
    %p150 = scmp.eq.s32.totalorder %s18, 1
    %p151 = por %p149, %p150
    %p153 = scmp.ne.s32.totalorder %s138, %s152
    %p154 = scmp.eq.s32.totalorder %s18, 0
    %p155 = por %p153, %p154
    %s156 = ssub.s32 %s12, %s19
    %p157 = scmp.eq.s32.totalorder %s156, 0
    %s159 = sadd.s32 %s158, 1
    %s160 = scalar_select %p157, %s158, %s159
    %p163 = pneg %p157
    %p164 = scmp.eq.s32.totalorder %s12, 1
    %p165 = por %p163, %p164
    %p166 = scmp.ne.s32.totalorder %s158, %s161
    %p167 = scmp.eq.s32.totalorder %s12, 0
    %p168 = por %p166, %p167
    %p169 = scmp.ne.s32.totalorder %s158, %s161
    %p170 = scmp.eq.s32.totalorder %s17, 1
    %p171 = por %p169, %p170
    %p172 = scmp.ne.s32.totalorder %s161, %s162
    %p173 = scmp.eq.s32.totalorder %s17, 0
    %p174 = por %p172, %p173
    %p175 = scmp.ne.s32.totalorder %s161, %s162
    %p176 = scmp.eq.s32.totalorder %s18, 1
    %p177 = por %p175, %p176
    %p179 = scmp.ne.s32.totalorder %s162, %s178
    %p180 = scmp.eq.s32.totalorder %s18, 0
    %p181 = por %p179, %p180
    %p182 = scmp.le.s32.totalorder 1, %s12
    %p183 = scmp.lt.s32.totalorder %s12, 3
    %p184 = pnand %p182, %p183
    %p185 = pneg %p184
    // Predicated region
    $region9: #{residual_block_forward.5} parent=5 // pred_check
      _
    $region10: #{residual_block_forward.5} parent=5 // pred_check_branch
      %187 = sbr.rel (%p184) target = $region12
    $region11: #{residual_block_forward.5} parent=5 // pred_region
      %s188 = ssub.s32 %s12, 1
      // Predicated region
      $region13: #{residual_block_forward.5} parent=11 // pred_check
        %p189 = pneg %p85
      $region14: #{residual_block_forward.5} parent=11 // pred_check_branch
        %191 = sbr.rel (%p189) target = $region16
      $region15: #{residual_block_forward.5} parent=11 // pred_region
        _
      $region16: #{residual_block_forward.5} parent=11 // pred_fallthru
        _
      // Predicated region
      $region17: #{residual_block_forward.5} parent=11 // pred_check
        %p192 = pneg %p106
      $region18: #{residual_block_forward.5} parent=11 // pred_check_branch
        %194 = sbr.rel (%p192) target = $region20
      $region19: #{residual_block_forward.5} parent=11 // pred_region
        _
      $region20: #{residual_block_forward.5} parent=11 // pred_fallthru
        _
      // Predicated region
      $region21: #{residual_block_forward.5} parent=11 // pred_check
        %p195 = pneg %p127
      $region22: #{residual_block_forward.5} parent=11 // pred_check_branch
        %197 = sbr.rel (%p195) target = $region24
      $region23: #{residual_block_forward.5} parent=11 // pred_region
        _
      $region24: #{residual_block_forward.5} parent=11 // pred_fallthru
        _
      // Predicated region
      $region25: #{residual_block_forward.5} parent=11 // pred_check
        %p198 = pneg %p148
      $region26: #{residual_block_forward.5} parent=11 // pred_check_branch
        %200 = sbr.rel (%p198) target = $region28
      $region27: #{residual_block_forward.5} parent=11 // pred_region
        _
      $region28: #{residual_block_forward.5} parent=11 // pred_fallthru
        _
    $region12: #{residual_block_forward.5} parent=5 // pred_fallthru
      _
    %p201 = scmp.lt.s32.totalorder %s12, 2
    // Predicated region
    $region29: #{residual_block_forward.5} parent=5 // pred_check
      %p202 = pneg %p201
    $region30: #{residual_block_forward.5} parent=5 // pred_check_branch
      %204 = sbr.rel (%p202) target = $region32
    $region31: #{residual_block_forward.5} parent=5 // pred_region
      // Predicated region
      $region33: #{residual_block_forward.5} parent=31 // pred_check
        %p205 = pneg %p32
      $region34: #{residual_block_forward.5} parent=31 // pred_check_branch
        %207 = sbr.rel (%p205) target = $region36
      $region35: #{residual_block_forward.5} parent=31 // pred_region
        %p208 = scmp.lt.s32.totalorder %s12, 1
        %s209 = scalar_select %p208, %s12, 1
        %s210 = smul.addr %s209, 8
        %s211 = smul.addr %s210, 4
        %s212 = scalar_lea.vmem %s0, %s211
      $region36: #{residual_block_forward.5} parent=31 // pred_fallthru
        _
      // Predicated region
      $region37: #{residual_block_forward.5} parent=31 // pred_check
        %p213 = pneg %p58
      $region38: #{residual_block_forward.5} parent=31 // pred_check_branch
        %215 = sbr.rel (%p213) target = $region40
      $region39: #{residual_block_forward.5} parent=31 // pred_region
        %p216 = scmp.lt.s32.totalorder %s12, 1
        %s217 = scalar_select %p216, %s12, 1
        %s218 = smul.addr %s217, 8
        %s219 = smul.addr %s218, 4
        %s220 = scalar_lea.vmem %s1, %s219
      $region40: #{residual_block_forward.5} parent=31 // pred_fallthru
        _
    $region32: #{residual_block_forward.5} parent=5 // pred_fallthru
      _
    %p221 = scmp.le.s32.totalorder 1, %s12
    %p222 = scmp.lt.s32.totalorder %s12, 3
    %p223 = pnand %p221, %p222
    %p224 = pneg %p223
    // Predicated region
    $region41: #{residual_block_forward.5} parent=5 // pred_check
      _
    $region42: #{residual_block_forward.5} parent=5 // pred_check_branch
      %226 = sbr.rel (%p223) target = $region44
    $region43: #{residual_block_forward.5} parent=5 // pred_region
      %s227 = ssub.s32 %s12, 1
      %p228 = scmp.lt.s32.totalorder %s17, 1
      %s229 = scalar_select %p228, %s17, 1
      %s230 = smul.addr %s229, 8
      %s231 = smul.addr %s230, 4
      %s232 = scalar_lea.vmem %s0, %s231
      %p233 = pneg %p38
      %p234 = pneg %p35
      %p235 = scmp.lt.s32.totalorder %s17, 1
      %s236 = scalar_select %p235, %s17, 1
      %s237 = smul.addr %s236, 8
      %s238 = smul.addr %s237, 4
      %s239 = scalar_lea.vmem %s1, %s238
      %p240 = pneg %p64
      %p241 = pneg %p61
      %p242 = pneg %p85
      %p243 = pneg %p82
      %p244 = pneg %p106
      %p245 = pneg %p103
      %p246 = pneg %p127
      %p247 = pneg %p124
      %p248 = pneg %p148
      %p249 = pneg %p145
      %p250 = pneg %p174
      %p251 = pneg %p171
      %p252 = scmp.lt.s32.totalorder %s17, 1
      %s253 = scalar_select %p252, %s17, 1
      %s254 = smul.addr %s253, 8
      %s255 = smul.addr %s254, 4
      %s256 = scalar_lea.vmem %s6, %s255
      %p257 = scmp.lt.s32.totalorder %s17, 1
      %s258 = scalar_select %p257, %s17, 1
      %s259 = smul.addr %s258, 8
      %s260 = smul.addr %s259, 4
      %s261 = scalar_lea.vmem %s0, %s260
      %p262 = scmp.lt.s32.totalorder %s17, 1
      %s263 = scalar_select %p262, %s17, 1
      %s264 = smul.addr %s263, 8
      %s265 = smul.addr %s264, 4
      %s266 = scalar_lea.vmem %s1, %s265
      %p267 = scmp.lt.s32.totalorder %s17, 1
      %s268 = scalar_select %p267, %s17, 1
      %s269 = smul.addr %s268, 8
      %s270 = smul.addr %s269, 4
      %s271 = scalar_lea.vmem %s6, %s270
      %v272 = vld [vmem:[%s261] sm:$0xf]
      %v273 = vld [vmem:[%s261 + $0x4] sm:$0xf]
      %v274 = vld [vmem:[%s261 + $0x8] sm:$0xf]
      %v275 = vld [vmem:[%s261 + $0xc] sm:$0xf]
      %v276 = vld [vmem:[%s261 + $0x10] sm:$0xf]
      %v277 = vld [vmem:[%s261 + $0x14] sm:$0xf]
      %v278 = vld [vmem:[%s261 + $0x18] sm:$0xf]
      %v279 = vld [vmem:[%s261 + $0x1c] sm:$0xf]
      %v280 = vunpack.c.l.bf16 %v272
      %v281 = vunpack.c.l.bf16 %v273
      %v282 = vunpack.c.l.bf16 %v274
      %v283 = vunpack.c.l.bf16 %v275
      %v284 = vunpack.c.l.bf16 %v276
      %v285 = vunpack.c.l.bf16 %v277
      %v286 = vunpack.c.l.bf16 %v278
      %v287 = vunpack.c.l.bf16 %v279
      %v288 = vld [vmem:[%s2] sm:$0x1]
      %v290 = vperm.slane %v288, 0
      %v292 = vmul.f32 %v280, %v290
      %v293 = vmul.f32 %v281, %v290
      %v294 = vmul.f32 %v282, %v290
      %v295 = vmul.f32 %v283, %v290
      %v296 = vmul.f32 %v284, %v290
      %v297 = vmul.f32 %v285, %v290
      %v298 = vmul.f32 %v286, %v290
      %v299 = vmul.f32 %v287, %v290
      %v300 = vld [vmem:[%s3] sm:$0x1]
      %v302 = vperm.slane %v300, 0
      %v304 = vadd.f32 %v292, %v302
      %v305 = vadd.f32 %v293, %v302
      %v306 = vadd.f32 %v294, %v302
      %v307 = vadd.f32 %v295, %v302
      %v308 = vadd.f32 %v296, %v302
      %v309 = vadd.f32 %v297, %v302
      %v310 = vadd.f32 %v298, %v302
      %v311 = vadd.f32 %v299, %v302
      %v312 = vld [vmem:[%s266] sm:$0xf]
      %v313 = vld [vmem:[%s266 + $0x4] sm:$0xf]
      %v314 = vld [vmem:[%s266 + $0x8] sm:$0xf]
      %v315 = vld [vmem:[%s266 + $0xc] sm:$0xf]
      %v316 = vld [vmem:[%s266 + $0x10] sm:$0xf]
      %v317 = vld [vmem:[%s266 + $0x14] sm:$0xf]
      %v318 = vld [vmem:[%s266 + $0x18] sm:$0xf]
      %v319 = vld [vmem:[%s266 + $0x1c] sm:$0xf]
      %v320 = vunpack.c.l.bf16 %v312
      %v321 = vunpack.c.l.bf16 %v313
      %v322 = vunpack.c.l.bf16 %v314
      %v323 = vunpack.c.l.bf16 %v315
      %v324 = vunpack.c.l.bf16 %v316
      %v325 = vunpack.c.l.bf16 %v317
      %v326 = vunpack.c.l.bf16 %v318
      %v327 = vunpack.c.l.bf16 %v319
      %v328 = vld [vmem:[%s4] sm:$0x1]
      %v330 = vperm.slane %v328, 0
      %v332 = vmul.f32 %v320, %v330
      %v333 = vmul.f32 %v321, %v330
      %v334 = vmul.f32 %v322, %v330
      %v335 = vmul.f32 %v323, %v330
      %v336 = vmul.f32 %v324, %v330
      %v337 = vmul.f32 %v325, %v330
      %v338 = vmul.f32 %v326, %v330
      %v339 = vmul.f32 %v327, %v330
      %v340 = vld [vmem:[%s5] sm:$0x1]
      %v342 = vperm.slane %v340, 0
      %v344 = vadd.f32 %v332, %v342
      %v345 = vadd.f32 %v333, %v342
      %v346 = vadd.f32 %v334, %v342
      %v347 = vadd.f32 %v335, %v342
      %v348 = vadd.f32 %v336, %v342
      %v349 = vadd.f32 %v337, %v342
      %v350 = vadd.f32 %v338, %v342
      %v351 = vadd.f32 %v339, %v342
      %v352 = vadd.f32 %v304, %v344
      %v353 = vadd.f32 %v305, %v345
      %v354 = vadd.f32 %v306, %v346
      %v355 = vadd.f32 %v307, %v347
      %v356 = vadd.f32 %v308, %v348
      %v357 = vadd.f32 %v309, %v349
      %v358 = vadd.f32 %v310, %v350
      %v359 = vadd.f32 %v311, %v351
      %v360 = vmax.f32 %v352, 0.0
      %v361 = vmax.f32 %v353, 0.0
      %v362 = vmax.f32 %v354, 0.0
      %v363 = vmax.f32 %v355, 0.0
      %v364 = vmax.f32 %v356, 0.0
      %v365 = vmax.f32 %v357, 0.0
      %v366 = vmax.f32 %v358, 0.0
      %v367 = vmax.f32 %v359, 0.0
      %v368 = vpack.c.bf16 %v360, %v360
      %v369 = vpack.c.bf16 %v361, %v361
      %v370 = vpack.c.bf16 %v362, %v362
      %v371 = vpack.c.bf16 %v363, %v363
      %v372 = vpack.c.bf16 %v364, %v364
      %v373 = vpack.c.bf16 %v365, %v365
      %v374 = vpack.c.bf16 %v366, %v366
      %v375 = vpack.c.bf16 %v367, %v367
      %376 = vst [vmem:[%s271] sm:$0xf] %v368
      %377 = vst [vmem:[%s271 + $0x4] sm:$0xf] %v369
      %378 = vst [vmem:[%s271 + $0x8] sm:$0xf] %v370
      %379 = vst [vmem:[%s271 + $0xc] sm:$0xf] %v371
      %380 = vst [vmem:[%s271 + $0x10] sm:$0xf] %v372
      %381 = vst [vmem:[%s271 + $0x14] sm:$0xf] %v373
      %382 = vst [vmem:[%s271 + $0x18] sm:$0xf] %v374
      %383 = vst [vmem:[%s271 + $0x1c] sm:$0xf] %v375
      %p384 = scmp.lt.s32.totalorder %s17, 1
      %s385 = scalar_select %p384, %s17, 1
      %s386 = smul.addr %s385, 8
      %s387 = smul.addr %s386, 4
      %s388 = scalar_lea.vmem %s6, %s387
      // Predicated region
      $region45: #{residual_block_forward.5} parent=43 // pred_check
        %p389 = pneg %p171
      $region46: #{residual_block_forward.5} parent=43 // pred_check_branch
        %391 = sbr.rel (%p389) target = $region48
      $region47: #{residual_block_forward.5} parent=43 // pred_region
        _
      $region48: #{residual_block_forward.5} parent=43 // pred_fallthru
        _
    $region44: #{residual_block_forward.5} parent=5 // pred_fallthru
      _
    %p392 = scmp.le.s32.totalorder 2, %s12
    // Predicated region
    $region49: #{residual_block_forward.5} parent=5 // pred_check
      %p393 = pneg %p392
    $region50: #{residual_block_forward.5} parent=5 // pred_check_branch
      %395 = sbr.rel (%p393) target = $region52
    $region51: #{residual_block_forward.5} parent=5 // pred_region
      %s396 = ssub.s32 %s12, 2
      // Predicated region
      $region53: #{residual_block_forward.5} parent=51 // pred_check
        %p397 = pneg %p177
      $region54: #{residual_block_forward.5} parent=51 // pred_check_branch
        %399 = sbr.rel (%p397) target = $region56
      $region55: #{residual_block_forward.5} parent=51 // pred_region
        %p400 = scmp.lt.s32.totalorder %s18, 1
        %s401 = scalar_select %p400, %s18, 1
        %s402 = smul.addr %s401, 8
        %s403 = smul.addr %s402, 4
        %s404 = scalar_lea.vmem %s6, %s403
      $region56: #{residual_block_forward.5} parent=51 // pred_fallthru
        _
    $region52: #{residual_block_forward.5} parent=5 // pred_fallthru
      _
  $region6: #{residual_block_forward.5} parent=0 // loop_footer
    %s16 = sadd.s32 1, %s12
  $region7: #{residual_block_forward.5} parent=0 // loop_footer_branch
    %11 = sbr.rel target = $region3
  $region8: #{residual_block_forward.5} parent=0 // loop_exit
    _

// kernel: residual_block_forward.4
$region0: #{residual_block_forward.4}
  #allocation0 [shape = 'u32[]', space=smem, size = 0x4, offset = 0x4, fixed_abs, tag = 'smem constant byte address 0x4 - core index']
  #allocation1 [shape = 'u32[72,128]{1,0:T(1,128)}', space=vmem, size = 0x9000, scoped, tag = 'internal scratch']
  %s0 = inlined_call_operand.vmem [shape: bf16[2,8,8,128], index: 0, kind: input, shape index: {}]
  %s1 = inlined_call_operand.vmem [shape: f32[1,128], index: 1, kind: input, shape index: {}]
  %s2 = inlined_call_operand.vmem [shape: f32[1,128], index: 2, kind: input, shape index: {}]
  %s3 = inlined_call_operand.vmem [shape: bf16[9,128,128], index: 3, kind: input, shape index: {}]
  %s4 = inlined_call_operand.vmem [shape: bf16[2,8,8,128], index: 4, kind: output, shape index: {0}]
  %s5 = inlined_call_operand.vmem [shape: f32[2,2,128], index: 5, kind: output, shape index: {1}]
  %6 = xla_tuple %s4, %s5
  %s7 = sld [smem:[#allocation0]]
  $region57: #{residual_block_forward.4} parent=0
    _
  %s9 = ssub.s32 1, %s7
  %s10 = scalar_select 0, %s9, %s7
  loop: start=0, step=1, limit=4
  $region2: #{residual_block_forward.4} parent=0 // loop_pre_header
    _
  $region3: #{residual_block_forward.4} parent=0 // loop_header
    %s12 = sphi 0, %s16
    %p13 = scmp.ge.s32.totalorder %s12, 4
    %s22 = sphi 0, %s24
    %s25 = sphi 0, %s22
    %s26 = sphi 0, %s25
    %s42 = sphi 0, %s26
    %s46 = sphi 0, %s46
    %s48 = sphi 0, %s46
    %s49 = sphi 0, %s48
    %s63 = sphi 0, %s49
    %s67 = sphi 0, %s67
    %s69 = sphi 0, %s67
    %s70 = sphi 0, %s69
    %s84 = sphi 0, %s70
    %s88 = sphi 0, %s88
    %s90 = sphi 0, %s88
    %s91 = sphi 0, %s90
    %s105 = sphi 0, %s91
    %s111 = sphi 0, %s113
    %s114 = sphi 0, %s111
    %s115 = sphi 0, %s114
    %s131 = sphi 0, %s115
    %s137 = sphi 0, %s139
    %s140 = sphi 0, %s137
    %s141 = sphi 0, %s140
    %s157 = sphi 0, %s141
  $region4: #{residual_block_forward.4} parent=0 // loop_header_branch
    %15 = sbr.rel (%p13) target = $region8
  $region5: #{residual_block_forward.4} parent=0 // loop_body
    %s17 = ssub.s32 %s12, 1
    %s18 = ssub.s32 %s12, 2
    %s19 = sadd.s32 %s12, 1
    %s20 = ssub.s32 %s12, %s19
    %p21 = scmp.eq.s32.totalorder %s20, 0
    %s23 = sadd.s32 %s22, 1
    %s24 = scalar_select %p21, %s22, %s23
    %p27 = pneg %p21
    %p28 = scmp.eq.s32.totalorder %s12, 1
    %p29 = por %p27, %p28
    %p30 = scmp.ne.s32.totalorder %s22, %s25
    %p31 = scmp.eq.s32.totalorder %s12, 0
    %p32 = por %p30, %p31
    %p33 = scmp.ne.s32.totalorder %s22, %s25
    %p34 = scmp.eq.s32.totalorder %s17, 1
    %p35 = por %p33, %p34
    %p36 = scmp.ne.s32.totalorder %s25, %s26
    %p37 = scmp.eq.s32.totalorder %s17, 0
    %p38 = por %p36, %p37
    %p39 = scmp.ne.s32.totalorder %s25, %s26
    %p40 = scmp.eq.s32.totalorder %s18, 1
    %p41 = por %p39, %p40
    %p43 = scmp.ne.s32.totalorder %s26, %s42
    %p44 = scmp.eq.s32.totalorder %s18, 0
    %p45 = por %p43, %p44
    %s47 = sadd.s32 %s46, 1
    %p50 = scmp.eq.s32.totalorder %s12, 1
    %p51 = scmp.ne.s32.totalorder %s46, %s48
    %p52 = scmp.eq.s32.totalorder %s12, 0
    %p53 = por %p51, %p52
    %p54 = scmp.ne.s32.totalorder %s46, %s48
    %p55 = scmp.eq.s32.totalorder %s17, 1
    %p56 = por %p54, %p55
    %p57 = scmp.ne.s32.totalorder %s48, %s49
    %p58 = scmp.eq.s32.totalorder %s17, 0
    %p59 = por %p57, %p58
    %p60 = scmp.ne.s32.totalorder %s48, %s49
    %p61 = scmp.eq.s32.totalorder %s18, 1
    %p62 = por %p60, %p61
    %p64 = scmp.ne.s32.totalorder %s49, %s63
    %p65 = scmp.eq.s32.totalorder %s18, 0
    %p66 = por %p64, %p65
    %s68 = sadd.s32 %s67, 1
    %p71 = scmp.eq.s32.totalorder %s12, 1
    %p72 = scmp.ne.s32.totalorder %s67, %s69
    %p73 = scmp.eq.s32.totalorder %s12, 0
    %p74 = por %p72, %p73
    %p75 = scmp.ne.s32.totalorder %s67, %s69
    %p76 = scmp.eq.s32.totalorder %s17, 1
    %p77 = por %p75, %p76
    %p78 = scmp.ne.s32.totalorder %s69, %s70
    %p79 = scmp.eq.s32.totalorder %s17, 0
    %p80 = por %p78, %p79
    %p81 = scmp.ne.s32.totalorder %s69, %s70
    %p82 = scmp.eq.s32.totalorder %s18, 1
    %p83 = por %p81, %p82
    %p85 = scmp.ne.s32.totalorder %s70, %s84
    %p86 = scmp.eq.s32.totalorder %s18, 0
    %p87 = por %p85, %p86
    %s89 = sadd.s32 %s88, 1
    %p92 = scmp.eq.s32.totalorder %s12, 1
    %p93 = scmp.ne.s32.totalorder %s88, %s90
    %p94 = scmp.eq.s32.totalorder %s12, 0
    %p95 = por %p93, %p94
    %p96 = scmp.ne.s32.totalorder %s88, %s90
    %p97 = scmp.eq.s32.totalorder %s17, 1
    %p98 = por %p96, %p97
    %p99 = scmp.ne.s32.totalorder %s90, %s91
    %p100 = scmp.eq.s32.totalorder %s17, 0
    %p101 = por %p99, %p100
    %p102 = scmp.ne.s32.totalorder %s90, %s91
    %p103 = scmp.eq.s32.totalorder %s18, 1
    %p104 = por %p102, %p103
    %p106 = scmp.ne.s32.totalorder %s91, %s105
    %p107 = scmp.eq.s32.totalorder %s18, 0
    %p108 = por %p106, %p107
    %s109 = ssub.s32 %s12, %s19
    %p110 = scmp.eq.s32.totalorder %s109, 0
    %s112 = sadd.s32 %s111, 1
    %s113 = scalar_select %p110, %s111, %s112
    %p116 = pneg %p110
    %p117 = scmp.eq.s32.totalorder %s12, 1
    %p118 = por %p116, %p117
    %p119 = scmp.ne.s32.totalorder %s111, %s114
    %p120 = scmp.eq.s32.totalorder %s12, 0
    %p121 = por %p119, %p120
    %p122 = scmp.ne.s32.totalorder %s111, %s114
    %p123 = scmp.eq.s32.totalorder %s17, 1
    %p124 = por %p122, %p123
    %p125 = scmp.ne.s32.totalorder %s114, %s115
    %p126 = scmp.eq.s32.totalorder %s17, 0
    %p127 = por %p125, %p126
    %p128 = scmp.ne.s32.totalorder %s114, %s115
    %p129 = scmp.eq.s32.totalorder %s18, 1
    %p130 = por %p128, %p129
    %p132 = scmp.ne.s32.totalorder %s115, %s131
    %p133 = scmp.eq.s32.totalorder %s18, 0
    %p134 = por %p132, %p133
    %s135 = ssub.s32 %s12, %s19
    %p136 = scmp.eq.s32.totalorder %s135, 0
    %s138 = sadd.s32 %s137, 1
    %s139 = scalar_select %p136, %s137, %s138
    %p142 = pneg %p136
    %p143 = scmp.eq.s32.totalorder %s12, 1
    %p144 = por %p142, %p143
    %p145 = scmp.ne.s32.totalorder %s137, %s140
    %p146 = scmp.eq.s32.totalorder %s12, 0
    %p147 = por %p145, %p146
    %p148 = scmp.ne.s32.totalorder %s137, %s140
    %p149 = scmp.eq.s32.totalorder %s17, 1
    %p150 = por %p148, %p149
    %p151 = scmp.ne.s32.totalorder %s140, %s141
    %p152 = scmp.eq.s32.totalorder %s17, 0
    %p153 = por %p151, %p152
    %p154 = scmp.ne.s32.totalorder %s140, %s141
    %p155 = scmp.eq.s32.totalorder %s18, 1
    %p156 = por %p154, %p155
    %p158 = scmp.ne.s32.totalorder %s141, %s157
    %p159 = scmp.eq.s32.totalorder %s18, 0
    %p160 = por %p158, %p159
    %p161 = scmp.le.s32.totalorder 1, %s12
    %p162 = scmp.lt.s32.totalorder %s12, 3
    %p163 = pnand %p161, %p162
    %p164 = pneg %p163
    // Predicated region
    $region9: #{residual_block_forward.4} parent=5 // pred_check
      _
    $region10: #{residual_block_forward.4} parent=5 // pred_check_branch
      %166 = sbr.rel (%p163) target = $region12
    $region11: #{residual_block_forward.4} parent=5 // pred_region
      %s167 = ssub.s32 %s12, 1
      // Predicated region
      $region13: #{residual_block_forward.4} parent=11 // pred_check
        %p168 = pneg %p59
      $region14: #{residual_block_forward.4} parent=11 // pred_check_branch
        %170 = sbr.rel (%p168) target = $region16
      $region15: #{residual_block_forward.4} parent=11 // pred_region
        _
      $region16: #{residual_block_forward.4} parent=11 // pred_fallthru
        _
      // Predicated region
      $region17: #{residual_block_forward.4} parent=11 // pred_check
        %p171 = pneg %p80
      $region18: #{residual_block_forward.4} parent=11 // pred_check_branch
        %173 = sbr.rel (%p171) target = $region20
      $region19: #{residual_block_forward.4} parent=11 // pred_region
        _
      $region20: #{residual_block_forward.4} parent=11 // pred_fallthru
        _
      // Predicated region
      $region21: #{residual_block_forward.4} parent=11 // pred_check
        %p174 = pneg %p101
      $region22: #{residual_block_forward.4} parent=11 // pred_check_branch
        %176 = sbr.rel (%p174) target = $region24
      $region23: #{residual_block_forward.4} parent=11 // pred_region
        _
      $region24: #{residual_block_forward.4} parent=11 // pred_fallthru
        _
    $region12: #{residual_block_forward.4} parent=5 // pred_fallthru
      _
    %p177 = scmp.lt.s32.totalorder %s12, 2
    // Predicated region
    $region25: #{residual_block_forward.4} parent=5 // pred_check
      %p178 = pneg %p177
    $region26: #{residual_block_forward.4} parent=5 // pred_check_branch
      %180 = sbr.rel (%p178) target = $region28
    $region27: #{residual_block_forward.4} parent=5 // pred_region
      // Predicated region
      $region29: #{residual_block_forward.4} parent=27 // pred_check
        %p181 = pneg %p32
      $region30: #{residual_block_forward.4} parent=27 // pred_check_branch
        %183 = sbr.rel (%p181) target = $region32
      $region31: #{residual_block_forward.4} parent=27 // pred_region
        %p184 = scmp.lt.s32.totalorder %s12, 1
        %s185 = scalar_select %p184, %s12, 1
        %s186 = smul.addr %s185, 8
        %s187 = smul.addr %s186, 4
        %s188 = scalar_lea.vmem %s0, %s187
      $region32: #{residual_block_forward.4} parent=27 // pred_fallthru
        _
    $region28: #{residual_block_forward.4} parent=5 // pred_fallthru
      _
    %p189 = scmp.le.s32.totalorder 1, %s12
    %p190 = scmp.lt.s32.totalorder %s12, 3
    %p191 = pnand %p189, %p190
    %p192 = pneg %p191
    // Predicated region
    $region33: #{residual_block_forward.4} parent=5 // pred_check
      _
    $region34: #{residual_block_forward.4} parent=5 // pred_check_branch
      %194 = sbr.rel (%p191) target = $region36
    $region35: #{residual_block_forward.4} parent=5 // pred_region
      %s195 = ssub.s32 %s12, 1
      %p196 = scmp.lt.s32.totalorder %s17, 1
      %s197 = scalar_select %p196, %s17, 1
      %s198 = smul.addr %s197, 8
      %s199 = smul.addr %s198, 4
      %s200 = scalar_lea.vmem %s0, %s199
      %p201 = pneg %p38
      %p202 = pneg %p35
      %p203 = pneg %p59
      %p204 = pneg %p56
      %p205 = pneg %p80
      %p206 = pneg %p77
      %p207 = pneg %p101
      %p208 = pneg %p98
      %p209 = pneg %p127
      %p210 = pneg %p124
      %p211 = scmp.lt.s32.totalorder %s17, 1
      %s212 = scalar_select %p211, %s17, 1
      %s213 = smul.addr %s212, 8
      %s214 = smul.addr %s213, 4
      %s215 = scalar_lea.vmem %s4, %s214
      %p216 = pneg %p153
      %p217 = pneg %p150
      %p218 = scmp.lt.s32.totalorder %s17, 1
      %s219 = scalar_select %p218, %s17, 1
      %s220 = smul.addr %s219, 2
      %s221 = scalar_lea.vmem %s5, %s220
      %p222 = scmp.lt.s32.totalorder %s17, 1
      %s223 = scalar_select %p222, %s17, 1
      %s224 = smul.addr %s223, 8
      %s225 = smul.addr %s224, 4
      %s226 = scalar_lea.vmem %s0, %s225
      %p227 = scmp.lt.s32.totalorder %s17, 1
      %s228 = scalar_select %p227, %s17, 1
      %s229 = smul.addr %s228, 8
      %s230 = smul.addr %s229, 4
      %s231 = scalar_lea.vmem %s4, %s230
      %p232 = scmp.lt.s32.totalorder %s17, 1
      %s233 = scalar_select %p232, %s17, 1
      %s234 = smul.addr %s233, 2
      %s235 = scalar_lea.vmem %s5, %s234
      %v236 = vld [vmem:[%s226] sm:$0xf]
      %v237 = vld [vmem:[%s226 + $0x4] sm:$0xf]
      %v238 = vld [vmem:[%s226 + $0x8] sm:$0xf]
      %v239 = vld [vmem:[%s226 + $0xc] sm:$0xf]
      %v240 = vld [vmem:[%s226 + $0x10] sm:$0xf]
      %v241 = vld [vmem:[%s226 + $0x14] sm:$0xf]
      %v242 = vld [vmem:[%s226 + $0x18] sm:$0xf]
      %v243 = vld [vmem:[%s226 + $0x1c] sm:$0xf]
      %v244 = vunpack.c.l.bf16 %v236
      %v245 = vunpack.c.l.bf16 %v237
      %v246 = vunpack.c.l.bf16 %v238
      %v247 = vunpack.c.l.bf16 %v239
      %v248 = vunpack.c.l.bf16 %v240
      %v249 = vunpack.c.l.bf16 %v241
      %v250 = vunpack.c.l.bf16 %v242
      %v251 = vunpack.c.l.bf16 %v243
      %v252 = vld [vmem:[%s1] sm:$0x1]
      %v254 = vperm.slane %v252, 0
      %v256 = vmul.f32 %v244, %v254
      %v257 = vmul.f32 %v245, %v254
      %v258 = vmul.f32 %v246, %v254
      %v259 = vmul.f32 %v247, %v254
      %v260 = vmul.f32 %v248, %v254
      %v261 = vmul.f32 %v249, %v254
      %v262 = vmul.f32 %v250, %v254
      %v263 = vmul.f32 %v251, %v254
      %v264 = vld [vmem:[%s2] sm:$0x1]
      %v266 = vperm.slane %v264, 0
      %v268 = vadd.f32 %v256, %v266
      %v269 = vadd.f32 %v257, %v266
      %v270 = vadd.f32 %v258, %v266
      %v271 = vadd.f32 %v259, %v266
      %v272 = vadd.f32 %v260, %v266
      %v273 = vadd.f32 %v261, %v266
      %v274 = vadd.f32 %v262, %v266
      %v275 = vadd.f32 %v263, %v266
      %v276 = vmax.f32 %v268, 0.0
      %v277 = vmax.f32 %v269, 0.0
      %v278 = vmax.f32 %v270, 0.0
      %v279 = vmax.f32 %v271, 0.0
      %v280 = vmax.f32 %v272, 0.0
      %v281 = vmax.f32 %v273, 0.0
      %v282 = vmax.f32 %v274, 0.0
      %v283 = vmax.f32 %v275, 0.0
      %v293 = vrot.slane 0.0, 7
      %v294 = vrot.slane %v276, 7
      %v295 = vrot.slane %v277, 7
      %v296 = vrot.slane %v278, 7
      %v297 = vrot.slane %v279, 7
      %v298 = vrot.slane %v280, 7
      %v299 = vrot.slane %v281, 7
      %v300 = vrot.slane %v282, 7
      %v301 = vrot.slane %v283, 7
      %vm311 = vcmask 1040384
      %v312 = vsel %vm311, 0.0, %v293
      %v313 = vsel %vm311, 0.0, %v294
      %v314 = vsel %vm311, 0.0, %v295
      %v315 = vsel %vm311, 0.0, %v296
      %v316 = vsel %vm311, 0.0, %v297
      %v317 = vsel %vm311, 0.0, %v298
      %v318 = vsel %vm311, 0.0, %v299
      %v319 = vsel %vm311, 0.0, %v300
      %v320 = vsel %vm311, 0.0, %v301
      %v321 = vsel %vm311, %v293, 0.0
      %v322 = vsel %vm311, %v294, 0.0
      %v323 = vsel %vm311, %v295, 0.0
      %v324 = vsel %vm311, %v296, 0.0
      %v325 = vsel %vm311, %v297, 0.0
      %v326 = vsel %vm311, %v298, 0.0
      %v327 = vsel %vm311, %v299, 0.0
      %v328 = vsel %vm311, %v300, 0.0
      %v329 = vsel %vm311, %v301, 0.0
      %v330 = vpack.c.bf16 %v313, %v312
      %v331 = vpack.c.bf16 %v315, %v314
      %v332 = vpack.c.bf16 %v317, %v316
      %v333 = vpack.c.bf16 %v319, %v318
      %v334 = vld [vmem:[%s3] sm:$0xf]
      %v335 = vld [vmem:[%s3 + $0x4] sm:$0xf]
      %v336 = vld [vmem:[%s3 + $0x8] sm:$0xf]
      %v337 = vld [vmem:[%s3 + $0xc] sm:$0xf]
      %v338 = vld [vmem:[%s3 + $0x10] sm:$0xf]
      %v339 = vld [vmem:[%s3 + $0x14] sm:$0xf]
      %v340 = vld [vmem:[%s3 + $0x18] sm:$0xf]
      %v341 = vld [vmem:[%s3 + $0x1c] sm:$0xf]
      %v342 = vld [vmem:[%s3 + $0x20] sm:$0xf]
      %v343 = vld [vmem:[%s3 + $0x24] sm:$0xf]
      %v344 = vld [vmem:[%s3 + $0x28] sm:$0xf]
      %v345 = vld [vmem:[%s3 + $0x2c] sm:$0xf]
      %v346 = vld [vmem:[%s3 + $0x30] sm:$0xf]
      %v347 = vld [vmem:[%s3 + $0x34] sm:$0xf]
      %v348 = vld [vmem:[%s3 + $0x38] sm:$0xf]
      %v349 = vld [vmem:[%s3 + $0x3c] sm:$0xf]
      %vm366 = vcmask 1046528
      %v367 = vrot.slane %v312, 1
      %v368 = vrot.slane %v321, 1
      %v369 = vsel %vm366, %v367, %v368
      %v370 = vrot.slane %v313, 1
      %v371 = vrot.slane %v322, 1
      %v372 = vsel %vm366, %v370, %v371
      %v373 = vrot.slane %v314, 1
      %v374 = vrot.slane %v323, 1
      %v375 = vsel %vm366, %v373, %v374
      %v376 = vrot.slane %v315, 1
      %v377 = vrot.slane %v324, 1
      %v378 = vsel %vm366, %v376, %v377
      %v379 = vrot.slane %v316, 1
      %v380 = vrot.slane %v325, 1
      %v381 = vsel %vm366, %v379, %v380
      %v382 = vrot.slane %v317, 1
      %v383 = vrot.slane %v326, 1
      %v384 = vsel %vm366, %v382, %v383
      %v385 = vrot.slane %v318, 1
      %v386 = vrot.slane %v327, 1
      %v387 = vsel %vm366, %v385, %v386
      %v388 = vrot.slane %v319, 1
      %v389 = vrot.slane %v328, 1
      %v390 = vsel %vm366, %v388, %v389
      %v399 = vpack.c.bf16 %v372, %v369
      %v400 = vpack.c.bf16 %v378, %v375
      %v401 = vpack.c.bf16 %v384, %v381
      %v402 = vpack.c.bf16 %v390, %v387
      %s403 = scalar_lea.vmem %s3, 64
      %v404 = vld [vmem:[%s403] sm:$0xf]
      %v405 = vld [vmem:[%s403 + $0x4] sm:$0xf]
      %v406 = vld [vmem:[%s403 + $0x8] sm:$0xf]
      %v407 = vld [vmem:[%s403 + $0xc] sm:$0xf]
      %v408 = vld [vmem:[%s403 + $0x10] sm:$0xf]
      %v409 = vld [vmem:[%s403 + $0x14] sm:$0xf]
      %v410 = vld [vmem:[%s403 + $0x18] sm:$0xf]
      %v411 = vld [vmem:[%s403 + $0x1c] sm:$0xf]
      %v412 = vld [vmem:[%s403 + $0x20] sm:$0xf]
      %v413 = vld [vmem:[%s403 + $0x24] sm:$0xf]
      %v414 = vld [vmem:[%s403 + $0x28] sm:$0xf]
      %v415 = vld [vmem:[%s403 + $0x2c] sm:$0xf]
      %v416 = vld [vmem:[%s403 + $0x30] sm:$0xf]
      %v417 = vld [vmem:[%s403 + $0x34] sm:$0xf]
      %v418 = vld [vmem:[%s403 + $0x38] sm:$0xf]
      %v419 = vld [vmem:[%s403 + $0x3c] sm:$0xf]
      %v436 = vunpack.c.l.b16 %v404
      %v437 = vunpack.c.l.b16 %v405
      %v438 = vunpack.c.l.b16 %v406
      %v439 = vunpack.c.l.b16 %v407
      %v440 = vunpack.c.l.b16 %v408
      %v441 = vunpack.c.l.b16 %v409
      %v442 = vunpack.c.l.b16 %v410
      %v443 = vunpack.c.l.b16 %v411
      %v444 = vunpack.c.l.b16 %v412
      %v445 = vunpack.c.l.b16 %v413
      %v446 = vunpack.c.l.b16 %v414
      %v447 = vunpack.c.l.b16 %v415
      %v448 = vunpack.c.l.b16 %v416
      %v449 = vunpack.c.l.b16 %v417
      %v450 = vunpack.c.l.b16 %v418
      %v451 = vunpack.c.l.b16 %v419
      %v452 = vpack.c.b16 %v437, %v436
      %v453 = vpack.c.b16 %v439, %v438
      %v454 = vpack.c.b16 %v441, %v440
      %v455 = vpack.c.b16 %v443, %v442
      %v456 = vpack.c.b16 %v445, %v444
      %v457 = vpack.c.b16 %v447, %v446
      %v458 = vpack.c.b16 %v449, %v448
      %v459 = vpack.c.b16 %v451, %v450
      %468 = vmatpush.bf16.msra.mxu0 %v459
      %469 = vmatpush.bf16.msra.mxu0 %v458
      %470 = vmatpush.bf16.msra.mxu0 %v457
      %471 = vmatpush.bf16.msra.mxu0 %v456
      %472 = vmatpush.bf16.msra.mxu0 %v455
      %473 = vmatpush.bf16.msra.mxu0 %v454
      %474 = vmatpush.bf16.msra.mxu0 %v453
      %475 = vmatpush.bf16.msra.mxu0 %v452
      %476 = vmatmul.bf16.gmra.mxu0 %v399
      %v477 = vpop.f32.mrf.mxu0
      %v478 = vadd.f32 0.0, %v477
      %v479 = vpop.f32.mrf.mxu0
      %v480 = vadd.f32 0.0, %v479
      %481 = vmatmul.bf16.gmra.mxu0 %v400
      %v482 = vpop.f32.mrf.mxu0
      %v483 = vadd.f32 0.0, %v482
      %v484 = vpop.f32.mrf.mxu0
      %v485 = vadd.f32 0.0, %v484
      %486 = vmatmul.bf16.gmra.mxu0 %v401
      %v487 = vpop.f32.mrf.mxu0
      %v488 = vadd.f32 0.0, %v487
      %v489 = vpop.f32.mrf.mxu0
      %v490 = vadd.f32 0.0, %v489
      %491 = vmatmul.bf16.gmra.mxu0 %v402
      %v492 = vpop.f32.mrf.mxu0
      %v493 = vadd.f32 0.0, %v492
      %v494 = vpop.f32.mrf.mxu0
      %v495 = vadd.f32 0.0, %v494
      %496 = vdwg.mxu0
      %v513 = vunpack.c.l.b16 %v334
      %v514 = vunpack.c.l.b16 %v335
      %v515 = vunpack.c.l.b16 %v336
      %v516 = vunpack.c.l.b16 %v337
      %v517 = vunpack.c.l.b16 %v338
      %v518 = vunpack.c.l.b16 %v339
      %v519 = vunpack.c.l.b16 %v340
      %v520 = vunpack.c.l.b16 %v341
      %v521 = vunpack.c.l.b16 %v342
      %v522 = vunpack.c.l.b16 %v343
      %v523 = vunpack.c.l.b16 %v344
      %v524 = vunpack.c.l.b16 %v345
      %v525 = vunpack.c.l.b16 %v346
      %v526 = vunpack.c.l.b16 %v347
      %v527 = vunpack.c.l.b16 %v348
      %v528 = vunpack.c.l.b16 %v349
      %v529 = vpack.c.b16 %v514, %v513
      %v530 = vpack.c.b16 %v516, %v515
      %v531 = vpack.c.b16 %v518, %v517
      %v532 = vpack.c.b16 %v520, %v519
      %v533 = vpack.c.b16 %v522, %v521
      %v534 = vpack.c.b16 %v524, %v523
      %v535 = vpack.c.b16 %v526, %v525
      %v536 = vpack.c.b16 %v528, %v527
      %545 = vmatpush.bf16.msra.mxu0 %v536
      %546 = vmatpush.bf16.msra.mxu0 %v535
      %547 = vmatpush.bf16.msra.mxu0 %v534
      %548 = vmatpush.bf16.msra.mxu0 %v533
      %549 = vmatpush.bf16.msra.mxu0 %v532
      %550 = vmatpush.bf16.msra.mxu0 %v531
      %551 = vmatpush.bf16.msra.mxu0 %v530
      %552 = vmatpush.bf16.msra.mxu0 %v529
      %553 = vmatmul.bf16.gmra.mxu0 %v330
      %v554 = vpop.f32.mrf.mxu0
      %v555 = vadd.f32 %v478, %v554
      %v556 = vpop.f32.mrf.mxu0
      %v557 = vadd.f32 %v480, %v556
      %558 = vmatmul.bf16.gmra.mxu0 %v331
      %v559 = vpop.f32.mrf.mxu0
      %v560 = vadd.f32 %v483, %v559
      %v561 = vpop.f32.mrf.mxu0
      %v562 = vadd.f32 %v485, %v561
      %563 = vmatmul.bf16.gmra.mxu0 %v332
      %v564 = vpop.f32.mrf.mxu0
      %v565 = vadd.f32 %v488, %v564
      %v566 = vpop.f32.mrf.mxu0
      %v567 = vadd.f32 %v490, %v566
      %568 = vmatmul.bf16.gmra.mxu0 %v333
      %v569 = vpop.f32.mrf.mxu0
      %v570 = vadd.f32 %v493, %v569
      %v571 = vpop.f32.mrf.mxu0
      %v572 = vadd.f32 %v495, %v571
      %573 = vdwg.mxu0
      %vm574 = vcmask 1045504
      %v575 = vrot.slane %v312, 2
      %v576 = vrot.slane %v321, 2
      %v577 = vsel %vm574, %v575, %v576
      %v578 = vrot.slane %v313, 2
      %v579 = vrot.slane %v322, 2
      %v580 = vsel %vm574, %v578, %v579
      %v581 = vrot.slane %v314, 2
      %v582 = vrot.slane %v323, 2
      %v583 = vsel %vm574, %v581, %v582
      %v584 = vrot.slane %v315, 2
      %v585 = vrot.slane %v324, 2
      %v586 = vsel %vm574, %v584, %v585
      %v587 = vrot.slane %v316, 2
      %v588 = vrot.slane %v325, 2
      %v589 = vsel %vm574, %v587, %v588
      %v590 = vrot.slane %v317, 2
      %v591 = vrot.slane %v326, 2
      %v592 = vsel %vm574, %v590, %v591
      %v593 = vrot.slane %v318, 2
      %v594 = vrot.slane %v327, 2
      %v595 = vsel %vm574, %v593, %v594
      %v596 = vrot.slane %v319, 2
      %v597 = vrot.slane %v328, 2
      %v598 = vsel %vm574, %v596, %v597
      %v607 = vpack.c.bf16 %v580, %v577
      %v608 = vpack.c.bf16 %v586, %v583
      %v609 = vpack.c.bf16 %v592, %v589
      %v610 = vpack.c.bf16 %v598, %v595
      %s611 = scalar_lea.vmem %s3, 128
      %v612 = vld [vmem:[%s611] sm:$0xf]
      %v613 = vld [vmem:[%s611 + $0x4] sm:$0xf]
      %v614 = vld [vmem:[%s611 + $0x8] sm:$0xf]
      %v615 = vld [vmem:[%s611 + $0xc] sm:$0xf]
      %v616 = vld [vmem:[%s611 + $0x10] sm:$0xf]
      %v617 = vld [vmem:[%s611 + $0x14] sm:$0xf]
      %v618 = vld [vmem:[%s611 + $0x18] sm:$0xf]
      %v619 = vld [vmem:[%s611 + $0x1c] sm:$0xf]
      %v620 = vld [vmem:[%s611 + $0x20] sm:$0xf]
      %v621 = vld [vmem:[%s611 + $0x24] sm:$0xf]
      %v622 = vld [vmem:[%s611 + $0x28] sm:$0xf]
      %v623 = vld [vmem:[%s611 + $0x2c] sm:$0xf]
      %v624 = vld [vmem:[%s611 + $0x30] sm:$0xf]
      %v625 = vld [vmem:[%s611 + $0x34] sm:$0xf]
      %v626 = vld [vmem:[%s611 + $0x38] sm:$0xf]
      %v627 = vld [vmem:[%s611 + $0x3c] sm:$0xf]
      %v644 = vunpack.c.l.b16 %v612
      %v645 = vunpack.c.l.b16 %v613
      %v646 = vunpack.c.l.b16 %v614
      %v647 = vunpack.c.l.b16 %v615
      %v648 = vunpack.c.l.b16 %v616
      %v649 = vunpack.c.l.b16 %v617
      %v650 = vunpack.c.l.b16 %v618
      %v651 = vunpack.c.l.b16 %v619
      %v652 = vunpack.c.l.b16 %v620
      %v653 = vunpack.c.l.b16 %v621
      %v654 = vunpack.c.l.b16 %v622
      %v655 = vunpack.c.l.b16 %v623
      %v656 = vunpack.c.l.b16 %v624
      %v657 = vunpack.c.l.b16 %v625
      %v658 = vunpack.c.l.b16 %v626
      %v659 = vunpack.c.l.b16 %v627
      %v660 = vpack.c.b16 %v645, %v644
      %v661 = vpack.c.b16 %v647, %v646
      %v662 = vpack.c.b16 %v649, %v648
      %v663 = vpack.c.b16 %v651, %v650
      %v664 = vpack.c.b16 %v653, %v652
      %v665 = vpack.c.b16 %v655, %v654
      %v666 = vpack.c.b16 %v657, %v656
      %v667 = vpack.c.b16 %v659, %v658
      %676 = vmatpush.bf16.msra.mxu0 %v667
      %677 = vmatpush.bf16.msra.mxu0 %v666
      %678 = vmatpush.bf16.msra.mxu0 %v665
      %679 = vmatpush.bf16.msra.mxu0 %v664
      %680 = vmatpush.bf16.msra.mxu0 %v663
      %681 = vmatpush.bf16.msra.mxu0 %v662
      %682 = vmatpush.bf16.msra.mxu0 %v661
      %683 = vmatpush.bf16.msra.mxu0 %v660
      %684 = vmatmul.bf16.gmra.mxu0 %v607
      %v685 = vpop.f32.mrf.mxu0
      %v686 = vadd.f32 0.0, %v685
      %v687 = vpop.f32.mrf.mxu0
      %v688 = vadd.f32 0.0, %v687
      %689 = vmatmul.bf16.gmra.mxu0 %v608
      %v690 = vpop.f32.mrf.mxu0
      %v691 = vadd.f32 0.0, %v690
      %v692 = vpop.f32.mrf.mxu0
      %v693 = vadd.f32 0.0, %v692
      %694 = vmatmul.bf16.gmra.mxu0 %v609
      %v695 = vpop.f32.mrf.mxu0
      %v696 = vadd.f32 0.0, %v695
      %v697 = vpop.f32.mrf.mxu0
      %v698 = vadd.f32 0.0, %v697
      %699 = vmatmul.bf16.gmra.mxu0 %v610
      %v700 = vpop.f32.mrf.mxu0
      %v701 = vadd.f32 0.0, %v700
      %v702 = vpop.f32.mrf.mxu0
      %v703 = vadd.f32 0.0, %v702
      %704 = vdwg.mxu0
      %v705 = vadd.f32 %v555, %v686
      %v706 = vadd.f32 %v557, %v688
      %v707 = vadd.f32 %v560, %v691
      %v708 = vadd.f32 %v562, %v693
      %v709 = vadd.f32 %v565, %v696
      %v710 = vadd.f32 %v567, %v698
      %v711 = vadd.f32 %v570, %v701
      %v712 = vadd.f32 %v572, %v703
      %v713 = vpack.c.bf16 %v314, %v313
      %v714 = vpack.c.bf16 %v316, %v315
      %v715 = vpack.c.bf16 %v318, %v317
      %v716 = vpack.c.bf16 %v320, %v319
      %s717 = scalar_lea.vmem %s3, 192
      %v718 = vld [vmem:[%s717] sm:$0xf]
      %v719 = vld [vmem:[%s717 + $0x4] sm:$0xf]
      %v720 = vld [vmem:[%s717 + $0x8] sm:$0xf]
      %v721 = vld [vmem:[%s717 + $0xc] sm:$0xf]
      %v722 = vld [vmem:[%s717 + $0x10] sm:$0xf]
      %v723 = vld [vmem:[%s717 + $0x14] sm:$0xf]
      %v724 = vld [vmem:[%s717 + $0x18] sm:$0xf]
      %v725 = vld [vmem:[%s717 + $0x1c] sm:$0xf]
      %v726 = vld [vmem:[%s717 + $0x20] sm:$0xf]
      %v727 = vld [vmem:[%s717 + $0x24] sm:$0xf]
      %v728 = vld [vmem:[%s717 + $0x28] sm:$0xf]
      %v729 = vld [vmem:[%s717 + $0x2c] sm:$0xf]
      %v730 = vld [vmem:[%s717 + $0x30] sm:$0xf]
      %v731 = vld [vmem:[%s717 + $0x34] sm:$0xf]
      %v732 = vld [vmem:[%s717 + $0x38] sm:$0xf]
      %v733 = vld [vmem:[%s717 + $0x3c] sm:$0xf]
      %v750 = vunpack.c.l.b16 %v718
      %v751 = vunpack.c.l.b16 %v719
      %v752 = vunpack.c.l.b16 %v720
      %v753 = vunpack.c.l.b16 %v721
      %v754 = vunpack.c.l.b16 %v722
      %v755 = vunpack.c.l.b16 %v723
      %v756 = vunpack.c.l.b16 %v724
      %v757 = vunpack.c.l.b16 %v725
      %v758 = vunpack.c.l.b16 %v726
      %v759 = vunpack.c.l.b16 %v727
      %v760 = vunpack.c.l.b16 %v728
      %v761 = vunpack.c.l.b16 %v729
      %v762 = vunpack.c.l.b16 %v730
      %v763 = vunpack.c.l.b16 %v731
      %v764 = vunpack.c.l.b16 %v732
      %v765 = vunpack.c.l.b16 %v733
      %v766 = vpack.c.b16 %v751, %v750
      %v767 = vpack.c.b16 %v753, %v752
      %v768 = vpack.c.b16 %v755, %v754
      %v769 = vpack.c.b16 %v757, %v756
      %v770 = vpack.c.b16 %v759, %v758
      %v771 = vpack.c.b16 %v761, %v760
      %v772 = vpack.c.b16 %v763, %v762
      %v773 = vpack.c.b16 %v765, %v764
      %782 = vmatpush.bf16.msra.mxu0 %v773
      %783 = vmatpush.bf16.msra.mxu0 %v772
      %784 = vmatpush.bf16.msra.mxu0 %v771
      %785 = vmatpush.bf16.msra.mxu0 %v770
      %786 = vmatpush.bf16.msra.mxu0 %v769
      %787 = vmatpush.bf16.msra.mxu0 %v768
      %788 = vmatpush.bf16.msra.mxu0 %v767
      %789 = vmatpush.bf16.msra.mxu0 %v766
      %790 = vmatmul.bf16.gmra.mxu0 %v713
      %v791 = vpop.f32.mrf.mxu0
      %v792 = vadd.f32 0.0, %v791
      %v793 = vpop.f32.mrf.mxu0
      %v794 = vadd.f32 0.0, %v793
      %795 = vmatmul.bf16.gmra.mxu0 %v714
      %v796 = vpop.f32.mrf.mxu0
      %v797 = vadd.f32 0.0, %v796
      %v798 = vpop.f32.mrf.mxu0
      %v799 = vadd.f32 0.0, %v798
      %800 = vmatmul.bf16.gmra.mxu0 %v715
      %v801 = vpop.f32.mrf.mxu0
      %v802 = vadd.f32 0.0, %v801
      %v803 = vpop.f32.mrf.mxu0
      %v804 = vadd.f32 0.0, %v803
      %805 = vmatmul.bf16.gmra.mxu0 %v716
      %v806 = vpop.f32.mrf.mxu0
      %v807 = vadd.f32 0.0, %v806
      %v808 = vpop.f32.mrf.mxu0
      %v809 = vadd.f32 0.0, %v808
      %810 = vdwg.mxu0
      %v811 = vadd.f32 %v705, %v792
      %v812 = vadd.f32 %v706, %v794
      %v813 = vadd.f32 %v707, %v797
      %v814 = vadd.f32 %v708, %v799
      %v815 = vadd.f32 %v709, %v802
      %v816 = vadd.f32 %v710, %v804
      %v817 = vadd.f32 %v711, %v807
      %v818 = vadd.f32 %v712, %v809
      %v821 = vrot.slane %v320, 1
      %v822 = vrot.slane %v329, 1
      %v823 = vsel %vm366, %v821, %v822
      %v825 = vpack.c.bf16 %v375, %v372
      %v826 = vpack.c.bf16 %v381, %v378
      %v827 = vpack.c.bf16 %v387, %v384
      %v828 = vpack.c.bf16 %v823, %v390
      %s829 = scalar_lea.vmem %s3, 256
      %v830 = vld [vmem:[%s829] sm:$0xf]
      %v831 = vld [vmem:[%s829 + $0x4] sm:$0xf]
      %v832 = vld [vmem:[%s829 + $0x8] sm:$0xf]
      %v833 = vld [vmem:[%s829 + $0xc] sm:$0xf]
      %v834 = vld [vmem:[%s829 + $0x10] sm:$0xf]
      %v835 = vld [vmem:[%s829 + $0x14] sm:$0xf]
      %v836 = vld [vmem:[%s829 + $0x18] sm:$0xf]
      %v837 = vld [vmem:[%s829 + $0x1c] sm:$0xf]
      %v838 = vld [vmem:[%s829 + $0x20] sm:$0xf]
      %v839 = vld [vmem:[%s829 + $0x24] sm:$0xf]
      %v840 = vld [vmem:[%s829 + $0x28] sm:$0xf]
      %v841 = vld [vmem:[%s829 + $0x2c] sm:$0xf]
      %v842 = vld [vmem:[%s829 + $0x30] sm:$0xf]
      %v843 = vld [vmem:[%s829 + $0x34] sm:$0xf]
      %v844 = vld [vmem:[%s829 + $0x38] sm:$0xf]
      %v845 = vld [vmem:[%s829 + $0x3c] sm:$0xf]
      %v862 = vunpack.c.l.b16 %v830
      %v863 = vunpack.c.l.b16 %v831
      %v864 = vunpack.c.l.b16 %v832
      %v865 = vunpack.c.l.b16 %v833
      %v866 = vunpack.c.l.b16 %v834
      %v867 = vunpack.c.l.b16 %v835
      %v868 = vunpack.c.l.b16 %v836
      %v869 = vunpack.c.l.b16 %v837
      %v870 = vunpack.c.l.b16 %v838
      %v871 = vunpack.c.l.b16 %v839
      %v872 = vunpack.c.l.b16 %v840
      %v873 = vunpack.c.l.b16 %v841
      %v874 = vunpack.c.l.b16 %v842
      %v875 = vunpack.c.l.b16 %v843
      %v876 = vunpack.c.l.b16 %v844
      %v877 = vunpack.c.l.b16 %v845
      %v878 = vpack.c.b16 %v863, %v862
      %v879 = vpack.c.b16 %v865, %v864
      %v880 = vpack.c.b16 %v867, %v866
      %v881 = vpack.c.b16 %v869, %v868
      %v882 = vpack.c.b16 %v871, %v870
      %v883 = vpack.c.b16 %v873, %v872
      %v884 = vpack.c.b16 %v875, %v874
      %v885 = vpack.c.b16 %v877, %v876
      %894 = vmatpush.bf16.msra.mxu0 %v885
      %895 = vmatpush.bf16.msra.mxu0 %v884
      %896 = vmatpush.bf16.msra.mxu0 %v883
      %897 = vmatpush.bf16.msra.mxu0 %v882
      %898 = vmatpush.bf16.msra.mxu0 %v881
      %899 = vmatpush.bf16.msra.mxu0 %v880
      %900 = vmatpush.bf16.msra.mxu0 %v879
      %901 = vmatpush.bf16.msra.mxu0 %v878
      %902 = vmatmul.bf16.gmra.mxu0 %v825
      %v903 = vpop.f32.mrf.mxu0
      %v904 = vadd.f32 0.0, %v903
      %v905 = vpop.f32.mrf.mxu0
      %v906 = vadd.f32 0.0, %v905
      %907 = vmatmul.bf16.gmra.mxu0 %v826
      %v908 = vpop.f32.mrf.mxu0
      %v909 = vadd.f32 0.0, %v908
      %v910 = vpop.f32.mrf.mxu0
      %v911 = vadd.f32 0.0, %v910
      %912 = vmatmul.bf16.gmra.mxu0 %v827
      %v913 = vpop.f32.mrf.mxu0
      %v914 = vadd.f32 0.0, %v913
      %v915 = vpop.f32.mrf.mxu0
      %v916 = vadd.f32 0.0, %v915
      %917 = vmatmul.bf16.gmra.mxu0 %v828
      %v918 = vpop.f32.mrf.mxu0
      %v919 = vadd.f32 0.0, %v918
      %v920 = vpop.f32.mrf.mxu0
      %v921 = vadd.f32 0.0, %v920
      %922 = vdwg.mxu0
      %v923 = vadd.f32 %v811, %v904
      %v924 = vadd.f32 %v812, %v906
      %v925 = vadd.f32 %v813, %v909
      %v926 = vadd.f32 %v814, %v911
      %v927 = vadd.f32 %v815, %v914
      %v928 = vadd.f32 %v816, %v916
      %v929 = vadd.f32 %v817, %v919
      %v930 = vadd.f32 %v818, %v921
      %v931 = vrot.slane %v320, 2
      %v932 = vrot.slane %v329, 2
      %v933 = vsel %vm574, %v931, %v932
      %v935 = vpack.c.bf16 %v583, %v580
      %v936 = vpack.c.bf16 %v589, %v586
      %v937 = vpack.c.bf16 %v595, %v592
      %v938 = vpack.c.bf16 %v933, %v598
      %s939 = scalar_lea.vmem %s3, 320
      %v940 = vld [vmem:[%s939] sm:$0xf]
      %v941 = vld [vmem:[%s939 + $0x4] sm:$0xf]
      %v942 = vld [vmem:[%s939 + $0x8] sm:$0xf]
      %v943 = vld [vmem:[%s939 + $0xc] sm:$0xf]
      %v944 = vld [vmem:[%s939 + $0x10] sm:$0xf]
      %v945 = vld [vmem:[%s939 + $0x14] sm:$0xf]
      %v946 = vld [vmem:[%s939 + $0x18] sm:$0xf]
      %v947 = vld [vmem:[%s939 + $0x1c] sm:$0xf]
      %v948 = vld [vmem:[%s939 + $0x20] sm:$0xf]
      %v949 = vld [vmem:[%s939 + $0x24] sm:$0xf]
      %v950 = vld [vmem:[%s939 + $0x28] sm:$0xf]
      %v951 = vld [vmem:[%s939 + $0x2c] sm:$0xf]
      %v952 = vld [vmem:[%s939 + $0x30] sm:$0xf]
      %v953 = vld [vmem:[%s939 + $0x34] sm:$0xf]
      %v954 = vld [vmem:[%s939 + $0x38] sm:$0xf]
      %v955 = vld [vmem:[%s939 + $0x3c] sm:$0xf]
      %v972 = vunpack.c.l.b16 %v940
      %v973 = vunpack.c.l.b16 %v941
      %v974 = vunpack.c.l.b16 %v942
      %v975 = vunpack.c.l.b16 %v943
      %v976 = vunpack.c.l.b16 %v944
      %v977 = vunpack.c.l.b16 %v945
      %v978 = vunpack.c.l.b16 %v946
      %v979 = vunpack.c.l.b16 %v947
      %v980 = vunpack.c.l.b16 %v948
      %v981 = vunpack.c.l.b16 %v949
      %v982 = vunpack.c.l.b16 %v950
      %v983 = vunpack.c.l.b16 %v951
      %v984 = vunpack.c.l.b16 %v952
      %v985 = vunpack.c.l.b16 %v953
      %v986 = vunpack.c.l.b16 %v954
      %v987 = vunpack.c.l.b16 %v955
      %v988 = vpack.c.b16 %v973, %v972
      %v989 = vpack.c.b16 %v975, %v974
      %v990 = vpack.c.b16 %v977, %v976
      %v991 = vpack.c.b16 %v979, %v978
      %v992 = vpack.c.b16 %v981, %v980
      %v993 = vpack.c.b16 %v983, %v982
      %v994 = vpack.c.b16 %v985, %v984
      %v995 = vpack.c.b16 %v987, %v986
      %1004 = vmatpush.bf16.msra.mxu0 %v995
      %1005 = vmatpush.bf16.msra.mxu0 %v994
      %1006 = vmatpush.bf16.msra.mxu0 %v993
      %1007 = vmatpush.bf16.msra.mxu0 %v992
      %1008 = vmatpush.bf16.msra.mxu0 %v991
      %1009 = vmatpush.bf16.msra.mxu0 %v990
      %1010 = vmatpush.bf16.msra.mxu0 %v989
      %1011 = vmatpush.bf16.msra.mxu0 %v988
      %1012 = vmatmul.bf16.gmra.mxu0 %v935
      %v1013 = vpop.f32.mrf.mxu0
      %v1014 = vadd.f32 0.0, %v1013
      %v1015 = vpop.f32.mrf.mxu0
      %v1016 = vadd.f32 0.0, %v1015
      %1017 = vmatmul.bf16.gmra.mxu0 %v936
      %v1018 = vpop.f32.mrf.mxu0
      %v1019 = vadd.f32 0.0, %v1018
      %v1020 = vpop.f32.mrf.mxu0
      %v1021 = vadd.f32 0.0, %v1020
      %1022 = vmatmul.bf16.gmra.mxu0 %v937
      %v1023 = vpop.f32.mrf.mxu0
      %v1024 = vadd.f32 0.0, %v1023
      %v1025 = vpop.f32.mrf.mxu0
      %v1026 = vadd.f32 0.0, %v1025
      %1027 = vmatmul.bf16.gmra.mxu0 %v938
      %v1028 = vpop.f32.mrf.mxu0
      %v1029 = vadd.f32 0.0, %v1028
      %v1030 = vpop.f32.mrf.mxu0
      %v1031 = vadd.f32 0.0, %v1030
      %1032 = vdwg.mxu0
      %v1033 = vadd.f32 %v923, %v1014
      %v1034 = vadd.f32 %v924, %v1016
      %v1035 = vadd.f32 %v925, %v1019
      %v1036 = vadd.f32 %v926, %v1021
      %v1037 = vadd.f32 %v927, %v1024
      %v1038 = vadd.f32 %v928, %v1026
      %v1039 = vadd.f32 %v929, %v1029
      %v1040 = vadd.f32 %v930, %v1031
      %v1041 = vpack.c.bf16 %v312, %v320
      %s1042 = scalar_lea.vmem %s3, 384
      %v1043 = vld [vmem:[%s1042] sm:$0xf]
      %v1044 = vld [vmem:[%s1042 + $0x4] sm:$0xf]
      %v1045 = vld [vmem:[%s1042 + $0x8] sm:$0xf]
      %v1046 = vld [vmem:[%s1042 + $0xc] sm:$0xf]
      %v1047 = vld [vmem:[%s1042 + $0x10] sm:$0xf]
      %v1048 = vld [vmem:[%s1042 + $0x14] sm:$0xf]
      %v1049 = vld [vmem:[%s1042 + $0x18] sm:$0xf]
      %v1050 = vld [vmem:[%s1042 + $0x1c] sm:$0xf]
      %v1051 = vld [vmem:[%s1042 + $0x20] sm:$0xf]
      %v1052 = vld [vmem:[%s1042 + $0x24] sm:$0xf]
      %v1053 = vld [vmem:[%s1042 + $0x28] sm:$0xf]
      %v1054 = vld [vmem:[%s1042 + $0x2c] sm:$0xf]
      %v1055 = vld [vmem:[%s1042 + $0x30] sm:$0xf]
      %v1056 = vld [vmem:[%s1042 + $0x34] sm:$0xf]
      %v1057 = vld [vmem:[%s1042 + $0x38] sm:$0xf]
      %v1058 = vld [vmem:[%s1042 + $0x3c] sm:$0xf]
      %v1075 = vunpack.c.l.b16 %v1043
      %v1076 = vunpack.c.l.b16 %v1044
      %v1077 = vunpack.c.l.b16 %v1045
      %v1078 = vunpack.c.l.b16 %v1046
      %v1079 = vunpack.c.l.b16 %v1047
      %v1080 = vunpack.c.l.b16 %v1048
      %v1081 = vunpack.c.l.b16 %v1049
      %v1082 = vunpack.c.l.b16 %v1050
      %v1083 = vunpack.c.l.b16 %v1051
      %v1084 = vunpack.c.l.b16 %v1052
      %v1085 = vunpack.c.l.b16 %v1053
      %v1086 = vunpack.c.l.b16 %v1054
      %v1087 = vunpack.c.l.b16 %v1055
      %v1088 = vunpack.c.l.b16 %v1056
      %v1089 = vunpack.c.l.b16 %v1057
      %v1090 = vunpack.c.l.b16 %v1058
      %v1091 = vpack.c.b16 %v1076, %v1075
      %v1092 = vpack.c.b16 %v1078, %v1077
      %v1093 = vpack.c.b16 %v1080, %v1079
      %v1094 = vpack.c.b16 %v1082, %v1081
      %v1095 = vpack.c.b16 %v1084, %v1083
      %v1096 = vpack.c.b16 %v1086, %v1085
      %v1097 = vpack.c.b16 %v1088, %v1087
      %v1098 = vpack.c.b16 %v1090, %v1089
      %1107 = vmatpush.bf16.msra.mxu0 %v1098
      %1108 = vmatpush.bf16.msra.mxu0 %v1097
      %1109 = vmatpush.bf16.msra.mxu0 %v1096
      %1110 = vmatpush.bf16.msra.mxu0 %v1095
      %1111 = vmatpush.bf16.msra.mxu0 %v1094
      %1112 = vmatpush.bf16.msra.mxu0 %v1093
      %1113 = vmatpush.bf16.msra.mxu0 %v1092
      %1114 = vmatpush.bf16.msra.mxu0 %v1091
      %1115 = vmatmul.bf16.gmra.mxu0 %v331
      %v1116 = vpop.f32.mrf.mxu0
      %v1117 = vadd.f32 0.0, %v1116
      %v1118 = vpop.f32.mrf.mxu0
      %v1119 = vadd.f32 0.0, %v1118
      %1120 = vmatmul.bf16.gmra.mxu0 %v332
      %v1121 = vpop.f32.mrf.mxu0
      %v1122 = vadd.f32 0.0, %v1121
      %v1123 = vpop.f32.mrf.mxu0
      %v1124 = vadd.f32 0.0, %v1123
      %1125 = vmatmul.bf16.gmra.mxu0 %v333
      %v1126 = vpop.f32.mrf.mxu0
      %v1127 = vadd.f32 0.0, %v1126
      %v1128 = vpop.f32.mrf.mxu0
      %v1129 = vadd.f32 0.0, %v1128
      %1130 = vmatmul.bf16.gmra.mxu0 %v1041
      %v1131 = vpop.f32.mrf.mxu0
      %v1132 = vadd.f32 0.0, %v1131
      %v1133 = vpop.f32.mrf.mxu0
      %v1134 = vadd.f32 0.0, %v1133
      %1135 = vdwg.mxu0
      %v1136 = vadd.f32 %v1033, %v1117
      %v1137 = vadd.f32 %v1034, %v1119
      %v1138 = vadd.f32 %v1035, %v1122
      %v1139 = vadd.f32 %v1036, %v1124
      %v1140 = vadd.f32 %v1037, %v1127
      %v1141 = vadd.f32 %v1038, %v1129
      %v1142 = vadd.f32 %v1039, %v1132
      %v1143 = vadd.f32 %v1040, %v1134
      %v1144 = vpack.c.bf16 %v369, %v823
      %s1145 = scalar_lea.vmem %s3, 448
      %v1146 = vld [vmem:[%s1145] sm:$0xf]
      %v1147 = vld [vmem:[%s1145 + $0x4] sm:$0xf]
      %v1148 = vld [vmem:[%s1145 + $0x8] sm:$0xf]
      %v1149 = vld [vmem:[%s1145 + $0xc] sm:$0xf]
      %v1150 = vld [vmem:[%s1145 + $0x10] sm:$0xf]
      %v1151 = vld [vmem:[%s1145 + $0x14] sm:$0xf]
      %v1152 = vld [vmem:[%s1145 + $0x18] sm:$0xf]
      %v1153 = vld [vmem:[%s1145 + $0x1c] sm:$0xf]
      %v1154 = vld [vmem:[%s1145 + $0x20] sm:$0xf]
      %v1155 = vld [vmem:[%s1145 + $0x24] sm:$0xf]
      %v1156 = vld [vmem:[%s1145 + $0x28] sm:$0xf]
      %v1157 = vld [vmem:[%s1145 + $0x2c] sm:$0xf]
      %v1158 = vld [vmem:[%s1145 + $0x30] sm:$0xf]
      %v1159 = vld [vmem:[%s1145 + $0x34] sm:$0xf]
      %v1160 = vld [vmem:[%s1145 + $0x38] sm:$0xf]
      %v1161 = vld [vmem:[%s1145 + $0x3c] sm:$0xf]
      %v1178 = vunpack.c.l.b16 %v1146
      %v1179 = vunpack.c.l.b16 %v1147
      %v1180 = vunpack.c.l.b16 %v1148
      %v1181 = vunpack.c.l.b16 %v1149
      %v1182 = vunpack.c.l.b16 %v1150
      %v1183 = vunpack.c.l.b16 %v1151
      %v1184 = vunpack.c.l.b16 %v1152
      %v1185 = vunpack.c.l.b16 %v1153
      %v1186 = vunpack.c.l.b16 %v1154
      %v1187 = vunpack.c.l.b16 %v1155
      %v1188 = vunpack.c.l.b16 %v1156
      %v1189 = vunpack.c.l.b16 %v1157
      %v1190 = vunpack.c.l.b16 %v1158
      %v1191 = vunpack.c.l.b16 %v1159
      %v1192 = vunpack.c.l.b16 %v1160
      %v1193 = vunpack.c.l.b16 %v1161
      %v1194 = vpack.c.b16 %v1179, %v1178
      %v1195 = vpack.c.b16 %v1181, %v1180
      %v1196 = vpack.c.b16 %v1183, %v1182
      %v1197 = vpack.c.b16 %v1185, %v1184
      %v1198 = vpack.c.b16 %v1187, %v1186
      %v1199 = vpack.c.b16 %v1189, %v1188
      %v1200 = vpack.c.b16 %v1191, %v1190
      %v1201 = vpack.c.b16 %v1193, %v1192
      %1210 = vmatpush.bf16.msra.mxu0 %v1201
      %1211 = vmatpush.bf16.msra.mxu0 %v1200
      %1212 = vmatpush.bf16.msra.mxu0 %v1199
      %1213 = vmatpush.bf16.msra.mxu0 %v1198
      %1214 = vmatpush.bf16.msra.mxu0 %v1197
      %1215 = vmatpush.bf16.msra.mxu0 %v1196
      %1216 = vmatpush.bf16.msra.mxu0 %v1195
      %1217 = vmatpush.bf16.msra.mxu0 %v1194
      %1218 = vmatmul.bf16.gmra.mxu0 %v400
      %v1219 = vpop.f32.mrf.mxu0
      %v1220 = vadd.f32 0.0, %v1219
      %v1221 = vpop.f32.mrf.mxu0
      %v1222 = vadd.f32 0.0, %v1221
      %1223 = vmatmul.bf16.gmra.mxu0 %v401
      %v1224 = vpop.f32.mrf.mxu0
      %v1225 = vadd.f32 0.0, %v1224
      %v1226 = vpop.f32.mrf.mxu0
      %v1227 = vadd.f32 0.0, %v1226
      %1228 = vmatmul.bf16.gmra.mxu0 %v402
      %v1229 = vpop.f32.mrf.mxu0
      %v1230 = vadd.f32 0.0, %v1229
      %v1231 = vpop.f32.mrf.mxu0
      %v1232 = vadd.f32 0.0, %v1231
      %1233 = vmatmul.bf16.gmra.mxu0 %v1144
      %v1234 = vpop.f32.mrf.mxu0
      %v1235 = vadd.f32 0.0, %v1234
      %v1236 = vpop.f32.mrf.mxu0
      %v1237 = vadd.f32 0.0, %v1236
      %1238 = vdwg.mxu0
      %v1239 = vadd.f32 %v1136, %v1220
      %v1240 = vadd.f32 %v1137, %v1222
      %v1241 = vadd.f32 %v1138, %v1225
      %v1242 = vadd.f32 %v1139, %v1227
      %v1243 = vadd.f32 %v1140, %v1230
      %v1244 = vadd.f32 %v1141, %v1232
      %v1245 = vadd.f32 %v1142, %v1235
      %v1246 = vadd.f32 %v1143, %v1237
      %v1247 = vpack.c.bf16 %v577, %v933
      %s1248 = scalar_lea.vmem %s3, 512
      %v1249 = vld [vmem:[%s1248] sm:$0xf]
      %v1250 = vld [vmem:[%s1248 + $0x4] sm:$0xf]
      %v1251 = vld [vmem:[%s1248 + $0x8] sm:$0xf]
      %v1252 = vld [vmem:[%s1248 + $0xc] sm:$0xf]
      %v1253 = vld [vmem:[%s1248 + $0x10] sm:$0xf]
      %v1254 = vld [vmem:[%s1248 + $0x14] sm:$0xf]
      %v1255 = vld [vmem:[%s1248 + $0x18] sm:$0xf]
      %v1256 = vld [vmem:[%s1248 + $0x1c] sm:$0xf]
      %v1257 = vld [vmem:[%s1248 + $0x20] sm:$0xf]
      %v1258 = vld [vmem:[%s1248 + $0x24] sm:$0xf]
      %v1259 = vld [vmem:[%s1248 + $0x28] sm:$0xf]
      %v1260 = vld [vmem:[%s1248 + $0x2c] sm:$0xf]
      %v1261 = vld [vmem:[%s1248 + $0x30] sm:$0xf]
      %v1262 = vld [vmem:[%s1248 + $0x34] sm:$0xf]
      %v1263 = vld [vmem:[%s1248 + $0x38] sm:$0xf]
      %v1264 = vld [vmem:[%s1248 + $0x3c] sm:$0xf]
      %v1281 = vunpack.c.l.b16 %v1249
      %v1282 = vunpack.c.l.b16 %v1250
      %v1283 = vunpack.c.l.b16 %v1251
      %v1284 = vunpack.c.l.b16 %v1252
      %v1285 = vunpack.c.l.b16 %v1253
      %v1286 = vunpack.c.l.b16 %v1254
      %v1287 = vunpack.c.l.b16 %v1255
      %v1288 = vunpack.c.l.b16 %v1256
      %v1289 = vunpack.c.l.b16 %v1257
      %v1290 = vunpack.c.l.b16 %v1258
      %v1291 = vunpack.c.l.b16 %v1259
      %v1292 = vunpack.c.l.b16 %v1260
      %v1293 = vunpack.c.l.b16 %v1261
      %v1294 = vunpack.c.l.b16 %v1262
      %v1295 = vunpack.c.l.b16 %v1263
      %v1296 = vunpack.c.l.b16 %v1264
      %v1297 = vpack.c.b16 %v1282, %v1281
      %v1298 = vpack.c.b16 %v1284, %v1283
      %v1299 = vpack.c.b16 %v1286, %v1285
      %v1300 = vpack.c.b16 %v1288, %v1287
      %v1301 = vpack.c.b16 %v1290, %v1289
      %v1302 = vpack.c.b16 %v1292, %v1291
      %v1303 = vpack.c.b16 %v1294, %v1293
      %v1304 = vpack.c.b16 %v1296, %v1295
      %1313 = vmatpush.bf16.msra.mxu0 %v1304
      %1314 = vmatpush.bf16.msra.mxu0 %v1303
      %1315 = vmatpush.bf16.msra.mxu0 %v1302
      %1316 = vmatpush.bf16.msra.mxu0 %v1301
      %1317 = vmatpush.bf16.msra.mxu0 %v1300
      %1318 = vmatpush.bf16.msra.mxu0 %v1299
      %1319 = vmatpush.bf16.msra.mxu0 %v1298
      %1320 = vmatpush.bf16.msra.mxu0 %v1297
      %1321 = vmatmul.bf16.gmra.mxu0 %v608
      %v1322 = vpop.f32.mrf.mxu0
      %v1323 = vadd.f32 0.0, %v1322
      %v1324 = vpop.f32.mrf.mxu0
      %v1325 = vadd.f32 0.0, %v1324
      %1326 = vmatmul.bf16.gmra.mxu0 %v609
      %v1327 = vpop.f32.mrf.mxu0
      %v1328 = vadd.f32 0.0, %v1327
      %v1329 = vpop.f32.mrf.mxu0
      %v1330 = vadd.f32 0.0, %v1329
      %1331 = vmatmul.bf16.gmra.mxu0 %v610
      %v1332 = vpop.f32.mrf.mxu0
      %v1333 = vadd.f32 0.0, %v1332
      %v1334 = vpop.f32.mrf.mxu0
      %v1335 = vadd.f32 0.0, %v1334
      %1336 = vmatmul.bf16.gmra.mxu0 %v1247
      %v1337 = vpop.f32.mrf.mxu0
      %v1338 = vadd.f32 0.0, %v1337
      %v1339 = vpop.f32.mrf.mxu0
      %v1340 = vadd.f32 0.0, %v1339
      %1341 = vdwg.mxu0
      %v1342 = vadd.f32 %v1239, %v1323
      %v1343 = vadd.f32 %v1240, %v1325
      %v1344 = vadd.f32 %v1241, %v1328
      %v1345 = vadd.f32 %v1242, %v1330
      %v1346 = vadd.f32 %v1243, %v1333
      %v1347 = vadd.f32 %v1244, %v1335
      %v1348 = vadd.f32 %v1245, %v1338
      %v1349 = vadd.f32 %v1246, %v1340
      %v1350 = vadd.f32 %v1342, %v1343
      %v1351 = vadd.f32 %v1350, %v1344
      %v1352 = vadd.f32 %v1351, %v1345
      %v1353 = vadd.f32 %v1352, %v1346
      %v1354 = vadd.f32 %v1353, %v1347
      %v1355 = vadd.f32 %v1354, %v1348
      %v1356 = vadd.f32 %v1355, %v1349
      %v1357 = vrot.slane %v1356, 4
      %v1358 = vadd.f32 %v1356, %v1357
      %v1359 = vrot.slane %v1358, 2
      %v1360 = vadd.f32 %v1358, %v1359
      %v1361 = vrot.slane %v1360, 1
      %v1362 = vadd.f32 %v1360, %v1361
      %v1363 = vmul.f32 %v1342, %v1342
      %v1364 = vmul.f32 %v1343, %v1343
      %v1365 = vmul.f32 %v1344, %v1344
      %v1366 = vmul.f32 %v1345, %v1345
      %v1367 = vmul.f32 %v1346, %v1346
      %v1368 = vmul.f32 %v1347, %v1347
      %v1369 = vmul.f32 %v1348, %v1348
      %v1370 = vmul.f32 %v1349, %v1349
      %v1371 = vadd.f32 %v1363, %v1364
      %v1372 = vadd.f32 %v1371, %v1365
      %v1373 = vadd.f32 %v1372, %v1366
      %v1374 = vadd.f32 %v1373, %v1367
      %v1375 = vadd.f32 %v1374, %v1368
      %v1376 = vadd.f32 %v1375, %v1369
      %v1377 = vadd.f32 %v1376, %v1370
      %v1378 = vrot.slane %v1377, 4
      %v1379 = vadd.f32 %v1377, %v1378
      %v1380 = vrot.slane %v1379, 2
      %v1381 = vadd.f32 %v1379, %v1380
      %v1382 = vrot.slane %v1381, 1
      %v1383 = vadd.f32 %v1381, %v1382
      %v1384 = vsel %vm311, %v1362, %v1383
      %1385 = vst [vmem:[%s235] sm:$0x3] %v1384
      %v1386 = vpack.c.bf16 %v1342, %v1342
      %v1387 = vpack.c.bf16 %v1343, %v1343
      %v1388 = vpack.c.bf16 %v1344, %v1344
      %v1389 = vpack.c.bf16 %v1345, %v1345
      %v1390 = vpack.c.bf16 %v1346, %v1346
      %v1391 = vpack.c.bf16 %v1347, %v1347
      %v1392 = vpack.c.bf16 %v1348, %v1348
      %v1393 = vpack.c.bf16 %v1349, %v1349
      %1394 = vst [vmem:[%s231] sm:$0xf] %v1386
      %1395 = vst [vmem:[%s231 + $0x4] sm:$0xf] %v1387
      %1396 = vst [vmem:[%s231 + $0x8] sm:$0xf] %v1388
      %1397 = vst [vmem:[%s231 + $0xc] sm:$0xf] %v1389
      %1398 = vst [vmem:[%s231 + $0x10] sm:$0xf] %v1390
      %1399 = vst [vmem:[%s231 + $0x14] sm:$0xf] %v1391
      %1400 = vst [vmem:[%s231 + $0x18] sm:$0xf] %v1392
      %1401 = vst [vmem:[%s231 + $0x1c] sm:$0xf] %v1393
      %p1402 = scmp.lt.s32.totalorder %s17, 1
      %s1403 = scalar_select %p1402, %s17, 1
      %s1404 = smul.addr %s1403, 8
      %s1405 = smul.addr %s1404, 4
      %s1406 = scalar_lea.vmem %s4, %s1405
      %p1407 = scmp.lt.s32.totalorder %s17, 1
      %s1408 = scalar_select %p1407, %s17, 1
      %s1409 = smul.addr %s1408, 2
      %s1410 = scalar_lea.vmem %s5, %s1409
      // Predicated region
      $region37: #{residual_block_forward.4} parent=35 // pred_check
        %p1411 = pneg %p124
      $region38: #{residual_block_forward.4} parent=35 // pred_check_branch
        %1413 = sbr.rel (%p1411) target = $region40
      $region39: #{residual_block_forward.4} parent=35 // pred_region
        _
      $region40: #{residual_block_forward.4} parent=35 // pred_fallthru
        _
      // Predicated region
      $region41: #{residual_block_forward.4} parent=35 // pred_check
        %p1414 = pneg %p150
      $region42: #{residual_block_forward.4} parent=35 // pred_check_branch
        %1416 = sbr.rel (%p1414) target = $region44
      $region43: #{residual_block_forward.4} parent=35 // pred_region
        _
      $region44: #{residual_block_forward.4} parent=35 // pred_fallthru
        _
    $region36: #{residual_block_forward.4} parent=5 // pred_fallthru
      _
    %p1417 = scmp.le.s32.totalorder 2, %s12
    // Predicated region
    $region45: #{residual_block_forward.4} parent=5 // pred_check
      %p1418 = pneg %p1417
    $region46: #{residual_block_forward.4} parent=5 // pred_check_branch
      %1420 = sbr.rel (%p1418) target = $region48
    $region47: #{residual_block_forward.4} parent=5 // pred_region
      %s1421 = ssub.s32 %s12, 2
      // Predicated region
      $region49: #{residual_block_forward.4} parent=47 // pred_check
        %p1422 = pneg %p130
      $region50: #{residual_block_forward.4} parent=47 // pred_check_branch
        %1424 = sbr.rel (%p1422) target = $region52
      $region51: #{residual_block_forward.4} parent=47 // pred_region
        %p1425 = scmp.lt.s32.totalorder %s18, 1
        %s1426 = scalar_select %p1425, %s18, 1
        %s1427 = smul.addr %s1426, 8
        %s1428 = smul.addr %s1427, 4
        %s1429 = scalar_lea.vmem %s4, %s1428
      $region52: #{residual_block_forward.4} parent=47 // pred_fallthru
        _
      // Predicated region
      $region53: #{residual_block_forward.4} parent=47 // pred_check
        %p1430 = pneg %p156
      $region54: #{residual_block_forward.4} parent=47 // pred_check_branch
        %1432 = sbr.rel (%p1430) target = $region56
      $region55: #{residual_block_forward.4} parent=47 // pred_region
        %p1433 = scmp.lt.s32.totalorder %s18, 1
        %s1434 = scalar_select %p1433, %s18, 1
        %s1435 = smul.addr %s1434, 2
        %s1436 = scalar_lea.vmem %s5, %s1435
      $region56: #{residual_block_forward.4} parent=47 // pred_fallthru
        _
    $region48: #{residual_block_forward.4} parent=5 // pred_fallthru
      _
  $region6: #{residual_block_forward.4} parent=0 // loop_footer
    %s16 = sadd.s32 1, %s12
  $region7: #{residual_block_forward.4} parent=0 // loop_footer_branch
    %11 = sbr.rel target = $region3
  $region8: #{residual_block_forward.4} parent=0 // loop_exit
    _

// kernel: residual_block_forward.3
$region0: #{residual_block_forward.3}
  #allocation0 [shape = 'u32[]', space=smem, size = 0x4, offset = 0x4, fixed_abs, tag = 'smem constant byte address 0x4 - core index']
  #allocation1 [shape = 'u32[72,128]{1,0:T(1,128)}', space=vmem, size = 0x9000, scoped, tag = 'internal scratch']
  %s0 = inlined_call_operand.vmem [shape: bf16[2,8,8,1152], index: 0, kind: input, shape index: {}]
  %s1 = inlined_call_operand.vmem [shape: bf16[1152,128], index: 1, kind: input, shape index: {}]
  %s2 = inlined_call_operand.vmem [shape: bf16[128,128], index: 2, kind: input, shape index: {}]
  %s3 = inlined_call_operand.vmem [shape: bf16[2,8,8,128], index: 3, kind: output, shape index: {0}]
  %s4 = inlined_call_operand.vmem [shape: bf16[2,8,8,128], index: 4, kind: output, shape index: {1}]
  %s5 = inlined_call_operand.vmem [shape: f32[2,2,128], index: 5, kind: output, shape index: {2}]
  %s6 = inlined_call_operand.vmem [shape: f32[2,2,128], index: 6, kind: output, shape index: {3}]
  %7 = xla_tuple %s3, %s4, %s5, %s6
  %s8 = sld [smem:[#allocation0]]
  $region69: #{residual_block_forward.3} parent=0
    _
  %s10 = ssub.s32 1, %s8
  %s11 = scalar_select 0, %s10, %s8
  loop: start=0, step=1, limit=4
  $region2: #{residual_block_forward.3} parent=0 // loop_pre_header
    _
  $region3: #{residual_block_forward.3} parent=0 // loop_header
    %s13 = sphi 0, %s17
    %p14 = scmp.ge.s32.totalorder %s13, 4
    %s23 = sphi 0, %s25
    %s26 = sphi 0, %s23
    %s27 = sphi 0, %s26
    %s43 = sphi 0, %s27
    %s47 = sphi 0, %s47
    %s49 = sphi 0, %s47
    %s50 = sphi 0, %s49
    %s64 = sphi 0, %s50
    %s68 = sphi 0, %s68
    %s70 = sphi 0, %s68
    %s71 = sphi 0, %s70
    %s85 = sphi 0, %s71
    %s91 = sphi 0, %s93
    %s94 = sphi 0, %s91
    %s95 = sphi 0, %s94
    %s111 = sphi 0, %s95
    %s117 = sphi 0, %s119
    %s120 = sphi 0, %s117
    %s121 = sphi 0, %s120
    %s137 = sphi 0, %s121
    %s143 = sphi 0, %s145
    %s146 = sphi 0, %s143
    %s147 = sphi 0, %s146
    %s163 = sphi 0, %s147
    %s169 = sphi 0, %s171
    %s172 = sphi 0, %s169
    %s173 = sphi 0, %s172
    %s189 = sphi 0, %s173
  $region4: #{residual_block_forward.3} parent=0 // loop_header_branch
    %16 = sbr.rel (%p14) target = $region8
  $region5: #{residual_block_forward.3} parent=0 // loop_body
    %s18 = ssub.s32 %s13, 1
    %s19 = ssub.s32 %s13, 2
    %s20 = sadd.s32 %s13, 1
    %s21 = ssub.s32 %s13, %s20
    %p22 = scmp.eq.s32.totalorder %s21, 0
    %s24 = sadd.s32 %s23, 1
    %s25 = scalar_select %p22, %s23, %s24
    %p28 = pneg %p22
    %p29 = scmp.eq.s32.totalorder %s13, 1
    %p30 = por %p28, %p29
    %p31 = scmp.ne.s32.totalorder %s23, %s26
    %p32 = scmp.eq.s32.totalorder %s13, 0
    %p33 = por %p31, %p32
    %p34 = scmp.ne.s32.totalorder %s23, %s26
    %p35 = scmp.eq.s32.totalorder %s18, 1
    %p36 = por %p34, %p35
    %p37 = scmp.ne.s32.totalorder %s26, %s27
    %p38 = scmp.eq.s32.totalorder %s18, 0
    %p39 = por %p37, %p38
    %p40 = scmp.ne.s32.totalorder %s26, %s27
    %p41 = scmp.eq.s32.totalorder %s19, 1
    %p42 = por %p40, %p41
    %p44 = scmp.ne.s32.totalorder %s27, %s43
    %p45 = scmp.eq.s32.totalorder %s19, 0
    %p46 = por %p44, %p45
    %s48 = sadd.s32 %s47, 1
    %p51 = scmp.eq.s32.totalorder %s13, 1
    %p52 = scmp.ne.s32.totalorder %s47, %s49
    %p53 = scmp.eq.s32.totalorder %s13, 0
    %p54 = por %p52, %p53
    %p55 = scmp.ne.s32.totalorder %s47, %s49
    %p56 = scmp.eq.s32.totalorder %s18, 1
    %p57 = por %p55, %p56
    %p58 = scmp.ne.s32.totalorder %s49, %s50
    %p59 = scmp.eq.s32.totalorder %s18, 0
    %p60 = por %p58, %p59
    %p61 = scmp.ne.s32.totalorder %s49, %s50
    %p62 = scmp.eq.s32.totalorder %s19, 1
    %p63 = por %p61, %p62
    %p65 = scmp.ne.s32.totalorder %s50, %s64
    %p66 = scmp.eq.s32.totalorder %s19, 0
    %p67 = por %p65, %p66
    %s69 = sadd.s32 %s68, 1
    %p72 = scmp.eq.s32.totalorder %s13, 1
    %p73 = scmp.ne.s32.totalorder %s68, %s70
    %p74 = scmp.eq.s32.totalorder %s13, 0
    %p75 = por %p73, %p74
    %p76 = scmp.ne.s32.totalorder %s68, %s70
    %p77 = scmp.eq.s32.totalorder %s18, 1
    %p78 = por %p76, %p77
    %p79 = scmp.ne.s32.totalorder %s70, %s71
    %p80 = scmp.eq.s32.totalorder %s18, 0
    %p81 = por %p79, %p80
    %p82 = scmp.ne.s32.totalorder %s70, %s71
    %p83 = scmp.eq.s32.totalorder %s19, 1
    %p84 = por %p82, %p83
    %p86 = scmp.ne.s32.totalorder %s71, %s85
    %p87 = scmp.eq.s32.totalorder %s19, 0
    %p88 = por %p86, %p87
    %s89 = ssub.s32 %s13, %s20
    %p90 = scmp.eq.s32.totalorder %s89, 0
    %s92 = sadd.s32 %s91, 1
    %s93 = scalar_select %p90, %s91, %s92
    %p96 = pneg %p90
    %p97 = scmp.eq.s32.totalorder %s13, 1
    %p98 = por %p96, %p97
    %p99 = scmp.ne.s32.totalorder %s91, %s94
    %p100 = scmp.eq.s32.totalorder %s13, 0
    %p101 = por %p99, %p100
    %p102 = scmp.ne.s32.totalorder %s91, %s94
    %p103 = scmp.eq.s32.totalorder %s18, 1
    %p104 = por %p102, %p103
    %p105 = scmp.ne.s32.totalorder %s94, %s95
    %p106 = scmp.eq.s32.totalorder %s18, 0
    %p107 = por %p105, %p106
    %p108 = scmp.ne.s32.totalorder %s94, %s95
    %p109 = scmp.eq.s32.totalorder %s19, 1
    %p110 = por %p108, %p109
    %p112 = scmp.ne.s32.totalorder %s95, %s111
    %p113 = scmp.eq.s32.totalorder %s19, 0
    %p114 = por %p112, %p113
    %s115 = ssub.s32 %s13, %s20
    %p116 = scmp.eq.s32.totalorder %s115, 0
    %s118 = sadd.s32 %s117, 1
    %s119 = scalar_select %p116, %s117, %s118
    %p122 = pneg %p116
    %p123 = scmp.eq.s32.totalorder %s13, 1
    %p124 = por %p122, %p123
    %p125 = scmp.ne.s32.totalorder %s117, %s120
    %p126 = scmp.eq.s32.totalorder %s13, 0
    %p127 = por %p125, %p126
    %p128 = scmp.ne.s32.totalorder %s117, %s120
    %p129 = scmp.eq.s32.totalorder %s18, 1
    %p130 = por %p128, %p129
    %p131 = scmp.ne.s32.totalorder %s120, %s121
    %p132 = scmp.eq.s32.totalorder %s18, 0
    %p133 = por %p131, %p132
    %p134 = scmp.ne.s32.totalorder %s120, %s121
    %p135 = scmp.eq.s32.totalorder %s19, 1
    %p136 = por %p134, %p135
    %p138 = scmp.ne.s32.totalorder %s121, %s137
    %p139 = scmp.eq.s32.totalorder %s19, 0
    %p140 = por %p138, %p139
    %s141 = ssub.s32 %s13, %s20
    %p142 = scmp.eq.s32.totalorder %s141, 0
    %s144 = sadd.s32 %s143, 1
    %s145 = scalar_select %p142, %s143, %s144
    %p148 = pneg %p142
    %p149 = scmp.eq.s32.totalorder %s13, 1
    %p150 = por %p148, %p149
    %p151 = scmp.ne.s32.totalorder %s143, %s146
    %p152 = scmp.eq.s32.totalorder %s13, 0
    %p153 = por %p151, %p152
    %p154 = scmp.ne.s32.totalorder %s143, %s146
    %p155 = scmp.eq.s32.totalorder %s18, 1
    %p156 = por %p154, %p155
    %p157 = scmp.ne.s32.totalorder %s146, %s147
    %p158 = scmp.eq.s32.totalorder %s18, 0
    %p159 = por %p157, %p158
    %p160 = scmp.ne.s32.totalorder %s146, %s147
    %p161 = scmp.eq.s32.totalorder %s19, 1
    %p162 = por %p160, %p161
    %p164 = scmp.ne.s32.totalorder %s147, %s163
    %p165 = scmp.eq.s32.totalorder %s19, 0
    %p166 = por %p164, %p165
    %s167 = ssub.s32 %s13, %s20
    %p168 = scmp.eq.s32.totalorder %s167, 0
    %s170 = sadd.s32 %s169, 1
    %s171 = scalar_select %p168, %s169, %s170
    %p174 = pneg %p168
    %p175 = scmp.eq.s32.totalorder %s13, 1
    %p176 = por %p174, %p175
    %p177 = scmp.ne.s32.totalorder %s169, %s172
    %p178 = scmp.eq.s32.totalorder %s13, 0
    %p179 = por %p177, %p178
    %p180 = scmp.ne.s32.totalorder %s169, %s172
    %p181 = scmp.eq.s32.totalorder %s18, 1
    %p182 = por %p180, %p181
    %p183 = scmp.ne.s32.totalorder %s172, %s173
    %p184 = scmp.eq.s32.totalorder %s18, 0
    %p185 = por %p183, %p184
    %p186 = scmp.ne.s32.totalorder %s172, %s173
    %p187 = scmp.eq.s32.totalorder %s19, 1
    %p188 = por %p186, %p187
    %p190 = scmp.ne.s32.totalorder %s173, %s189
    %p191 = scmp.eq.s32.totalorder %s19, 0
    %p192 = por %p190, %p191
    %p193 = scmp.le.s32.totalorder 1, %s13
    %p194 = scmp.lt.s32.totalorder %s13, 3
    %p195 = pnand %p193, %p194
    %p196 = pneg %p195
    // Predicated region
    $region9: #{residual_block_forward.3} parent=5 // pred_check
      _
    $region10: #{residual_block_forward.3} parent=5 // pred_check_branch
      %198 = sbr.rel (%p195) target = $region12
    $region11: #{residual_block_forward.3} parent=5 // pred_region
      %s199 = ssub.s32 %s13, 1
      // Predicated region
      $region13: #{residual_block_forward.3} parent=11 // pred_check
        %p200 = pneg %p60
      $region14: #{residual_block_forward.3} parent=11 // pred_check_branch
        %202 = sbr.rel (%p200) target = $region16
      $region15: #{residual_block_forward.3} parent=11 // pred_region
        _
      $region16: #{residual_block_forward.3} parent=11 // pred_fallthru
        _
      // Predicated region
      $region17: #{residual_block_forward.3} parent=11 // pred_check
        %p203 = pneg %p81
      $region18: #{residual_block_forward.3} parent=11 // pred_check_branch
        %205 = sbr.rel (%p203) target = $region20
      $region19: #{residual_block_forward.3} parent=11 // pred_region
        _
      $region20: #{residual_block_forward.3} parent=11 // pred_fallthru
        _
    $region12: #{residual_block_forward.3} parent=5 // pred_fallthru
      _
    %p206 = scmp.lt.s32.totalorder %s13, 2
    // Predicated region
    $region21: #{residual_block_forward.3} parent=5 // pred_check
      %p207 = pneg %p206
    $region22: #{residual_block_forward.3} parent=5 // pred_check_branch
      %209 = sbr.rel (%p207) target = $region24
    $region23: #{residual_block_forward.3} parent=5 // pred_region
      // Predicated region
      $region25: #{residual_block_forward.3} parent=23 // pred_check
        %p210 = pneg %p33
      $region26: #{residual_block_forward.3} parent=23 // pred_check_branch
        %212 = sbr.rel (%p210) target = $region28
      $region27: #{residual_block_forward.3} parent=23 // pred_region
        %p213 = scmp.lt.s32.totalorder %s13, 1
        %s214 = scalar_select %p213, %s13, 1
        %s215 = smul.addr %s214, 72
        %s216 = smul.addr %s215, 4
        %s217 = scalar_lea.vmem %s0, %s216
      $region28: #{residual_block_forward.3} parent=23 // pred_fallthru
        _
    $region24: #{residual_block_forward.3} parent=5 // pred_fallthru
      _
    %p218 = scmp.le.s32.totalorder 1, %s13
    %p219 = scmp.lt.s32.totalorder %s13, 3
    %p220 = pnand %p218, %p219
    %p221 = pneg %p220
    // Predicated region
    $region29: #{residual_block_forward.3} parent=5 // pred_check
      _
    $region30: #{residual_block_forward.3} parent=5 // pred_check_branch
      %223 = sbr.rel (%p220) target = $region32
    $region31: #{residual_block_forward.3} parent=5 // pred_region
      %s224 = ssub.s32 %s13, 1
      %p225 = scmp.lt.s32.totalorder %s18, 1
      %s226 = scalar_select %p225, %s18, 1
      %s227 = smul.addr %s226, 72
      %s228 = smul.addr %s227, 4
      %s229 = scalar_lea.vmem %s0, %s228
      %p230 = pneg %p39
      %p231 = pneg %p36
      %p232 = pneg %p60
      %p233 = pneg %p57
      %p234 = pneg %p81
      %p235 = pneg %p78
      %p236 = pneg %p107
      %p237 = pneg %p104
      %p238 = scmp.lt.s32.totalorder %s18, 1
      %s239 = scalar_select %p238, %s18, 1
      %s240 = smul.addr %s239, 8
      %s241 = smul.addr %s240, 4
      %s242 = scalar_lea.vmem %s3, %s241
      %p243 = pneg %p133
      %p244 = pneg %p130
      %p245 = scmp.lt.s32.totalorder %s18, 1
      %s246 = scalar_select %p245, %s18, 1
      %s247 = smul.addr %s246, 8
      %s248 = smul.addr %s247, 4
      %s249 = scalar_lea.vmem %s4, %s248
      %p250 = pneg %p159
      %p251 = pneg %p156
      %p252 = scmp.lt.s32.totalorder %s18, 1
      %s253 = scalar_select %p252, %s18, 1
      %s254 = smul.addr %s253, 2
      %s255 = scalar_lea.vmem %s5, %s254
      %p256 = pneg %p185
      %p257 = pneg %p182
      %p258 = scmp.lt.s32.totalorder %s18, 1
      %s259 = scalar_select %p258, %s18, 1
      %s260 = smul.addr %s259, 2
      %s261 = scalar_lea.vmem %s6, %s260
      %p262 = scmp.lt.s32.totalorder %s18, 1
      %s263 = scalar_select %p262, %s18, 1
      %s264 = smul.addr %s263, 72
      %s265 = smul.addr %s264, 4
      %s266 = scalar_lea.vmem %s0, %s265
      %p267 = scmp.lt.s32.totalorder %s18, 1
      %s268 = scalar_select %p267, %s18, 1
      %s269 = smul.addr %s268, 8
      %s270 = smul.addr %s269, 4
      %s271 = scalar_lea.vmem %s3, %s270
      %p272 = scmp.lt.s32.totalorder %s18, 1
      %s273 = scalar_select %p272, %s18, 1
      %s274 = smul.addr %s273, 8
      %s275 = smul.addr %s274, 4
      %s276 = scalar_lea.vmem %s4, %s275
      %p277 = scmp.lt.s32.totalorder %s18, 1
      %s278 = scalar_select %p277, %s18, 1
      %s279 = smul.addr %s278, 2
      %s280 = scalar_lea.vmem %s5, %s279
      %p281 = scmp.lt.s32.totalorder %s18, 1
      %s282 = scalar_select %p281, %s18, 1
      %s283 = smul.addr %s282, 2
      %s284 = scalar_lea.vmem %s6, %s283
      %v285 = vld [vmem:[%s266] sm:$0xff]
      %v286 = vld [vmem:[%s266 + $0x8] sm:$0xff]
      %v287 = vld [vmem:[%s266 + $0x10] sm:$0xff]
      %v288 = vld [vmem:[%s266 + $0x18] sm:$0xff]
      %v289 = vld [vmem:[%s266 + $0x20] sm:$0xf]
      %v290 = vld [vmem:[%s266 + $0x24] sm:$0xff]
      %v291 = vld [vmem:[%s266 + $0x2c] sm:$0xff]
      %v292 = vld [vmem:[%s266 + $0x34] sm:$0xff]
      %v293 = vld [vmem:[%s266 + $0x3c] sm:$0xff]
      %v294 = vld [vmem:[%s266 + $0x44] sm:$0xf]
      %v295 = vld [vmem:[%s266 + $0x48] sm:$0xff]
      %v296 = vld [vmem:[%s266 + $0x50] sm:$0xff]
      %v297 = vld [vmem:[%s266 + $0x58] sm:$0xff]
      %v298 = vld [vmem:[%s266 + $0x60] sm:$0xff]
      %v299 = vld [vmem:[%s266 + $0x68] sm:$0xf]
      %v300 = vld [vmem:[%s266 + $0x6c] sm:$0xff]
      %v301 = vld [vmem:[%s266 + $0x74] sm:$0xff]
      %v302 = vld [vmem:[%s266 + $0x7c] sm:$0xff]
      %v303 = vld [vmem:[%s266 + $0x84] sm:$0xff]
      %v304 = vld [vmem:[%s266 + $0x8c] sm:$0xf]
      %v305 = vld [vmem:[%s266 + $0x90] sm:$0xff]
      %v306 = vld [vmem:[%s266 + $0x98] sm:$0xff]
      %v307 = vld [vmem:[%s266 + $0xa0] sm:$0xff]
      %v308 = vld [vmem:[%s266 + $0xa8] sm:$0xff]
      %v309 = vld [vmem:[%s266 + $0xb0] sm:$0xf]
      %v310 = vld [vmem:[%s266 + $0xb4] sm:$0xff]
      %v311 = vld [vmem:[%s266 + $0xbc] sm:$0xff]
      %v312 = vld [vmem:[%s266 + $0xc4] sm:$0xff]
      %v313 = vld [vmem:[%s266 + $0xcc] sm:$0xff]
      %v314 = vld [vmem:[%s266 + $0xd4] sm:$0xf]
      %v315 = vld [vmem:[%s266 + $0xd8] sm:$0xff]
      %v316 = vld [vmem:[%s266 + $0xe0] sm:$0xff]
      %v317 = vld [vmem:[%s266 + $0xe8] sm:$0xff]
      %v318 = vld [vmem:[%s266 + $0xf0] sm:$0xff]
      %v319 = vld [vmem:[%s266 + $0xf8] sm:$0xf]
      %v320 = vld [vmem:[%s266 + $0xfc] sm:$0xff]
      %v321 = vld [vmem:[%s266 + $0x104] sm:$0xff]
      %v322 = vld [vmem:[%s266 + $0x10c] sm:$0xff]
      %v323 = vld [vmem:[%s266 + $0x114] sm:$0xff]
      %v324 = vld [vmem:[%s266 + $0x11c] sm:$0xf]
      %v325 = vld [vmem:[%s1] sm:$0xf]
      %v326 = vld [vmem:[%s1 + $0x4] sm:$0xf]
      %v327 = vld [vmem:[%s1 + $0x8] sm:$0xf]
      %v328 = vld [vmem:[%s1 + $0xc] sm:$0xf]
      %v329 = vld [vmem:[%s1 + $0x10] sm:$0xf]
      %v330 = vld [vmem:[%s1 + $0x14] sm:$0xf]
      %v331 = vld [vmem:[%s1 + $0x18] sm:$0xf]
      %v332 = vld [vmem:[%s1 + $0x1c] sm:$0xf]
      %v333 = vld [vmem:[%s1 + $0x20] sm:$0xf]
      %v334 = vld [vmem:[%s1 + $0x24] sm:$0xf]
      %v335 = vld [vmem:[%s1 + $0x28] sm:$0xf]
      %v336 = vld [vmem:[%s1 + $0x2c] sm:$0xf]
      %v337 = vld [vmem:[%s1 + $0x30] sm:$0xf]
      %v338 = vld [vmem:[%s1 + $0x34] sm:$0xf]
      %v339 = vld [vmem:[%s1 + $0x38] sm:$0xf]
      %v340 = vld [vmem:[%s1 + $0x3c] sm:$0xf]
      %v341 = vld [vmem:[%s1 + $0x40] sm:$0xf]
      %v342 = vld [vmem:[%s1 + $0x44] sm:$0xf]
      %v343 = vld [vmem:[%s1 + $0x48] sm:$0xf]
      %v344 = vld [vmem:[%s1 + $0x4c] sm:$0xf]
      %v345 = vld [vmem:[%s1 + $0x50] sm:$0xf]
      %v346 = vld [vmem:[%s1 + $0x54] sm:$0xf]
      %v347 = vld [vmem:[%s1 + $0x58] sm:$0xf]
      %v348 = vld [vmem:[%s1 + $0x5c] sm:$0xf]
      %v349 = vld [vmem:[%s1 + $0x60] sm:$0xf]
      %v350 = vld [vmem:[%s1 + $0x64] sm:$0xf]
      %v351 = vld [vmem:[%s1 + $0x68] sm:$0xf]
      %v352 = vld [vmem:[%s1 + $0x6c] sm:$0xf]
      %v353 = vld [vmem:[%s1 + $0x70] sm:$0xf]
      %v354 = vld [vmem:[%s1 + $0x74] sm:$0xf]
      %v355 = vld [vmem:[%s1 + $0x78] sm:$0xf]
      %v356 = vld [vmem:[%s1 + $0x7c] sm:$0xf]
      %v357 = vld [vmem:[%s1 + $0x80] sm:$0xf]
      %v358 = vld [vmem:[%s1 + $0x84] sm:$0xf]
      %v359 = vld [vmem:[%s1 + $0x88] sm:$0xf]
      %v360 = vld [vmem:[%s1 + $0x8c] sm:$0xf]
      %v361 = vld [vmem:[%s1 + $0x90] sm:$0xf]
      %v362 = vld [vmem:[%s1 + $0x94] sm:$0xf]
      %v363 = vld [vmem:[%s1 + $0x98] sm:$0xf]
      %v364 = vld [vmem:[%s1 + $0x9c] sm:$0xf]
      %v365 = vld [vmem:[%s1 + $0xa0] sm:$0xf]
      %v366 = vld [vmem:[%s1 + $0xa4] sm:$0xf]
      %v367 = vld [vmem:[%s1 + $0xa8] sm:$0xf]
      %v368 = vld [vmem:[%s1 + $0xac] sm:$0xf]
      %v369 = vld [vmem:[%s1 + $0xb0] sm:$0xf]
      %v370 = vld [vmem:[%s1 + $0xb4] sm:$0xf]
      %v371 = vld [vmem:[%s1 + $0xb8] sm:$0xf]
      %v372 = vld [vmem:[%s1 + $0xbc] sm:$0xf]
      %v373 = vld [vmem:[%s1 + $0xc0] sm:$0xf]
      %v374 = vld [vmem:[%s1 + $0xc4] sm:$0xf]
      %v375 = vld [vmem:[%s1 + $0xc8] sm:$0xf]
      %v376 = vld [vmem:[%s1 + $0xcc] sm:$0xf]
      %v377 = vld [vmem:[%s1 + $0xd0] sm:$0xf]
      %v378 = vld [vmem:[%s1 + $0xd4] sm:$0xf]
      %v379 = vld [vmem:[%s1 + $0xd8] sm:$0xf]
      %v380 = vld [vmem:[%s1 + $0xdc] sm:$0xf]
      %v381 = vld [vmem:[%s1 + $0xe0] sm:$0xf]
      %v382 = vld [vmem:[%s1 + $0xe4] sm:$0xf]
      %v383 = vld [vmem:[%s1 + $0xe8] sm:$0xf]
      %v384 = vld [vmem:[%s1 + $0xec] sm:$0xf]
      %v385 = vld [vmem:[%s1 + $0xf0] sm:$0xf]
      %v386 = vld [vmem:[%s1 + $0xf4] sm:$0xf]
      %v387 = vld [vmem:[%s1 + $0xf8] sm:$0xf]
      %v388 = vld [vmem:[%s1 + $0xfc] sm:$0xf]
      %v389 = vld [vmem:[%s1 + $0x100] sm:$0xf]
      %v390 = vld [vmem:[%s1 + $0x104] sm:$0xf]
      %v391 = vld [vmem:[%s1 + $0x108] sm:$0xf]
      %v392 = vld [vmem:[%s1 + $0x10c] sm:$0xf]
      %v393 = vld [vmem:[%s1 + $0x110] sm:$0xf]
      %v394 = vld [vmem:[%s1 + $0x114] sm:$0xf]
      %v395 = vld [vmem:[%s1 + $0x118] sm:$0xf]
      %v396 = vld [vmem:[%s1 + $0x11c] sm:$0xf]
      %v397 = vld [vmem:[%s1 + $0x120] sm:$0xf]
      %v398 = vld [vmem:[%s1 + $0x124] sm:$0xf]
      %v399 = vld [vmem:[%s1 + $0x128] sm:$0xf]
      %v400 = vld [vmem:[%s1 + $0x12c] sm:$0xf]
      %v401 = vld [vmem:[%s1 + $0x130] sm:$0xf]
      %v402 = vld [vmem:[%s1 + $0x134] sm:$0xf]
      %v403 = vld [vmem:[%s1 + $0x138] sm:$0xf]
      %v404 = vld [vmem:[%s1 + $0x13c] sm:$0xf]
      %v405 = vld [vmem:[%s1 + $0x140] sm:$0xf]
      %v406 = vld [vmem:[%s1 + $0x144] sm:$0xf]
      %v407 = vld [vmem:[%s1 + $0x148] sm:$0xf]
      %v408 = vld [vmem:[%s1 + $0x14c] sm:$0xf]
      %v409 = vld [vmem:[%s1 + $0x150] sm:$0xf]
      %v410 = vld [vmem:[%s1 + $0x154] sm:$0xf]
      %v411 = vld [vmem:[%s1 + $0x158] sm:$0xf]
      %v412 = vld [vmem:[%s1 + $0x15c] sm:$0xf]
      %v413 = vld [vmem:[%s1 + $0x160] sm:$0xf]
      %v414 = vld [vmem:[%s1 + $0x164] sm:$0xf]
      %v415 = vld [vmem:[%s1 + $0x168] sm:$0xf]
      %v416 = vld [vmem:[%s1 + $0x16c] sm:$0xf]
      %v417 = vld [vmem:[%s1 + $0x170] sm:$0xf]
      %v418 = vld [vmem:[%s1 + $0x174] sm:$0xf]
      %v419 = vld [vmem:[%s1 + $0x178] sm:$0xf]
      %v420 = vld [vmem:[%s1 + $0x17c] sm:$0xf]
      %v421 = vld [vmem:[%s1 + $0x180] sm:$0xf]
      %v422 = vld [vmem:[%s1 + $0x184] sm:$0xf]
      %v423 = vld [vmem:[%s1 + $0x188] sm:$0xf]
      %v424 = vld [vmem:[%s1 + $0x18c] sm:$0xf]
      %v425 = vld [vmem:[%s1 + $0x190] sm:$0xf]
      %v426 = vld [vmem:[%s1 + $0x194] sm:$0xf]
      %v427 = vld [vmem:[%s1 + $0x198] sm:$0xf]
      %v428 = vld [vmem:[%s1 + $0x19c] sm:$0xf]
      %v429 = vld [vmem:[%s1 + $0x1a0] sm:$0xf]
      %v430 = vld [vmem:[%s1 + $0x1a4] sm:$0xf]
      %v431 = vld [vmem:[%s1 + $0x1a8] sm:$0xf]
      %v432 = vld [vmem:[%s1 + $0x1ac] sm:$0xf]
      %v433 = vld [vmem:[%s1 + $0x1b0] sm:$0xf]
      %v434 = vld [vmem:[%s1 + $0x1b4] sm:$0xf]
      %v435 = vld [vmem:[%s1 + $0x1b8] sm:$0xf]
      %v436 = vld [vmem:[%s1 + $0x1bc] sm:$0xf]
      %v437 = vld [vmem:[%s1 + $0x1c0] sm:$0xf]
      %v438 = vld [vmem:[%s1 + $0x1c4] sm:$0xf]
      %v439 = vld [vmem:[%s1 + $0x1c8] sm:$0xf]
      %v440 = vld [vmem:[%s1 + $0x1cc] sm:$0xf]
      %v441 = vld [vmem:[%s1 + $0x1d0] sm:$0xf]
      %v442 = vld [vmem:[%s1 + $0x1d4] sm:$0xf]
      %v443 = vld [vmem:[%s1 + $0x1d8] sm:$0xf]
      %v444 = vld [vmem:[%s1 + $0x1dc] sm:$0xf]
      %v445 = vld [vmem:[%s1 + $0x1e0] sm:$0xf]
      %v446 = vld [vmem:[%s1 + $0x1e4] sm:$0xf]
      %v447 = vld [vmem:[%s1 + $0x1e8] sm:$0xf]
      %v448 = vld [vmem:[%s1 + $0x1ec] sm:$0xf]
      %v449 = vld [vmem:[%s1 + $0x1f0] sm:$0xf]
      %v450 = vld [vmem:[%s1 + $0x1f4] sm:$0xf]
      %v451 = vld [vmem:[%s1 + $0x1f8] sm:$0xf]
      %v452 = vld [vmem:[%s1 + $0x1fc] sm:$0xf]
      %v453 = vld [vmem:[%s1 + $0x200] sm:$0xf]
      %v454 = vld [vmem:[%s1 + $0x204] sm:$0xf]
      %v455 = vld [vmem:[%s1 + $0x208] sm:$0xf]
      %v456 = vld [vmem:[%s1 + $0x20c] sm:$0xf]
      %v457 = vld [vmem:[%s1 + $0x210] sm:$0xf]
      %v458 = vld [vmem:[%s1 + $0x214] sm:$0xf]
      %v459 = vld [vmem:[%s1 + $0x218] sm:$0xf]
      %v460 = vld [vmem:[%s1 + $0x21c] sm:$0xf]
      %v461 = vld [vmem:[%s1 + $0x220] sm:$0xf]
      %v462 = vld [vmem:[%s1 + $0x224] sm:$0xf]
      %v463 = vld [vmem:[%s1 + $0x228] sm:$0xf]
      %v464 = vld [vmem:[%s1 + $0x22c] sm:$0xf]
      %v465 = vld [vmem:[%s1 + $0x230] sm:$0xf]
      %v466 = vld [vmem:[%s1 + $0x234] sm:$0xf]
      %v467 = vld [vmem:[%s1 + $0x238] sm:$0xf]
      %v468 = vld [vmem:[%s1 + $0x23c] sm:$0xf]
      %v509 = vunpack.c.l.b16 %v285
      %v510 = vunpack.c.h.b16 %v285
      %v511 = vunpack.c.l.b16 %v286
      %v512 = vunpack.c.h.b16 %v286
      %v513 = vunpack.c.l.b16 %v287
      %v514 = vunpack.c.h.b16 %v287
      %v515 = vunpack.c.l.b16 %v288
      %v516 = vunpack.c.h.b16 %v288
      %v517 = vunpack.c.l.b16 %v289
      %v518 = vunpack.c.l.b16 %v290
      %v519 = vunpack.c.h.b16 %v290
      %v520 = vunpack.c.l.b16 %v291
      %v521 = vunpack.c.h.b16 %v291
      %v522 = vunpack.c.l.b16 %v292
      %v523 = vunpack.c.h.b16 %v292
      %v524 = vunpack.c.l.b16 %v293
      %v525 = vunpack.c.h.b16 %v293
      %v526 = vunpack.c.l.b16 %v294
      %v527 = vunpack.c.l.b16 %v295
      %v528 = vunpack.c.h.b16 %v295
      %v529 = vunpack.c.l.b16 %v296
      %v530 = vunpack.c.h.b16 %v296
      %v531 = vunpack.c.l.b16 %v297
      %v532 = vunpack.c.h.b16 %v297
      %v533 = vunpack.c.l.b16 %v298
      %v534 = vunpack.c.h.b16 %v298
      %v535 = vunpack.c.l.b16 %v299
      %v536 = vunpack.c.l.b16 %v300
      %v537 = vunpack.c.h.b16 %v300
      %v538 = vunpack.c.l.b16 %v301
      %v539 = vunpack.c.h.b16 %v301
      %v540 = vunpack.c.l.b16 %v302
      %v541 = vunpack.c.h.b16 %v302
      %v542 = vunpack.c.l.b16 %v303
      %v543 = vunpack.c.h.b16 %v303
      %v544 = vunpack.c.l.b16 %v304
      %v545 = vunpack.c.l.b16 %v305
      %v546 = vunpack.c.h.b16 %v305
      %v547 = vunpack.c.l.b16 %v306
      %v548 = vunpack.c.h.b16 %v306
      %v549 = vunpack.c.l.b16 %v307
      %v550 = vunpack.c.h.b16 %v307
      %v551 = vunpack.c.l.b16 %v308
      %v552 = vunpack.c.h.b16 %v308
      %v553 = vunpack.c.l.b16 %v309
      %v554 = vunpack.c.l.b16 %v310
      %v555 = vunpack.c.h.b16 %v310
      %v556 = vunpack.c.l.b16 %v311
      %v557 = vunpack.c.h.b16 %v311
      %v558 = vunpack.c.l.b16 %v312
      %v559 = vunpack.c.h.b16 %v312
      %v560 = vunpack.c.l.b16 %v313
      %v561 = vunpack.c.h.b16 %v313
      %v562 = vunpack.c.l.b16 %v314
      %v563 = vunpack.c.l.b16 %v315
      %v564 = vunpack.c.h.b16 %v315
      %v565 = vunpack.c.l.b16 %v316
      %v566 = vunpack.c.h.b16 %v316
      %v567 = vunpack.c.l.b16 %v317
      %v568 = vunpack.c.h.b16 %v317
      %v569 = vunpack.c.l.b16 %v318
      %v570 = vunpack.c.h.b16 %v318
      %v571 = vunpack.c.l.b16 %v319
      %v572 = vunpack.c.l.b16 %v320
      %v573 = vunpack.c.h.b16 %v320
      %v574 = vunpack.c.l.b16 %v321
      %v575 = vunpack.c.h.b16 %v321
      %v576 = vunpack.c.l.b16 %v322
      %v577 = vunpack.c.h.b16 %v322
      %v578 = vunpack.c.l.b16 %v323
      %v579 = vunpack.c.h.b16 %v323
      %v580 = vunpack.c.l.b16 %v324
      %v581 = vpack.c.b16 %v518, %v509
      %v582 = vpack.c.b16 %v519, %v510
      %v583 = vpack.c.b16 %v520, %v511
      %v584 = vpack.c.b16 %v521, %v512
      %v585 = vpack.c.b16 %v522, %v513
      %v586 = vpack.c.b16 %v523, %v514
      %v587 = vpack.c.b16 %v524, %v515
      %v588 = vpack.c.b16 %v525, %v516
      %v589 = vpack.c.b16 %v526, %v517
      %v590 = vpack.c.b16 %v536, %v527
      %v591 = vpack.c.b16 %v537, %v528
      %v592 = vpack.c.b16 %v538, %v529
      %v593 = vpack.c.b16 %v539, %v530
      %v594 = vpack.c.b16 %v540, %v531
      %v595 = vpack.c.b16 %v541, %v532
      %v596 = vpack.c.b16 %v542, %v533
      %v597 = vpack.c.b16 %v543, %v534
      %v598 = vpack.c.b16 %v544, %v535
      %v599 = vpack.c.b16 %v554, %v545
      %v600 = vpack.c.b16 %v555, %v546
      %v601 = vpack.c.b16 %v556, %v547
      %v602 = vpack.c.b16 %v557, %v548
      %v603 = vpack.c.b16 %v558, %v549
      %v604 = vpack.c.b16 %v559, %v550
      %v605 = vpack.c.b16 %v560, %v551
      %v606 = vpack.c.b16 %v561, %v552
      %v607 = vpack.c.b16 %v562, %v553
      %v608 = vpack.c.b16 %v572, %v563
      %v609 = vpack.c.b16 %v573, %v564
      %v610 = vpack.c.b16 %v574, %v565
      %v611 = vpack.c.b16 %v575, %v566
      %v612 = vpack.c.b16 %v576, %v567
      %v613 = vpack.c.b16 %v577, %v568
      %v614 = vpack.c.b16 %v578, %v569
      %v615 = vpack.c.b16 %v579, %v570
      %v616 = vpack.c.b16 %v580, %v571
      %v797 = vunpack.c.l.b16 %v325
      %v798 = vunpack.c.l.b16 %v326
      %v799 = vunpack.c.l.b16 %v327
      %v800 = vunpack.c.l.b16 %v328
      %v801 = vunpack.c.l.b16 %v329
      %v802 = vunpack.c.l.b16 %v330
      %v803 = vunpack.c.l.b16 %v331
      %v804 = vunpack.c.l.b16 %v332
      %v805 = vunpack.c.l.b16 %v333
      %v806 = vunpack.c.l.b16 %v334
      %v807 = vunpack.c.l.b16 %v335
      %v808 = vunpack.c.l.b16 %v336
      %v809 = vunpack.c.l.b16 %v337
      %v810 = vunpack.c.l.b16 %v338
      %v811 = vunpack.c.l.b16 %v339
      %v812 = vunpack.c.l.b16 %v340
      %v813 = vunpack.c.l.b16 %v341
      %v814 = vunpack.c.l.b16 %v342
      %v815 = vunpack.c.l.b16 %v343
      %v816 = vunpack.c.l.b16 %v344
      %v817 = vunpack.c.l.b16 %v345
      %v818 = vunpack.c.l.b16 %v346
      %v819 = vunpack.c.l.b16 %v347
      %v820 = vunpack.c.l.b16 %v348
      %v821 = vunpack.c.l.b16 %v349
      %v822 = vunpack.c.l.b16 %v350
      %v823 = vunpack.c.l.b16 %v351
      %v824 = vunpack.c.l.b16 %v352
      %v825 = vunpack.c.l.b16 %v353
      %v826 = vunpack.c.l.b16 %v354
      %v827 = vunpack.c.l.b16 %v355
      %v828 = vunpack.c.l.b16 %v356
      %v829 = vunpack.c.l.b16 %v357
      %v830 = vunpack.c.l.b16 %v358
      %v831 = vunpack.c.l.b16 %v359
      %v832 = vunpack.c.l.b16 %v360
      %v833 = vunpack.c.l.b16 %v361
      %v834 = vunpack.c.l.b16 %v362
      %v835 = vunpack.c.l.b16 %v363
      %v836 = vunpack.c.l.b16 %v364
      %v837 = vunpack.c.l.b16 %v365
      %v838 = vunpack.c.l.b16 %v366
      %v839 = vunpack.c.l.b16 %v367
      %v840 = vunpack.c.l.b16 %v368
      %v841 = vunpack.c.l.b16 %v369
      %v842 = vunpack.c.l.b16 %v370
      %v843 = vunpack.c.l.b16 %v371
      %v844 = vunpack.c.l.b16 %v372
      %v845 = vunpack.c.l.b16 %v373
      %v846 = vunpack.c.l.b16 %v374
      %v847 = vunpack.c.l.b16 %v375
      %v848 = vunpack.c.l.b16 %v376
      %v849 = vunpack.c.l.b16 %v377
      %v850 = vunpack.c.l.b16 %v378
      %v851 = vunpack.c.l.b16 %v379
      %v852 = vunpack.c.l.b16 %v380
      %v853 = vunpack.c.l.b16 %v381
      %v854 = vunpack.c.l.b16 %v382
      %v855 = vunpack.c.l.b16 %v383
      %v856 = vunpack.c.l.b16 %v384
      %v857 = vunpack.c.l.b16 %v385
      %v858 = vunpack.c.l.b16 %v386
      %v859 = vunpack.c.l.b16 %v387
      %v860 = vunpack.c.l.b16 %v388
      %v861 = vunpack.c.l.b16 %v389
      %v862 = vunpack.c.l.b16 %v390
      %v863 = vunpack.c.l.b16 %v391
      %v864 = vunpack.c.l.b16 %v392
      %v865 = vunpack.c.l.b16 %v393
      %v866 = vunpack.c.l.b16 %v394
      %v867 = vunpack.c.l.b16 %v395
      %v868 = vunpack.c.l.b16 %v396
      %v869 = vunpack.c.l.b16 %v397
      %v870 = vunpack.c.l.b16 %v398
      %v871 = vunpack.c.l.b16 %v399
      %v872 = vunpack.c.l.b16 %v400
      %v873 = vunpack.c.l.b16 %v401
      %v874 = vunpack.c.l.b16 %v402
      %v875 = vunpack.c.l.b16 %v403
      %v876 = vunpack.c.l.b16 %v404
      %v877 = vunpack.c.l.b16 %v405
      %v878 = vunpack.c.l.b16 %v406
      %v879 = vunpack.c.l.b16 %v407
      %v880 = vunpack.c.l.b16 %v408
      %v881 = vunpack.c.l.b16 %v409
      %v882 = vunpack.c.l.b16 %v410
      %v883 = vunpack.c.l.b16 %v411
      %v884 = vunpack.c.l.b16 %v412
      %v885 = vunpack.c.l.b16 %v413
      %v886 = vunpack.c.l.b16 %v414
      %v887 = vunpack.c.l.b16 %v415
      %v888 = vunpack.c.l.b16 %v416
      %v889 = vunpack.c.l.b16 %v417
      %v890 = vunpack.c.l.b16 %v418
      %v891 = vunpack.c.l.b16 %v419
      %v892 = vunpack.c.l.b16 %v420
      %v893 = vunpack.c.l.b16 %v421
      %v894 = vunpack.c.l.b16 %v422
      %v895 = vunpack.c.l.b16 %v423
      %v896 = vunpack.c.l.b16 %v424
      %v897 = vunpack.c.l.b16 %v425
      %v898 = vunpack.c.l.b16 %v426
      %v899 = vunpack.c.l.b16 %v427
      %v900 = vunpack.c.l.b16 %v428
      %v901 = vunpack.c.l.b16 %v429
      %v902 = vunpack.c.l.b16 %v430
      %v903 = vunpack.c.l.b16 %v431
      %v904 = vunpack.c.l.b16 %v432
      %v905 = vunpack.c.l.b16 %v433
      %v906 = vunpack.c.l.b16 %v434
      %v907 = vunpack.c.l.b16 %v435
      %v908 = vunpack.c.l.b16 %v436
      %v909 = vunpack.c.l.b16 %v437
      %v910 = vunpack.c.l.b16 %v438
      %v911 = vunpack.c.l.b16 %v439
      %v912 = vunpack.c.l.b16 %v440
      %v913 = vunpack.c.l.b16 %v441
      %v914 = vunpack.c.l.b16 %v442
      %v915 = vunpack.c.l.b16 %v443
      %v916 = vunpack.c.l.b16 %v444
      %v917 = vunpack.c.l.b16 %v445
      %v918 = vunpack.c.l.b16 %v446
      %v919 = vunpack.c.l.b16 %v447
      %v920 = vunpack.c.l.b16 %v448
      %v921 = vunpack.c.l.b16 %v449
      %v922 = vunpack.c.l.b16 %v450
      %v923 = vunpack.c.l.b16 %v451
      %v924 = vunpack.c.l.b16 %v452
      %v925 = vunpack.c.l.b16 %v453
      %v926 = vunpack.c.l.b16 %v454
      %v927 = vunpack.c.l.b16 %v455
      %v928 = vunpack.c.l.b16 %v456
      %v929 = vunpack.c.l.b16 %v457
      %v930 = vunpack.c.l.b16 %v458
      %v931 = vunpack.c.l.b16 %v459
      %v932 = vunpack.c.l.b16 %v460
      %v933 = vunpack.c.l.b16 %v461
      %v934 = vunpack.c.l.b16 %v462
      %v935 = vunpack.c.l.b16 %v463
      %v936 = vunpack.c.l.b16 %v464
      %v937 = vunpack.c.l.b16 %v465
      %v938 = vunpack.c.l.b16 %v466
      %v939 = vunpack.c.l.b16 %v467
      %v940 = vunpack.c.l.b16 %v468
      %v941 = vpack.c.b16 %v798, %v797
      %v942 = vpack.c.b16 %v800, %v799
      %v943 = vpack.c.b16 %v802, %v801
      %v944 = vpack.c.b16 %v804, %v803
      %v945 = vpack.c.b16 %v806, %v805
      %v946 = vpack.c.b16 %v808, %v807
      %v947 = vpack.c.b16 %v810, %v809
      %v948 = vpack.c.b16 %v812, %v811
      %v949 = vpack.c.b16 %v814, %v813
      %v950 = vpack.c.b16 %v816, %v815
      %v951 = vpack.c.b16 %v818, %v817
      %v952 = vpack.c.b16 %v820, %v819
      %v953 = vpack.c.b16 %v822, %v821
      %v954 = vpack.c.b16 %v824, %v823
      %v955 = vpack.c.b16 %v826, %v825
      %v956 = vpack.c.b16 %v828, %v827
      %v957 = vpack.c.b16 %v830, %v829
      %v958 = vpack.c.b16 %v832, %v831
      %v959 = vpack.c.b16 %v834, %v833
      %v960 = vpack.c.b16 %v836, %v835
      %v961 = vpack.c.b16 %v838, %v837
      %v962 = vpack.c.b16 %v840, %v839
      %v963 = vpack.c.b16 %v842, %v841
      %v964 = vpack.c.b16 %v844, %v843
      %v965 = vpack.c.b16 %v846, %v845
      %v966 = vpack.c.b16 %v848, %v847
      %v967 = vpack.c.b16 %v850, %v849
      %v968 = vpack.c.b16 %v852, %v851
      %v969 = vpack.c.b16 %v854, %v853
      %v970 = vpack.c.b16 %v856, %v855
      %v971 = vpack.c.b16 %v858, %v857
      %v972 = vpack.c.b16 %v860, %v859
      %v973 = vpack.c.b16 %v862, %v861
      %v974 = vpack.c.b16 %v864, %v863
      %v975 = vpack.c.b16 %v866, %v865
      %v976 = vpack.c.b16 %v868, %v867
      %v977 = vpack.c.b16 %v870, %v869
      %v978 = vpack.c.b16 %v872, %v871
      %v979 = vpack.c.b16 %v874, %v873
      %v980 = vpack.c.b16 %v876, %v875
      %v981 = vpack.c.b16 %v878, %v877
      %v982 = vpack.c.b16 %v880, %v879
      %v983 = vpack.c.b16 %v882, %v881
      %v984 = vpack.c.b16 %v884, %v883
      %v985 = vpack.c.b16 %v886, %v885
      %v986 = vpack.c.b16 %v888, %v887
      %v987 = vpack.c.b16 %v890, %v889
      %v988 = vpack.c.b16 %v892, %v891
      %v989 = vpack.c.b16 %v894, %v893
      %v990 = vpack.c.b16 %v896, %v895
      %v991 = vpack.c.b16 %v898, %v897
      %v992 = vpack.c.b16 %v900, %v899
      %v993 = vpack.c.b16 %v902, %v901
      %v994 = vpack.c.b16 %v904, %v903
      %v995 = vpack.c.b16 %v906, %v905
      %v996 = vpack.c.b16 %v908, %v907
      %v997 = vpack.c.b16 %v910, %v909
      %v998 = vpack.c.b16 %v912, %v911
      %v999 = vpack.c.b16 %v914, %v913
      %v1000 = vpack.c.b16 %v916, %v915
      %v1001 = vpack.c.b16 %v918, %v917
      %v1002 = vpack.c.b16 %v920, %v919
      %v1003 = vpack.c.b16 %v922, %v921
      %v1004 = vpack.c.b16 %v924, %v923
      %v1005 = vpack.c.b16 %v926, %v925
      %v1006 = vpack.c.b16 %v928, %v927
      %v1007 = vpack.c.b16 %v930, %v929
      %v1008 = vpack.c.b16 %v932, %v931
      %v1009 = vpack.c.b16 %v934, %v933
      %v1010 = vpack.c.b16 %v936, %v935
      %v1011 = vpack.c.b16 %v938, %v937
      %v1012 = vpack.c.b16 %v940, %v939
      %1085 = vmatpush.bf16.msra.mxu0 %v948
      %1086 = vmatpush.bf16.msra.mxu0 %v947
      %1087 = vmatpush.bf16.msra.mxu0 %v946
      %1088 = vmatpush.bf16.msra.mxu0 %v945
      %1089 = vmatpush.bf16.msra.mxu0 %v944
      %1090 = vmatpush.bf16.msra.mxu0 %v943
      %1091 = vmatpush.bf16.msra.mxu0 %v942
      %1092 = vmatpush.bf16.msra.mxu0 %v941
      %1093 = vmatmul.bf16.gmra.mxu0 %v581
      %v1094 = vpop.f32.mrf.mxu0
      %v1095 = vadd.f32 0.0, %v1094
      %v1096 = vpop.f32.mrf.mxu0
      %v1097 = vadd.f32 0.0, %v1096
      %1098 = vmatmul.bf16.gmra.mxu0 %v590
      %v1099 = vpop.f32.mrf.mxu0
      %v1100 = vadd.f32 0.0, %v1099
      %v1101 = vpop.f32.mrf.mxu0
      %v1102 = vadd.f32 0.0, %v1101
      %1103 = vmatmul.bf16.gmra.mxu0 %v599
      %v1104 = vpop.f32.mrf.mxu0
      %v1105 = vadd.f32 0.0, %v1104
      %v1106 = vpop.f32.mrf.mxu0
      %v1107 = vadd.f32 0.0, %v1106
      %1108 = vmatmul.bf16.gmra.mxu0 %v608
      %v1109 = vpop.f32.mrf.mxu0
      %v1110 = vadd.f32 0.0, %v1109
      %v1111 = vpop.f32.mrf.mxu0
      %v1112 = vadd.f32 0.0, %v1111
      %1113 = vdwg.mxu0
      %1114 = vmatpush.bf16.msra.mxu0 %v956
      %1115 = vmatpush.bf16.msra.mxu0 %v955
      %1116 = vmatpush.bf16.msra.mxu0 %v954
      %1117 = vmatpush.bf16.msra.mxu0 %v953
      %1118 = vmatpush.bf16.msra.mxu0 %v952
      %1119 = vmatpush.bf16.msra.mxu0 %v951
      %1120 = vmatpush.bf16.msra.mxu0 %v950
      %1121 = vmatpush.bf16.msra.mxu0 %v949
      %1122 = vmatmul.bf16.gmra.mxu0 %v582
      %v1123 = vpop.f32.mrf.mxu0
      %v1124 = vadd.f32 %v1095, %v1123
      %v1125 = vpop.f32.mrf.mxu0
      %v1126 = vadd.f32 %v1097, %v1125
      %1127 = vmatmul.bf16.gmra.mxu0 %v591
      %v1128 = vpop.f32.mrf.mxu0
      %v1129 = vadd.f32 %v1100, %v1128
      %v1130 = vpop.f32.mrf.mxu0
      %v1131 = vadd.f32 %v1102, %v1130
      %1132 = vmatmul.bf16.gmra.mxu0 %v600
      %v1133 = vpop.f32.mrf.mxu0
      %v1134 = vadd.f32 %v1105, %v1133
      %v1135 = vpop.f32.mrf.mxu0
      %v1136 = vadd.f32 %v1107, %v1135
      %1137 = vmatmul.bf16.gmra.mxu0 %v609
      %v1138 = vpop.f32.mrf.mxu0
      %v1139 = vadd.f32 %v1110, %v1138
      %v1140 = vpop.f32.mrf.mxu0
      %v1141 = vadd.f32 %v1112, %v1140
      %1142 = vdwg.mxu0
      %1143 = vmatpush.bf16.msra.mxu0 %v964
      %1144 = vmatpush.bf16.msra.mxu0 %v963
      %1145 = vmatpush.bf16.msra.mxu0 %v962
      %1146 = vmatpush.bf16.msra.mxu0 %v961
      %1147 = vmatpush.bf16.msra.mxu0 %v960
      %1148 = vmatpush.bf16.msra.mxu0 %v959
      %1149 = vmatpush.bf16.msra.mxu0 %v958
      %1150 = vmatpush.bf16.msra.mxu0 %v957
      %1151 = vmatmul.bf16.gmra.mxu0 %v583
      %v1152 = vpop.f32.mrf.mxu0
      %v1153 = vadd.f32 %v1124, %v1152
      %v1154 = vpop.f32.mrf.mxu0
      %v1155 = vadd.f32 %v1126, %v1154
      %1156 = vmatmul.bf16.gmra.mxu0 %v592
      %v1157 = vpop.f32.mrf.mxu0
      %v1158 = vadd.f32 %v1129, %v1157
      %v1159 = vpop.f32.mrf.mxu0
      %v1160 = vadd.f32 %v1131, %v1159
      %1161 = vmatmul.bf16.gmra.mxu0 %v601
      %v1162 = vpop.f32.mrf.mxu0
      %v1163 = vadd.f32 %v1134, %v1162
      %v1164 = vpop.f32.mrf.mxu0
      %v1165 = vadd.f32 %v1136, %v1164
      %1166 = vmatmul.bf16.gmra.mxu0 %v610
      %v1167 = vpop.f32.mrf.mxu0
      %v1168 = vadd.f32 %v1139, %v1167
      %v1169 = vpop.f32.mrf.mxu0
      %v1170 = vadd.f32 %v1141, %v1169
      %1171 = vdwg.mxu0
      %1172 = vmatpush.bf16.msra.mxu0 %v972
      %1173 = vmatpush.bf16.msra.mxu0 %v971
      %1174 = vmatpush.bf16.msra.mxu0 %v970
      %1175 = vmatpush.bf16.msra.mxu0 %v969
      %1176 = vmatpush.bf16.msra.mxu0 %v968
      %1177 = vmatpush.bf16.msra.mxu0 %v967
      %1178 = vmatpush.bf16.msra.mxu0 %v966
      %1179 = vmatpush.bf16.msra.mxu0 %v965
      %1180 = vmatmul.bf16.gmra.mxu0 %v584
      %v1181 = vpop.f32.mrf.mxu0
      %v1182 = vadd.f32 %v1153, %v1181
      %v1183 = vpop.f32.mrf.mxu0
      %v1184 = vadd.f32 %v1155, %v1183
      %1185 = vmatmul.bf16.gmra.mxu0 %v593
      %v1186 = vpop.f32.mrf.mxu0
      %v1187 = vadd.f32 %v1158, %v1186
      %v1188 = vpop.f32.mrf.mxu0
      %v1189 = vadd.f32 %v1160, %v1188
      %1190 = vmatmul.bf16.gmra.mxu0 %v602
      %v1191 = vpop.f32.mrf.mxu0
      %v1192 = vadd.f32 %v1163, %v1191
      %v1193 = vpop.f32.mrf.mxu0
      %v1194 = vadd.f32 %v1165, %v1193
      %1195 = vmatmul.bf16.gmra.mxu0 %v611
      %v1196 = vpop.f32.mrf.mxu0
      %v1197 = vadd.f32 %v1168, %v1196
      %v1198 = vpop.f32.mrf.mxu0
      %v1199 = vadd.f32 %v1170, %v1198
      %1200 = vdwg.mxu0
      %1201 = vmatpush.bf16.msra.mxu0 %v980
      %1202 = vmatpush.bf16.msra.mxu0 %v979
      %1203 = vmatpush.bf16.msra.mxu0 %v978
      %1204 = vmatpush.bf16.msra.mxu0 %v977
      %1205 = vmatpush.bf16.msra.mxu0 %v976
      %1206 = vmatpush.bf16.msra.mxu0 %v975
      %1207 = vmatpush.bf16.msra.mxu0 %v974
      %1208 = vmatpush.bf16.msra.mxu0 %v973
      %1209 = vmatmul.bf16.gmra.mxu0 %v585
      %v1210 = vpop.f32.mrf.mxu0
      %v1211 = vadd.f32 %v1182, %v1210
      %v1212 = vpop.f32.mrf.mxu0
      %v1213 = vadd.f32 %v1184, %v1212
      %1214 = vmatmul.bf16.gmra.mxu0 %v594
      %v1215 = vpop.f32.mrf.mxu0
      %v1216 = vadd.f32 %v1187, %v1215
      %v1217 = vpop.f32.mrf.mxu0
      %v1218 = vadd.f32 %v1189, %v1217
      %1219 = vmatmul.bf16.gmra.mxu0 %v603
      %v1220 = vpop.f32.mrf.mxu0
      %v1221 = vadd.f32 %v1192, %v1220
      %v1222 = vpop.f32.mrf.mxu0
      %v1223 = vadd.f32 %v1194, %v1222
      %1224 = vmatmul.bf16.gmra.mxu0 %v612
      %v1225 = vpop.f32.mrf.mxu0
      %v1226 = vadd.f32 %v1197, %v1225
      %v1227 = vpop.f32.mrf.mxu0
      %v1228 = vadd.f32 %v1199, %v1227
      %1229 = vdwg.mxu0
      %1230 = vmatpush.bf16.msra.mxu0 %v988
      %1231 = vmatpush.bf16.msra.mxu0 %v987
      %1232 = vmatpush.bf16.msra.mxu0 %v986
      %1233 = vmatpush.bf16.msra.mxu0 %v985
      %1234 = vmatpush.bf16.msra.mxu0 %v984
      %1235 = vmatpush.bf16.msra.mxu0 %v983
      %1236 = vmatpush.bf16.msra.mxu0 %v982
      %1237 = vmatpush.bf16.msra.mxu0 %v981
      %1238 = vmatmul.bf16.gmra.mxu0 %v586
      %v1239 = vpop.f32.mrf.mxu0
      %v1240 = vadd.f32 %v1211, %v1239
      %v1241 = vpop.f32.mrf.mxu0
      %v1242 = vadd.f32 %v1213, %v1241
      %1243 = vmatmul.bf16.gmra.mxu0 %v595
      %v1244 = vpop.f32.mrf.mxu0
      %v1245 = vadd.f32 %v1216, %v1244
      %v1246 = vpop.f32.mrf.mxu0
      %v1247 = vadd.f32 %v1218, %v1246
      %1248 = vmatmul.bf16.gmra.mxu0 %v604
      %v1249 = vpop.f32.mrf.mxu0
      %v1250 = vadd.f32 %v1221, %v1249
      %v1251 = vpop.f32.mrf.mxu0
      %v1252 = vadd.f32 %v1223, %v1251
      %1253 = vmatmul.bf16.gmra.mxu0 %v613
      %v1254 = vpop.f32.mrf.mxu0
      %v1255 = vadd.f32 %v1226, %v1254
      %v1256 = vpop.f32.mrf.mxu0
      %v1257 = vadd.f32 %v1228, %v1256
      %1258 = vdwg.mxu0
      %1259 = vmatpush.bf16.msra.mxu0 %v996
      %1260 = vmatpush.bf16.msra.mxu0 %v995
      %1261 = vmatpush.bf16.msra.mxu0 %v994
      %1262 = vmatpush.bf16.msra.mxu0 %v993
      %1263 = vmatpush.bf16.msra.mxu0 %v992
      %1264 = vmatpush.bf16.msra.mxu0 %v991
      %1265 = vmatpush.bf16.msra.mxu0 %v990
      %1266 = vmatpush.bf16.msra.mxu0 %v989
      %1267 = vmatmul.bf16.gmra.mxu0 %v587
      %v1268 = vpop.f32.mrf.mxu0
      %v1269 = vadd.f32 %v1240, %v1268
      %v1270 = vpop.f32.mrf.mxu0
      %v1271 = vadd.f32 %v1242, %v1270
      %1272 = vmatmul.bf16.gmra.mxu0 %v596
      %v1273 = vpop.f32.mrf.mxu0
      %v1274 = vadd.f32 %v1245, %v1273
      %v1275 = vpop.f32.mrf.mxu0
      %v1276 = vadd.f32 %v1247, %v1275
      %1277 = vmatmul.bf16.gmra.mxu0 %v605
      %v1278 = vpop.f32.mrf.mxu0
      %v1279 = vadd.f32 %v1250, %v1278
      %v1280 = vpop.f32.mrf.mxu0
      %v1281 = vadd.f32 %v1252, %v1280
      %1282 = vmatmul.bf16.gmra.mxu0 %v614
      %v1283 = vpop.f32.mrf.mxu0
      %v1284 = vadd.f32 %v1255, %v1283
      %v1285 = vpop.f32.mrf.mxu0
      %v1286 = vadd.f32 %v1257, %v1285
      %1287 = vdwg.mxu0
      %1288 = vmatpush.bf16.msra.mxu0 %v1004
      %1289 = vmatpush.bf16.msra.mxu0 %v1003
      %1290 = vmatpush.bf16.msra.mxu0 %v1002
      %1291 = vmatpush.bf16.msra.mxu0 %v1001
      %1292 = vmatpush.bf16.msra.mxu0 %v1000
      %1293 = vmatpush.bf16.msra.mxu0 %v999
      %1294 = vmatpush.bf16.msra.mxu0 %v998
      %1295 = vmatpush.bf16.msra.mxu0 %v997
      %1296 = vmatmul.bf16.gmra.mxu0 %v588
      %v1297 = vpop.f32.mrf.mxu0
      %v1298 = vadd.f32 %v1269, %v1297
      %v1299 = vpop.f32.mrf.mxu0
      %v1300 = vadd.f32 %v1271, %v1299
      %1301 = vmatmul.bf16.gmra.mxu0 %v597
      %v1302 = vpop.f32.mrf.mxu0
      %v1303 = vadd.f32 %v1274, %v1302
      %v1304 = vpop.f32.mrf.mxu0
      %v1305 = vadd.f32 %v1276, %v1304
      %1306 = vmatmul.bf16.gmra.mxu0 %v606
      %v1307 = vpop.f32.mrf.mxu0
      %v1308 = vadd.f32 %v1279, %v1307
      %v1309 = vpop.f32.mrf.mxu0
      %v1310 = vadd.f32 %v1281, %v1309
      %1311 = vmatmul.bf16.gmra.mxu0 %v615
      %v1312 = vpop.f32.mrf.mxu0
      %v1313 = vadd.f32 %v1284, %v1312
      %v1314 = vpop.f32.mrf.mxu0
      %v1315 = vadd.f32 %v1286, %v1314
      %1316 = vdwg.mxu0
      %1317 = vmatpush.bf16.msra.mxu0 %v1012
      %1318 = vmatpush.bf16.msra.mxu0 %v1011
      %1319 = vmatpush.bf16.msra.mxu0 %v1010
      %1320 = vmatpush.bf16.msra.mxu0 %v1009
      %1321 = vmatpush.bf16.msra.mxu0 %v1008
      %1322 = vmatpush.bf16.msra.mxu0 %v1007
      %1323 = vmatpush.bf16.msra.mxu0 %v1006
      %1324 = vmatpush.bf16.msra.mxu0 %v1005
      %1325 = vmatmul.bf16.gmra.mxu0 %v589
      %v1326 = vpop.f32.mrf.mxu0
      %v1327 = vadd.f32 %v1298, %v1326
      %v1328 = vpop.f32.mrf.mxu0
      %v1329 = vadd.f32 %v1300, %v1328
      %1330 = vmatmul.bf16.gmra.mxu0 %v598
      %v1331 = vpop.f32.mrf.mxu0
      %v1332 = vadd.f32 %v1303, %v1331
      %v1333 = vpop.f32.mrf.mxu0
      %v1334 = vadd.f32 %v1305, %v1333
      %1335 = vmatmul.bf16.gmra.mxu0 %v607
      %v1336 = vpop.f32.mrf.mxu0
      %v1337 = vadd.f32 %v1308, %v1336
      %v1338 = vpop.f32.mrf.mxu0
      %v1339 = vadd.f32 %v1310, %v1338
      %1340 = vmatmul.bf16.gmra.mxu0 %v616
      %v1341 = vpop.f32.mrf.mxu0
      %v1342 = vadd.f32 %v1313, %v1341
      %v1343 = vpop.f32.mrf.mxu0
      %v1344 = vadd.f32 %v1315, %v1343
      %1345 = vdwg.mxu0
      %v1346 = vld [vmem:[%s2] sm:$0xf]
      %v1347 = vld [vmem:[%s2 + $0x4] sm:$0xf]
      %v1348 = vld [vmem:[%s2 + $0x8] sm:$0xf]
      %v1349 = vld [vmem:[%s2 + $0xc] sm:$0xf]
      %v1350 = vld [vmem:[%s2 + $0x10] sm:$0xf]
      %v1351 = vld [vmem:[%s2 + $0x14] sm:$0xf]
      %v1352 = vld [vmem:[%s2 + $0x18] sm:$0xf]
      %v1353 = vld [vmem:[%s2 + $0x1c] sm:$0xf]
      %v1354 = vld [vmem:[%s2 + $0x20] sm:$0xf]
      %v1355 = vld [vmem:[%s2 + $0x24] sm:$0xf]
      %v1356 = vld [vmem:[%s2 + $0x28] sm:$0xf]
      %v1357 = vld [vmem:[%s2 + $0x2c] sm:$0xf]
      %v1358 = vld [vmem:[%s2 + $0x30] sm:$0xf]
      %v1359 = vld [vmem:[%s2 + $0x34] sm:$0xf]
      %v1360 = vld [vmem:[%s2 + $0x38] sm:$0xf]
      %v1361 = vld [vmem:[%s2 + $0x3c] sm:$0xf]
      %v1378 = vunpack.c.l.b16 %v1346
      %v1379 = vunpack.c.l.b16 %v1347
      %v1380 = vunpack.c.l.b16 %v1348
      %v1381 = vunpack.c.l.b16 %v1349
      %v1382 = vunpack.c.l.b16 %v1350
      %v1383 = vunpack.c.l.b16 %v1351
      %v1384 = vunpack.c.l.b16 %v1352
      %v1385 = vunpack.c.l.b16 %v1353
      %v1386 = vunpack.c.l.b16 %v1354
      %v1387 = vunpack.c.l.b16 %v1355
      %v1388 = vunpack.c.l.b16 %v1356
      %v1389 = vunpack.c.l.b16 %v1357
      %v1390 = vunpack.c.l.b16 %v1358
      %v1391 = vunpack.c.l.b16 %v1359
      %v1392 = vunpack.c.l.b16 %v1360
      %v1393 = vunpack.c.l.b16 %v1361
      %v1394 = vpack.c.b16 %v1379, %v1378
      %v1395 = vpack.c.b16 %v1381, %v1380
      %v1396 = vpack.c.b16 %v1383, %v1382
      %v1397 = vpack.c.b16 %v1385, %v1384
      %v1398 = vpack.c.b16 %v1387, %v1386
      %v1399 = vpack.c.b16 %v1389, %v1388
      %v1400 = vpack.c.b16 %v1391, %v1390
      %v1401 = vpack.c.b16 %v1393, %v1392
      %1410 = vmatpush.bf16.msra.mxu0 %v1401
      %1411 = vmatpush.bf16.msra.mxu0 %v1400
      %1412 = vmatpush.bf16.msra.mxu0 %v1399
      %1413 = vmatpush.bf16.msra.mxu0 %v1398
      %1414 = vmatpush.bf16.msra.mxu0 %v1397
      %1415 = vmatpush.bf16.msra.mxu0 %v1396
      %1416 = vmatpush.bf16.msra.mxu0 %v1395
      %1417 = vmatpush.bf16.msra.mxu0 %v1394
      %1418 = vmatmul.bf16.gmra.mxu0 %v585
      %v1419 = vpop.f32.mrf.mxu0
      %v1420 = vadd.f32 0.0, %v1419
      %v1421 = vpop.f32.mrf.mxu0
      %v1422 = vadd.f32 0.0, %v1421
      %1423 = vmatmul.bf16.gmra.mxu0 %v594
      %v1424 = vpop.f32.mrf.mxu0
      %v1425 = vadd.f32 0.0, %v1424
      %v1426 = vpop.f32.mrf.mxu0
      %v1427 = vadd.f32 0.0, %v1426
      %1428 = vmatmul.bf16.gmra.mxu0 %v603
      %v1429 = vpop.f32.mrf.mxu0
      %v1430 = vadd.f32 0.0, %v1429
      %v1431 = vpop.f32.mrf.mxu0
      %v1432 = vadd.f32 0.0, %v1431
      %1433 = vmatmul.bf16.gmra.mxu0 %v612
      %v1434 = vpop.f32.mrf.mxu0
      %v1435 = vadd.f32 0.0, %v1434
      %v1436 = vpop.f32.mrf.mxu0
      %v1437 = vadd.f32 0.0, %v1436
      %1438 = vdwg.mxu0
      %v1439 = vadd.f32 %v1327, %v1329
      %v1440 = vadd.f32 %v1439, %v1332
      %v1441 = vadd.f32 %v1440, %v1334
      %v1442 = vadd.f32 %v1441, %v1337
      %v1443 = vadd.f32 %v1442, %v1339
      %v1444 = vadd.f32 %v1443, %v1342
      %v1445 = vadd.f32 %v1444, %v1344
      %v1446 = vrot.slane %v1445, 4
      %v1447 = vadd.f32 %v1445, %v1446
      %v1448 = vrot.slane %v1447, 2
      %v1449 = vadd.f32 %v1447, %v1448
      %v1450 = vrot.slane %v1449, 1
      %v1451 = vadd.f32 %v1449, %v1450
      %v1452 = vmul.f32 %v1327, %v1327
      %v1453 = vmul.f32 %v1329, %v1329
      %v1454 = vmul.f32 %v1332, %v1332
      %v1455 = vmul.f32 %v1334, %v1334
      %v1456 = vmul.f32 %v1337, %v1337
      %v1457 = vmul.f32 %v1339, %v1339
      %v1458 = vmul.f32 %v1342, %v1342
      %v1459 = vmul.f32 %v1344, %v1344
      %v1460 = vadd.f32 %v1452, %v1453
      %v1461 = vadd.f32 %v1460, %v1454
      %v1462 = vadd.f32 %v1461, %v1455
      %v1463 = vadd.f32 %v1462, %v1456
      %v1464 = vadd.f32 %v1463, %v1457
      %v1465 = vadd.f32 %v1464, %v1458
      %v1466 = vadd.f32 %v1465, %v1459
      %v1467 = vrot.slane %v1466, 4
      %v1468 = vadd.f32 %v1466, %v1467
      %v1469 = vrot.slane %v1468, 2
      %v1470 = vadd.f32 %v1468, %v1469
      %v1471 = vrot.slane %v1470, 1
      %v1472 = vadd.f32 %v1470, %v1471
      %vm1473 = vcmask 1040384
      %v1474 = vsel %vm1473, %v1451, %v1472
      %1475 = vst [vmem:[%s280] sm:$0x3] %v1474
      %v1476 = vadd.f32 %v1420, %v1422
      %v1477 = vadd.f32 %v1476, %v1425
      %v1478 = vadd.f32 %v1477, %v1427
      %v1479 = vadd.f32 %v1478, %v1430
      %v1480 = vadd.f32 %v1479, %v1432
      %v1481 = vadd.f32 %v1480, %v1435
      %v1482 = vadd.f32 %v1481, %v1437
      %v1483 = vrot.slane %v1482, 4
      %v1484 = vadd.f32 %v1482, %v1483
      %v1485 = vrot.slane %v1484, 2
      %v1486 = vadd.f32 %v1484, %v1485
      %v1487 = vrot.slane %v1486, 1
      %v1488 = vadd.f32 %v1486, %v1487
      %v1489 = vmul.f32 %v1420, %v1420
      %v1490 = vmul.f32 %v1422, %v1422
      %v1491 = vmul.f32 %v1425, %v1425
      %v1492 = vmul.f32 %v1427, %v1427
      %v1493 = vmul.f32 %v1430, %v1430
      %v1494 = vmul.f32 %v1432, %v1432
      %v1495 = vmul.f32 %v1435, %v1435
      %v1496 = vmul.f32 %v1437, %v1437
      %v1497 = vadd.f32 %v1489, %v1490
      %v1498 = vadd.f32 %v1497, %v1491
      %v1499 = vadd.f32 %v1498, %v1492
      %v1500 = vadd.f32 %v1499, %v1493
      %v1501 = vadd.f32 %v1500, %v1494
      %v1502 = vadd.f32 %v1501, %v1495
      %v1503 = vadd.f32 %v1502, %v1496
      %v1504 = vrot.slane %v1503, 4
      %v1505 = vadd.f32 %v1503, %v1504
      %v1506 = vrot.slane %v1505, 2
      %v1507 = vadd.f32 %v1505, %v1506
      %v1508 = vrot.slane %v1507, 1
      %v1509 = vadd.f32 %v1507, %v1508
      %v1510 = vsel %vm1473, %v1488, %v1509
      %1511 = vst [vmem:[%s284] sm:$0x3] %v1510
      %v1512 = vpack.c.bf16 %v1327, %v1327
      %v1513 = vpack.c.bf16 %v1329, %v1329
      %v1514 = vpack.c.bf16 %v1332, %v1332
      %v1515 = vpack.c.bf16 %v1334, %v1334
      %v1516 = vpack.c.bf16 %v1337, %v1337
      %v1517 = vpack.c.bf16 %v1339, %v1339
      %v1518 = vpack.c.bf16 %v1342, %v1342
      %v1519 = vpack.c.bf16 %v1344, %v1344
      %1520 = vst [vmem:[%s271] sm:$0xf] %v1512
      %1521 = vst [vmem:[%s271 + $0x4] sm:$0xf] %v1513
      %1522 = vst [vmem:[%s271 + $0x8] sm:$0xf] %v1514
      %1523 = vst [vmem:[%s271 + $0xc] sm:$0xf] %v1515
      %1524 = vst [vmem:[%s271 + $0x10] sm:$0xf] %v1516
      %1525 = vst [vmem:[%s271 + $0x14] sm:$0xf] %v1517
      %1526 = vst [vmem:[%s271 + $0x18] sm:$0xf] %v1518
      %1527 = vst [vmem:[%s271 + $0x1c] sm:$0xf] %v1519
      %v1528 = vpack.c.bf16 %v1420, %v1420
      %v1529 = vpack.c.bf16 %v1422, %v1422
      %v1530 = vpack.c.bf16 %v1425, %v1425
      %v1531 = vpack.c.bf16 %v1427, %v1427
      %v1532 = vpack.c.bf16 %v1430, %v1430
      %v1533 = vpack.c.bf16 %v1432, %v1432
      %v1534 = vpack.c.bf16 %v1435, %v1435
      %v1535 = vpack.c.bf16 %v1437, %v1437
      %1536 = vst [vmem:[%s276] sm:$0xf] %v1528
      %1537 = vst [vmem:[%s276 + $0x4] sm:$0xf] %v1529
      %1538 = vst [vmem:[%s276 + $0x8] sm:$0xf] %v1530
      %1539 = vst [vmem:[%s276 + $0xc] sm:$0xf] %v1531
      %1540 = vst [vmem:[%s276 + $0x10] sm:$0xf] %v1532
      %1541 = vst [vmem:[%s276 + $0x14] sm:$0xf] %v1533
      %1542 = vst [vmem:[%s276 + $0x18] sm:$0xf] %v1534
      %1543 = vst [vmem:[%s276 + $0x1c] sm:$0xf] %v1535
      %p1544 = scmp.lt.s32.totalorder %s18, 1
      %s1545 = scalar_select %p1544, %s18, 1
      %s1546 = smul.addr %s1545, 8
      %s1547 = smul.addr %s1546, 4
      %s1548 = scalar_lea.vmem %s3, %s1547
      %p1549 = scmp.lt.s32.totalorder %s18, 1
      %s1550 = scalar_select %p1549, %s18, 1
      %s1551 = smul.addr %s1550, 8
      %s1552 = smul.addr %s1551, 4
      %s1553 = scalar_lea.vmem %s4, %s1552
      %p1554 = scmp.lt.s32.totalorder %s18, 1
      %s1555 = scalar_select %p1554, %s18, 1
      %s1556 = smul.addr %s1555, 2
      %s1557 = scalar_lea.vmem %s5, %s1556
      %p1558 = scmp.lt.s32.totalorder %s18, 1
      %s1559 = scalar_select %p1558, %s18, 1
      %s1560 = smul.addr %s1559, 2
      %s1561 = scalar_lea.vmem %s6, %s1560
      // Predicated region
      $region33: #{residual_block_forward.3} parent=31 // pred_check
        %p1562 = pneg %p104
      $region34: #{residual_block_forward.3} parent=31 // pred_check_branch
        %1564 = sbr.rel (%p1562) target = $region36
      $region35: #{residual_block_forward.3} parent=31 // pred_region
        _
      $region36: #{residual_block_forward.3} parent=31 // pred_fallthru
        _
      // Predicated region
      $region37: #{residual_block_forward.3} parent=31 // pred_check
        %p1565 = pneg %p130
      $region38: #{residual_block_forward.3} parent=31 // pred_check_branch
        %1567 = sbr.rel (%p1565) target = $region40
      $region39: #{residual_block_forward.3} parent=31 // pred_region
        _
      $region40: #{residual_block_forward.3} parent=31 // pred_fallthru
        _
      // Predicated region
      $region41: #{residual_block_forward.3} parent=31 // pred_check
        %p1568 = pneg %p156
      $region42: #{residual_block_forward.3} parent=31 // pred_check_branch
        %1570 = sbr.rel (%p1568) target = $region44
      $region43: #{residual_block_forward.3} parent=31 // pred_region
        _
      $region44: #{residual_block_forward.3} parent=31 // pred_fallthru
        _
      // Predicated region
      $region45: #{residual_block_forward.3} parent=31 // pred_check
        %p1571 = pneg %p182
      $region46: #{residual_block_forward.3} parent=31 // pred_check_branch
        %1573 = sbr.rel (%p1571) target = $region48
      $region47: #{residual_block_forward.3} parent=31 // pred_region
        _
      $region48: #{residual_block_forward.3} parent=31 // pred_fallthru
        _
    $region32: #{residual_block_forward.3} parent=5 // pred_fallthru
      _
    %p1574 = scmp.le.s32.totalorder 2, %s13
    // Predicated region
    $region49: #{residual_block_forward.3} parent=5 // pred_check
      %p1575 = pneg %p1574
    $region50: #{residual_block_forward.3} parent=5 // pred_check_branch
      %1577 = sbr.rel (%p1575) target = $region52
    $region51: #{residual_block_forward.3} parent=5 // pred_region
      %s1578 = ssub.s32 %s13, 2
      // Predicated region
      $region53: #{residual_block_forward.3} parent=51 // pred_check
        %p1579 = pneg %p110
      $region54: #{residual_block_forward.3} parent=51 // pred_check_branch
        %1581 = sbr.rel (%p1579) target = $region56
      $region55: #{residual_block_forward.3} parent=51 // pred_region
        %p1582 = scmp.lt.s32.totalorder %s19, 1
        %s1583 = scalar_select %p1582, %s19, 1
        %s1584 = smul.addr %s1583, 8
        %s1585 = smul.addr %s1584, 4
        %s1586 = scalar_lea.vmem %s3, %s1585
      $region56: #{residual_block_forward.3} parent=51 // pred_fallthru
        _
      // Predicated region
      $region57: #{residual_block_forward.3} parent=51 // pred_check
        %p1587 = pneg %p136
      $region58: #{residual_block_forward.3} parent=51 // pred_check_branch
        %1589 = sbr.rel (%p1587) target = $region60
      $region59: #{residual_block_forward.3} parent=51 // pred_region
        %p1590 = scmp.lt.s32.totalorder %s19, 1
        %s1591 = scalar_select %p1590, %s19, 1
        %s1592 = smul.addr %s1591, 8
        %s1593 = smul.addr %s1592, 4
        %s1594 = scalar_lea.vmem %s4, %s1593
      $region60: #{residual_block_forward.3} parent=51 // pred_fallthru
        _
      // Predicated region
      $region61: #{residual_block_forward.3} parent=51 // pred_check
        %p1595 = pneg %p162
      $region62: #{residual_block_forward.3} parent=51 // pred_check_branch
        %1597 = sbr.rel (%p1595) target = $region64
      $region63: #{residual_block_forward.3} parent=51 // pred_region
        %p1598 = scmp.lt.s32.totalorder %s19, 1
        %s1599 = scalar_select %p1598, %s19, 1
        %s1600 = smul.addr %s1599, 2
        %s1601 = scalar_lea.vmem %s5, %s1600
      $region64: #{residual_block_forward.3} parent=51 // pred_fallthru
        _
      // Predicated region
      $region65: #{residual_block_forward.3} parent=51 // pred_check
        %p1602 = pneg %p188
      $region66: #{residual_block_forward.3} parent=51 // pred_check_branch
        %1604 = sbr.rel (%p1602) target = $region68
      $region67: #{residual_block_forward.3} parent=51 // pred_region
        %p1605 = scmp.lt.s32.totalorder %s19, 1
        %s1606 = scalar_select %p1605, %s19, 1
        %s1607 = smul.addr %s1606, 2
        %s1608 = scalar_lea.vmem %s6, %s1607
      $region68: #{residual_block_forward.3} parent=51 // pred_fallthru
        _
    $region52: #{residual_block_forward.3} parent=5 // pred_fallthru
      _
  $region6: #{residual_block_forward.3} parent=0 // loop_footer
    %s17 = sadd.s32 1, %s13
  $region7: #{residual_block_forward.3} parent=0 // loop_footer_branch
    %12 = sbr.rel target = $region3
  $region8: #{residual_block_forward.3} parent=0 // loop_exit
    _

</llo_original>
